<compile_context>
chip_gen: v7x
topology: tpu7x:2x2x1
jax: 0.10.0
libtpu: 0.0.40
codegen_flags: <defaults>
</compile_context>

<pallas_src>
import numpy as np
import jax
import jax.numpy as jnp
from jax.experimental import pallas as pl
from jax.experimental.pallas import tpu as pltpu


# ----------------------------- Pallas kernel --------------------------------
def head_kernel(x_ref, w01_ref, b0_ref, pt_ref, ut_ref, wpt_ref, bp_ref, o_ref):
    # Small constant operands: load once, reused across the unrolled batch loop.
    w01 = w01_ref[...]          # (256, Cin)    bf16  [w0*bn_scale | w1]^T
    pt = pt_ref[...]            # (HW, 64)      bf16  adaptive-pool operator^T
    ut = ut_ref[...]            # (64, HW)      bf16  bilinear-upsample operator^T
    wpt = wpt_ref[...]          # (nclass, 128) bf16  projection weight^T
    b0 = b0_ref[...]            # (128, 1)      f32   folded BN bias (column)
    bp = bp_ref[...]            # (nclass, 1)   f32   projection bias (column)

    n_batch = x_ref.shape[0]
    for n in range(n_batch):    # static unroll; N is tiny (2)
        # f32 load + in-kernel VPU cast: no HBM-materialized bf16 copy of x.
        xt = x_ref[n].astype(jnp.bfloat16)                               # (Cin, HW)

        # One packed matmul (fills the wide MXU):
        #   rows   0..127 -> (w0*bn_scale)^T x   (pre-activation of branch b0)
        #   rows 128..255 -> w1^T x              (reused by the pooled branch)
        z = jnp.dot(w01, xt, preferred_element_type=jnp.float32)        # (256, HW) f32

        # Branch b1: adaptive avg-pool as a matmul on the 128-ch hidden
        # activations (pool and 1x1 conv commute: both are linear), sigmoid,
        # then align_corners bilinear upsample as a matmul.
        xw1 = z[128:, :].astype(jnp.bfloat16)                            # (128, HW)
        pooled = jnp.dot(xw1, pt, preferred_element_type=jnp.float32)   # (128, 64)
        f2 = jnp.dot(jax.nn.sigmoid(pooled).astype(jnp.bfloat16), ut,
                     preferred_element_type=jnp.float32)                # (128, HW)

        # Branch b0: BN scale already folded into the weight; bias + ReLU left.
        f1 = jnp.maximum(z[:128, :] + b0, 0.0)                          # (128, HW)

        # Fuse branches and project (1x1 conv with bias); lane-dense store.
        y = (f1 * f2).astype(jnp.bfloat16)                              # (128, HW)
        out = jnp.dot(wpt, y, preferred_element_type=jnp.float32) + bp  # (nclass, HW)
        o_ref[n] = out.astype(o_ref.dtype)


# ------------------------------- glue ----------------------------------------
def adaptive_pool_matrix(in_size, out_size):
    """Row-stochastic matrix implementing nn.AdaptiveAvgPool1d semantics."""
    m = np.zeros((out_size, in_size), dtype=np.float32)
    for o in range(out_size):
        start = (o * in_size) // out_size
        end = -(-((o + 1) * in_size) // out_size)  # ceil
        m[o, start:end] = 1.0 / (end - start)
    return m


def bilinear_matrix(out_size, in_size):
    """align_corners=True 1-D bilinear interpolation matrix (out_size x in_size)."""
    m = np.zeros((out_size, in_size), dtype=np.float32)
    if in_size == 1:
        m[:, 0] = 1.0
        return m
    for i in range(out_size):
        s = i * (in_size - 1) / (out_size - 1) if out_size > 1 else 0.0
        lo = int(np.floor(s))
        hi = min(lo + 1, in_size - 1)
        f = s - lo
        m[i, lo] += 1.0 - f
        m[i, hi] += f
    return m


def prepare_head_params(params, H, W):
    """One-time packing of weights + spatial operators into device arrays.

    Call once and reuse: keeps the numpy P/U construction, BN folding, weight
    packing, dtype casts and H2D transfers out of the steady-state call path.
    """
    HW = H * W
    nclass = params["wp"].shape[1]

    # Fold BN scale into w0 in f32, pack [w0*scale | w1], transpose, cast LAST.
    w0_folded = params["w0"] * params["bn_scale"]                          # (Cin, 128) f32
    w01_t = jnp.concatenate([w0_folded, params["w1"]], axis=1).T           # (256, Cin)
    w01_t = w01_t.astype(jnp.bfloat16)
    b0 = params["bn_bias"].reshape(128, 1).astype(jnp.float32)             # bias column
    wpt = params["wp"].T.astype(jnp.bfloat16)                              # (nclass, 128)
    bp = params["bp"].reshape(nclass, 1).astype(jnp.float32)               # bias column

    # Spatial linear operators (host numpy, built once), transposed for the
    # channels-first layout used inside the kernel.
    ph = adaptive_pool_matrix(H, 8)                       # (8, H)
    pw = adaptive_pool_matrix(W, 8)                       # (8, W)
    P = np.einsum("ah,bw->abhw", ph, pw).reshape(64, HW)  # (64, HW)
    uh = bilinear_matrix(H, 8)                            # (H, 8)
    uw = bilinear_matrix(W, 8)                            # (W, 8)
    U = np.einsum("ia,jb->ijab", uh, uw).reshape(HW, 64)  # (HW, 64)
    Pt = jnp.asarray(P.T, dtype=jnp.bfloat16)             # (HW, 64)
    Ut = jnp.asarray(U.T, dtype=jnp.bfloat16)             # (64, HW)

    packed = dict(w01_t=w01_t, b0=b0, Pt=Pt, Ut=Ut, wpt=wpt, bp=bp)
    return jax.tree_util.tree_map(jax.block_until_ready, packed)


@jax.jit
def head_forward(x_nchw, packed):
    """x_nchw: (N, Cin, H, W) float32.  Returns (N, nclass, H, W) float32."""
    N, Cin, H, W = x_nchw.shape
    HW = H * W
    w01_t, b0, Pt, Ut, wpt, bp = (packed["w01_t"], packed["b0"], packed["Pt"],
                                  packed["Ut"], packed["wpt"], packed["bp"])
    nclass = wpt.shape[0]

    # NCHW -> (N, Cin, H*W): pure reshape, no transpose, no dtype change.
    x_flat = x_nchw.reshape(N, Cin, HW)

    cost = pl.CostEstimate(
        flops=N * (2 * 256 * Cin * HW          # packed main matmul
                   + 2 * 128 * HW * 64          # adaptive pool
                   + 2 * 128 * 64 * HW          # bilinear upsample
                   + 2 * nclass * 128 * HW),    # projection
        transcendentals=N * 128 * 64,           # sigmoid
        bytes_accessed=(x_flat.size * 4 + w01_t.size * 2 + b0.size * 4
                        + Pt.size * 2 + Ut.size * 2 + wpt.size * 2 + bp.size * 4
                        + N * nclass * HW * 4))

    const2 = lambda i: (0, 0)
    const3 = lambda i: (0, 0, 0)
    out = pl.pallas_call(
        head_kernel,
        out_shape=jax.ShapeDtypeStruct((N, nclass, HW), jnp.float32),
        grid_spec=pltpu.PrefetchScalarGridSpec(
            num_scalar_prefetch=0,
            grid=(1,),   # single step: one large x DMA, no per-batch grid overhead
            in_specs=[
                pl.BlockSpec((N, Cin, HW), const3),     # x (f32, cast in kernel)
                pl.BlockSpec((256, Cin), const2),       # packed [w0*s | w1]^T
                pl.BlockSpec((128, 1), const2),         # folded BN bias column
                pl.BlockSpec((HW, 64), const2),         # P^T (adaptive pool)
                pl.BlockSpec((64, HW), const2),         # U^T (bilinear upsample)
                pl.BlockSpec((nclass, 128), const2),    # wp^T
                pl.BlockSpec((nclass, 1), const2),      # bp column
            ],
            out_specs=pl.BlockSpec((N, nclass, HW), const3),
        ),
        compiler_params=pltpu.CompilerParams(dimension_semantics=("arbitrary",)),
        cost_estimate=cost,
    )(x_flat, w01_t, b0, Pt, Ut, wpt, bp)

    # (N, nclass, HW) -> (N, nclass, H, W): pure reshape, no transpose.
    return out.reshape(N, nclass, H, W)


def reference_forward(x_nchw, params):
    """Pure-jnp f32 reference with the original (channels-last) math order."""
    N, Cin, H, W = x_nchw.shape
    HW = H * W
    x_flat = jnp.transpose(x_nchw, (0, 2, 3, 1)).reshape(N, HW, Cin)
    ph = adaptive_pool_matrix(H, 8)
    pw = adaptive_pool_matrix(W, 8)
    P = jnp.asarray(np.einsum("ah,bw->abhw", ph, pw).reshape(64, HW))
    uh = bilinear_matrix(H, 8)
    uw = bilinear_matrix(W, 8)
    U = jnp.asarray(np.einsum("ia,jb->ijab", uh, uw).reshape(HW, 64))

    f1 = jnp.maximum(x_flat @ params["w0"] * params["bn_scale"] + params["bn_bias"], 0.0)
    pooled = jnp.einsum("ph,nhc->npc", P, x_flat)
    f2s = jax.nn.sigmoid(pooled @ params["w1"])
    f2 = jnp.einsum("hp,npc->nhc", U, f2s)
    out = (f1 * f2) @ params["wp"] + params["bp"]
    nclass = params["wp"].shape[1]
    return jnp.transpose(out.reshape(N, H, W, nclass), (0, 3, 1, 2))


# ------------------------------- main ----------------------------------------
if __name__ == "__main__":
    # Shapes consistent with _Head(mode='small'): in_channels=576, 128 hidden.
    N, Cin, H, W = 2, 576, 16, 16
    nclass = 8

    key = jax.random.PRNGKey(0)
    k = jax.random.split(key, 8)

    x = jax.random.normal(k[0], (N, Cin, H, W), dtype=jnp.float32)

    # Parameters (deterministic synthetic init).
    w0 = jax.random.normal(k[1], (Cin, 128), dtype=jnp.float32) * 0.05  # b0 conv (Cin->128)
    w1 = jax.random.normal(k[2], (Cin, 128), dtype=jnp.float32) * 0.05  # b1 conv (Cin->128)
    gamma = 1.0 + 0.1 * jax.random.normal(k[3], (128,), dtype=jnp.float32)
    beta = 0.1 * jax.random.normal(k[4], (128,), dtype=jnp.float32)
    running_mean = 0.1 * jax.random.normal(k[5], (128,), dtype=jnp.float32)
    running_var = jnp.abs(jax.random.normal(k[6], (128,), dtype=jnp.float32)) + 0.5
    eps = 1e-5
    bn_scale = (gamma / jnp.sqrt(running_var + eps)).reshape(1, 128)
    bn_bias = (beta - running_mean * gamma / jnp.sqrt(running_var + eps)).reshape(1, 128)
    wp = jax.random.normal(k[7], (128, nclass), dtype=jnp.float32) * 0.05  # project conv
    bp = jnp.linspace(-0.1, 0.1, nclass, dtype=jnp.float32).reshape(1, nclass)

    params = dict(w0=w0, w1=w1, bn_scale=bn_scale, bn_bias=bn_bias, wp=wp, bp=bp)

    # One-time constant packing (hoisted out of the per-call path).
    packed = prepare_head_params(params, H, W)

    out = head_forward(x, packed)
    out = jax.block_until_ready(out)
    assert out.shape == (N, nclass, H, W), out.shape

    ref = jax.block_until_ready(reference_forward(x, params))
    # Tolerance covers bf16 operands (f32 accumulation) vs the pure-f32 reference.
    np.testing.assert_allclose(np.asarray(out), np.asarray(ref), rtol=2e-2, atol=2e-2)

    print("KERNEL_OK")
</pallas_src>

<mosaic_0001>
module attributes {stable_mosaic.version = 11 : i64} {
  func.func @head_kernel(%arg0: i32, %arg1: memref<2x576x256xf32, #tpu.memory_space<vmem>>, %arg2: memref<256x576xbf16, #tpu.memory_space<vmem>>, %arg3: memref<128x1xf32, #tpu.memory_space<vmem>>, %arg4: memref<256x64xbf16, #tpu.memory_space<vmem>>, %arg5: memref<64x256xbf16, #tpu.memory_space<vmem>>, %arg6: memref<8x128xbf16, #tpu.memory_space<vmem>>, %arg7: memref<8x1xf32, #tpu.memory_space<vmem>>, %arg8: memref<2x8x256xf32, #tpu.memory_space<vmem>>) attributes {dimension_semantics = [#tpu.dimension_semantics<arbitrary>], iteration_bounds = array<i64: 1>, scalar_prefetch = 0 : i64, scratch_operands = 0 : i64, tpu.core_type = #tpu.core_type<tc>, window_params = [{pipeline_mode = #tpu.pipeline_mode<synchronous>, transform_indices = @transform_0, window_bounds = array<i64: 2, 576, 256>}, {pipeline_mode = #tpu.pipeline_mode<synchronous>, transform_indices = @transform_1, window_bounds = array<i64: 256, 576>}, {pipeline_mode = #tpu.pipeline_mode<synchronous>, transform_indices = @transform_2, window_bounds = array<i64: 128, 1>}, {pipeline_mode = #tpu.pipeline_mode<synchronous>, transform_indices = @transform_3, window_bounds = array<i64: 256, 64>}, {pipeline_mode = #tpu.pipeline_mode<synchronous>, transform_indices = @transform_4, window_bounds = array<i64: 64, 256>}, {pipeline_mode = #tpu.pipeline_mode<synchronous>, transform_indices = @transform_5, window_bounds = array<i64: 8, 128>}, {pipeline_mode = #tpu.pipeline_mode<synchronous>, transform_indices = @transform_6, window_bounds = array<i64: 8, 1>}, {pipeline_mode = #tpu.pipeline_mode<synchronous>, transform_indices = @transform_7, window_bounds = array<i64: 2, 8, 256>}]} {
    %c0 = arith.constant 0 : index
    %c0_0 = arith.constant 0 : index
    %0 = vector.load %arg2[%c0, %c0_0] : memref<256x576xbf16, #tpu.memory_space<vmem>>, vector<256x576xbf16>
    %c0_1 = arith.constant 0 : index
    %c0_2 = arith.constant 0 : index
    %1 = vector.load %arg4[%c0_1, %c0_2] : memref<256x64xbf16, #tpu.memory_space<vmem>>, vector<256x64xbf16>
    %c0_3 = arith.constant 0 : index
    %c0_4 = arith.constant 0 : index
    %2 = vector.load %arg5[%c0_3, %c0_4] : memref<64x256xbf16, #tpu.memory_space<vmem>>, vector<64x256xbf16>
    %c0_5 = arith.constant 0 : index
    %c0_6 = arith.constant 0 : index
    %3 = vector.load %arg6[%c0_5, %c0_6] : memref<8x128xbf16, #tpu.memory_space<vmem>>, vector<8x128xbf16>
    %c0_7 = arith.constant 0 : index
    %c0_8 = arith.constant 0 : index
    %4 = vector.load %arg3[%c0_7, %c0_8] : memref<128x1xf32, #tpu.memory_space<vmem>>, vector<128x1xf32>
    %c0_9 = arith.constant 0 : index
    %c0_10 = arith.constant 0 : index
    %5 = vector.load %arg7[%c0_9, %c0_10] : memref<8x1xf32, #tpu.memory_space<vmem>>, vector<8x1xf32>
    %c0_11 = arith.constant 0 : index
    %c0_12 = arith.constant 0 : index
    %c0_13 = arith.constant 0 : index
    %6 = vector.load %arg1[%c0_11, %c0_12, %c0_13] : memref<2x576x256xf32, #tpu.memory_space<vmem>>, vector<1x576x256xf32>
    %7 = vector.shape_cast %6 : vector<1x576x256xf32> to vector<576x256xf32>
    %8 = arith.truncf %7 : vector<576x256xf32> to vector<576x256xbf16>
    %cst = arith.constant dense<0.000000e+00> : vector<256x256xf32>
    %9 = tpu.matmul %0, %8, %cst {dimension_numbers = #tpu.dot_dimension_numbers<[1], [0], [0], [1], [0, 0, 1, 1], [], []>} : vector<256x576xbf16>, vector<576x256xbf16>, vector<256x256xf32> -> vector<256x256xf32>
    %10 = vector.extract_strided_slice %9 {offsets = [128, 0], sizes = [128, 256], strides = [1, 1]} : vector<256x256xf32> to vector<128x256xf32>
    %11 = arith.truncf %10 : vector<128x256xf32> to vector<128x256xbf16>
    %cst_14 = arith.constant dense<0.000000e+00> : vector<128x64xf32>
    %12 = tpu.matmul %11, %1, %cst_14 {dimension_numbers = #tpu.dot_dimension_numbers<[1], [0], [0], [1], [0, 0, 1, 1], [], []>} : vector<128x256xbf16>, vector<256x64xbf16>, vector<128x64xf32> -> vector<128x64xf32>
    %13 = arith.negf %12 : vector<128x64xf32>
    %14 = math.exp %13 : vector<128x64xf32>
    %cst_15 = arith.constant 1.000000e+00 : f32
    %15 = vector.broadcast %cst_15 : f32 to vector<128x64xf32>
    %16 = arith.addf %15, %14 : vector<128x64xf32>
    %17 = arith.divf %15, %16 : vector<128x64xf32>
    %18 = arith.truncf %17 : vector<128x64xf32> to vector<128x64xbf16>
    %cst_16 = arith.constant dense<0.000000e+00> : vector<128x256xf32>
    %19 = tpu.matmul %18, %2, %cst_16 {dimension_numbers = #tpu.dot_dimension_numbers<[1], [0], [0], [1], [0, 0, 1, 1], [], []>} : vector<128x64xbf16>, vector<64x256xbf16>, vector<128x256xf32> -> vector<128x256xf32>
    %20 = vector.extract_strided_slice %9 {offsets = [0, 0], sizes = [128, 256], strides = [1, 1]} : vector<256x256xf32> to vector<128x256xf32>
    %21 = vector.broadcast %4 : vector<128x1xf32> to vector<128x256xf32>
    %22 = arith.addf %20, %21 : vector<128x256xf32>
    %cst_17 = arith.constant 0.000000e+00 : f32
    %23 = vector.broadcast %cst_17 : f32 to vector<128x256xf32>
    %24 = arith.maximumf %22, %23 : vector<128x256xf32>
    %25 = arith.mulf %24, %19 : vector<128x256xf32>
    %26 = arith.truncf %25 : vector<128x256xf32> to vector<128x256xbf16>
    %cst_18 = arith.constant dense<0.000000e+00> : vector<8x256xf32>
    %27 = tpu.matmul %3, %26, %cst_18 {dimension_numbers = #tpu.dot_dimension_numbers<[1], [0], [0], [1], [0, 0, 1, 1], [], []>} : vector<8x128xbf16>, vector<128x256xbf16>, vector<8x256xf32> -> vector<8x256xf32>
    %28 = vector.broadcast %5 : vector<8x1xf32> to vector<8x256xf32>
    %29 = arith.addf %27, %28 : vector<8x256xf32>
    %c0_19 = arith.constant 0 : index
    %c0_20 = arith.constant 0 : index
    %c0_21 = arith.constant 0 : index
    %30 = vector.load %arg8[%c0_19, %c0_20, %c0_21] : memref<2x8x256xf32, #tpu.memory_space<vmem>>, vector<1x8x256xf32>
    %31 = vector.shape_cast %30 : vector<1x8x256xf32> to vector<8x256xf32>
    %32 = vector.shape_cast %29 : vector<8x256xf32> to vector<1x8x256xf32>
    tpu.vector_store %arg8[%c0_19, %c0_20, %c0_21], %32 {strides = array<i32>} : memref<2x8x256xf32, #tpu.memory_space<vmem>>, vector<1x8x256xf32>,
    %c1 = arith.constant 1 : index
    %c0_22 = arith.constant 0 : index
    %c0_23 = arith.constant 0 : index
    %33 = vector.load %arg1[%c1, %c0_22, %c0_23] : memref<2x576x256xf32, #tpu.memory_space<vmem>>, vector<1x576x256xf32>
    %34 = vector.shape_cast %33 : vector<1x576x256xf32> to vector<576x256xf32>
    %35 = arith.truncf %34 : vector<576x256xf32> to vector<576x256xbf16>
    %cst_24 = arith.constant dense<0.000000e+00> : vector<256x256xf32>
    %36 = tpu.matmul %0, %35, %cst_24 {dimension_numbers = #tpu.dot_dimension_numbers<[1], [0], [0], [1], [0, 0, 1, 1], [], []>} : vector<256x576xbf16>, vector<576x256xbf16>, vector<256x256xf32> -> vector<256x256xf32>
    %37 = vector.extract_strided_slice %36 {offsets = [128, 0], sizes = [128, 256], strides = [1, 1]} : vector<256x256xf32> to vector<128x256xf32>
    %38 = arith.truncf %37 : vector<128x256xf32> to vector<128x256xbf16>
    %cst_25 = arith.constant dense<0.000000e+00> : vector<128x64xf32>
    %39 = tpu.matmul %38, %1, %cst_25 {dimension_numbers = #tpu.dot_dimension_numbers<[1], [0], [0], [1], [0, 0, 1, 1], [], []>} : vector<128x256xbf16>, vector<256x64xbf16>, vector<128x64xf32> -> vector<128x64xf32>
    %40 = arith.negf %39 : vector<128x64xf32>
    %41 = math.exp %40 : vector<128x64xf32>
    %cst_26 = arith.constant 1.000000e+00 : f32
    %42 = vector.broadcast %cst_26 : f32 to vector<128x64xf32>
    %43 = arith.addf %42, %41 : vector<128x64xf32>
    %44 = arith.divf %42, %43 : vector<128x64xf32>
    %45 = arith.truncf %44 : vector<128x64xf32> to vector<128x64xbf16>
    %cst_27 = arith.constant dense<0.000000e+00> : vector<128x256xf32>
    %46 = tpu.matmul %45, %2, %cst_27 {dimension_numbers = #tpu.dot_dimension_numbers<[1], [0], [0], [1], [0, 0, 1, 1], [], []>} : vector<128x64xbf16>, vector<64x256xbf16>, vector<128x256xf32> -> vector<128x256xf32>
    %47 = vector.extract_strided_slice %36 {offsets = [0, 0], sizes = [128, 256], strides = [1, 1]} : vector<256x256xf32> to vector<128x256xf32>
    %48 = vector.broadcast %4 : vector<128x1xf32> to vector<128x256xf32>
    %49 = arith.addf %47, %48 : vector<128x256xf32>
    %cst_28 = arith.constant 0.000000e+00 : f32
    %50 = vector.broadcast %cst_28 : f32 to vector<128x256xf32>
    %51 = arith.maximumf %49, %50 : vector<128x256xf32>
    %52 = arith.mulf %51, %46 : vector<128x256xf32>
    %53 = arith.truncf %52 : vector<128x256xf32> to vector<128x256xbf16>
    %cst_29 = arith.constant dense<0.000000e+00> : vector<8x256xf32>
    %54 = tpu.matmul %3, %53, %cst_29 {dimension_numbers = #tpu.dot_dimension_numbers<[1], [0], [0], [1], [0, 0, 1, 1], [], []>} : vector<8x128xbf16>, vector<128x256xbf16>, vector<8x256xf32> -> vector<8x256xf32>
    %55 = vector.broadcast %5 : vector<8x1xf32> to vector<8x256xf32>
    %56 = arith.addf %54, %55 : vector<8x256xf32>
    %c1_30 = arith.constant 1 : index
    %c0_31 = arith.constant 0 : index
    %c0_32 = arith.constant 0 : index
    %57 = vector.load %arg8[%c1_30, %c0_31, %c0_32] : memref<2x8x256xf32, #tpu.memory_space<vmem>>, vector<1x8x256xf32>
    %58 = vector.shape_cast %57 : vector<1x8x256xf32> to vector<8x256xf32>
    %59 = vector.shape_cast %56 : vector<8x256xf32> to vector<1x8x256xf32>
    tpu.vector_store %arg8[%c1_30, %c0_31, %c0_32], %59 {strides = array<i32>} : memref<2x8x256xf32, #tpu.memory_space<vmem>>, vector<1x8x256xf32>,
    return
  }
  func.func @transform_0(%arg0: i32) -> (i32, i32, i32) {
    %c0_i32 = arith.constant 0 : i32
    %c0_i32_0 = arith.constant 0 : i32
    %c0_i32_1 = arith.constant 0 : i32
    %c0_i32_2 = arith.constant 0 : i32
    return %c0_i32, %c0_i32_0, %c0_i32_1 : i32, i32, i32
  }
  func.func @transform_1(%arg0: i32) -> (i32, i32) {
    %c0_i32 = arith.constant 0 : i32
    %c0_i32_0 = arith.constant 0 : i32
    %c0_i32_1 = arith.constant 0 : i32
    return %c0_i32, %c0_i32_0 : i32, i32
  }
  func.func @transform_2(%arg0: i32) -> (i32, i32) {
    %c0_i32 = arith.constant 0 : i32
    %c0_i32_0 = arith.constant 0 : i32
    %c0_i32_1 = arith.constant 0 : i32
    return %c0_i32, %c0_i32_0 : i32, i32
  }
  func.func @transform_3(%arg0: i32) -> (i32, i32) {
    %c0_i32 = arith.constant 0 : i32
    %c0_i32_0 = arith.constant 0 : i32
    %c0_i32_1 = arith.constant 0 : i32
    return %c0_i32, %c0_i32_0 : i32, i32
  }
  func.func @transform_4(%arg0: i32) -> (i32, i32) {
    %c0_i32 = arith.constant 0 : i32
    %c0_i32_0 = arith.constant 0 : i32
    %c0_i32_1 = arith.constant 0 : i32
    return %c0_i32, %c0_i32_0 : i32, i32
  }
  func.func @transform_5(%arg0: i32) -> (i32, i32) {
    %c0_i32 = arith.constant 0 : i32
    %c0_i32_0 = arith.constant 0 : i32
    %c0_i32_1 = arith.constant 0 : i32
    return %c0_i32, %c0_i32_0 : i32, i32
  }
  func.func @transform_6(%arg0: i32) -> (i32, i32) {
    %c0_i32 = arith.constant 0 : i32
    %c0_i32_0 = arith.constant 0 : i32
    %c0_i32_1 = arith.constant 0 : i32
    return %c0_i32, %c0_i32_0 : i32, i32
  }
  func.func @transform_7(%arg0: i32) -> (i32, i32, i32) {
    %c0_i32 = arith.constant 0 : i32
    %c0_i32_0 = arith.constant 0 : i32
    %c0_i32_1 = arith.constant 0 : i32
    %c0_i32_2 = arith.constant 0 : i32
    return %c0_i32, %c0_i32_0, %c0_i32_1 : i32, i32, i32
  }
}

</mosaic_0001>

<llo_original>
// kernel: head_forward.1
$region0: #{head_forward.1}
  #allocation0 [shape = 'u32[]', space=smem, size = 0x4, offset = 0x4, fixed_abs, tag = 'smem constant byte address 0x4 - core index']
  #allocation1 [shape = 'u32[144,128]{1,0:T(1,128)}', space=vmem, size = 0x12000, scoped, tag = 'internal scratch']
  %s0 = inlined_call_operand.vmem [shape: f32[2,576,256], index: 0, kind: input, shape index: {}]
  %s1 = inlined_call_operand.vmem [shape: bf16[256,576], index: 1, kind: input, shape index: {}]
  %s2 = inlined_call_operand.vmem [shape: f32[128,1], index: 2, kind: input, shape index: {}]
  %s3 = inlined_call_operand.vmem [shape: bf16[256,64], index: 3, kind: input, shape index: {}]
  %s4 = inlined_call_operand.vmem [shape: bf16[64,256], index: 4, kind: input, shape index: {}]
  %s5 = inlined_call_operand.vmem [shape: bf16[8,128], index: 5, kind: input, shape index: {}]
  %s6 = inlined_call_operand.vmem [shape: f32[8,1], index: 6, kind: input, shape index: {}]
  %s7 = inlined_call_operand.vmem [shape: f32[2,8,256], index: 7, kind: output, shape index: {}]
  %s8 = sld [smem:[#allocation0]]
  $region38: #{head_forward.1} parent=0
    _
  %s10 = ssub.s32 1, %s8
  %s11 = scalar_select 0, %s10, %s8
  // Predicated region
  $region2: #{head_forward.1} parent=0 // pred_check
    _
  $region3: #{head_forward.1} parent=0 // pred_check_branch
    %13 = sbr.rel (0) target = $region5
  $region4: #{head_forward.1} parent=0 // pred_region
    _
  $region5: #{head_forward.1} parent=0 // pred_fallthru
    _
  // Predicated region
  $region6: #{head_forward.1} parent=0 // pred_check
    _
  $region7: #{head_forward.1} parent=0 // pred_check_branch
    %15 = sbr.rel (0) target = $region9
  $region8: #{head_forward.1} parent=0 // pred_region
    _
  $region9: #{head_forward.1} parent=0 // pred_fallthru
    _
  // Predicated region
  $region10: #{head_forward.1} parent=0 // pred_check
    _
  $region11: #{head_forward.1} parent=0 // pred_check_branch
    %17 = sbr.rel (0) target = $region13
  $region12: #{head_forward.1} parent=0 // pred_region
    _
  $region13: #{head_forward.1} parent=0 // pred_fallthru
    _
  // Predicated region
  $region14: #{head_forward.1} parent=0 // pred_check
    _
  $region15: #{head_forward.1} parent=0 // pred_check_branch
    %19 = sbr.rel (0) target = $region17
  $region16: #{head_forward.1} parent=0 // pred_region
    _
  $region17: #{head_forward.1} parent=0 // pred_fallthru
    _
  // Predicated region
  $region18: #{head_forward.1} parent=0 // pred_check
    _
  $region19: #{head_forward.1} parent=0 // pred_check_branch
    %21 = sbr.rel (0) target = $region21
  $region20: #{head_forward.1} parent=0 // pred_region
    _
  $region21: #{head_forward.1} parent=0 // pred_fallthru
    _
  // Predicated region
  $region22: #{head_forward.1} parent=0 // pred_check
    _
  $region23: #{head_forward.1} parent=0 // pred_check_branch
    %23 = sbr.rel (0) target = $region25
  $region24: #{head_forward.1} parent=0 // pred_region
    _
  $region25: #{head_forward.1} parent=0 // pred_fallthru
    _
  // Predicated region
  $region26: #{head_forward.1} parent=0 // pred_check
    _
  $region27: #{head_forward.1} parent=0 // pred_check_branch
    %25 = sbr.rel (0) target = $region29
  $region28: #{head_forward.1} parent=0 // pred_region
    _
  $region29: #{head_forward.1} parent=0 // pred_fallthru
    _
  %v27 = vld [vmem:[%s1] sm:$0xff]
  %v28 = vld [vmem:[%s1 + $0x8] sm:$0xff]
  %v29 = vld [vmem:[%s1 + $0x10] sm:$0xf]
  %v30 = vld [vmem:[%s1 + $0x14] sm:$0xff]
  %v31 = vld [vmem:[%s1 + $0x1c] sm:$0xff]
  %v32 = vld [vmem:[%s1 + $0x24] sm:$0xf]
  %v33 = vld [vmem:[%s1 + $0x28] sm:$0xff]
  %v34 = vld [vmem:[%s1 + $0x30] sm:$0xff]
  %v35 = vld [vmem:[%s1 + $0x38] sm:$0xf]
  %v36 = vld [vmem:[%s1 + $0x3c] sm:$0xff]
  %v37 = vld [vmem:[%s1 + $0x44] sm:$0xff]
  %v38 = vld [vmem:[%s1 + $0x4c] sm:$0xf]
  %v39 = vld [vmem:[%s1 + $0x50] sm:$0xff]
  %v40 = vld [vmem:[%s1 + $0x58] sm:$0xff]
  %v41 = vld [vmem:[%s1 + $0x60] sm:$0xf]
  %v42 = vld [vmem:[%s1 + $0x64] sm:$0xff]
  %v43 = vld [vmem:[%s1 + $0x6c] sm:$0xff]
  %v44 = vld [vmem:[%s1 + $0x74] sm:$0xf]
  %v45 = vld [vmem:[%s1 + $0x78] sm:$0xff]
  %v46 = vld [vmem:[%s1 + $0x80] sm:$0xff]
  %v47 = vld [vmem:[%s1 + $0x88] sm:$0xf]
  %v48 = vld [vmem:[%s1 + $0x8c] sm:$0xff]
  %v49 = vld [vmem:[%s1 + $0x94] sm:$0xff]
  %v50 = vld [vmem:[%s1 + $0x9c] sm:$0xf]
  %v51 = vld [vmem:[%s1 + $0xa0] sm:$0xff]
  %v52 = vld [vmem:[%s1 + $0xa8] sm:$0xff]
  %v53 = vld [vmem:[%s1 + $0xb0] sm:$0xf]
  %v54 = vld [vmem:[%s1 + $0xb4] sm:$0xff]
  %v55 = vld [vmem:[%s1 + $0xbc] sm:$0xff]
  %v56 = vld [vmem:[%s1 + $0xc4] sm:$0xf]
  %v57 = vld [vmem:[%s1 + $0xc8] sm:$0xff]
  %v58 = vld [vmem:[%s1 + $0xd0] sm:$0xff]
  %v59 = vld [vmem:[%s1 + $0xd8] sm:$0xf]
  %v60 = vld [vmem:[%s1 + $0xdc] sm:$0xff]
  %v61 = vld [vmem:[%s1 + $0xe4] sm:$0xff]
  %v62 = vld [vmem:[%s1 + $0xec] sm:$0xf]
  %v63 = vld [vmem:[%s1 + $0xf0] sm:$0xff]
  %v64 = vld [vmem:[%s1 + $0xf8] sm:$0xff]
  %v65 = vld [vmem:[%s1 + $0x100] sm:$0xf]
  %v66 = vld [vmem:[%s1 + $0x104] sm:$0xff]
  %v67 = vld [vmem:[%s1 + $0x10c] sm:$0xff]
  %v68 = vld [vmem:[%s1 + $0x114] sm:$0xf]
  %v69 = vld [vmem:[%s1 + $0x118] sm:$0xff]
  %v70 = vld [vmem:[%s1 + $0x120] sm:$0xff]
  %v71 = vld [vmem:[%s1 + $0x128] sm:$0xf]
  %v72 = vld [vmem:[%s1 + $0x12c] sm:$0xff]
  %v73 = vld [vmem:[%s1 + $0x134] sm:$0xff]
  %v74 = vld [vmem:[%s1 + $0x13c] sm:$0xf]
  %v75 = vld [vmem:[%s1 + $0x140] sm:$0xff]
  %v76 = vld [vmem:[%s1 + $0x148] sm:$0xff]
  %v77 = vld [vmem:[%s1 + $0x150] sm:$0xf]
  %v78 = vld [vmem:[%s1 + $0x154] sm:$0xff]
  %v79 = vld [vmem:[%s1 + $0x15c] sm:$0xff]
  %v80 = vld [vmem:[%s1 + $0x164] sm:$0xf]
  %v81 = vld [vmem:[%s1 + $0x168] sm:$0xff]
  %v82 = vld [vmem:[%s1 + $0x170] sm:$0xff]
  %v83 = vld [vmem:[%s1 + $0x178] sm:$0xf]
  %v84 = vld [vmem:[%s1 + $0x17c] sm:$0xff]
  %v85 = vld [vmem:[%s1 + $0x184] sm:$0xff]
  %v86 = vld [vmem:[%s1 + $0x18c] sm:$0xf]
  %v87 = vld [vmem:[%s1 + $0x190] sm:$0xff]
  %v88 = vld [vmem:[%s1 + $0x198] sm:$0xff]
  %v89 = vld [vmem:[%s1 + $0x1a0] sm:$0xf]
  %v90 = vld [vmem:[%s1 + $0x1a4] sm:$0xff]
  %v91 = vld [vmem:[%s1 + $0x1ac] sm:$0xff]
  %v92 = vld [vmem:[%s1 + $0x1b4] sm:$0xf]
  %v93 = vld [vmem:[%s1 + $0x1b8] sm:$0xff]
  %v94 = vld [vmem:[%s1 + $0x1c0] sm:$0xff]
  %v95 = vld [vmem:[%s1 + $0x1c8] sm:$0xf]
  %v96 = vld [vmem:[%s1 + $0x1cc] sm:$0xff]
  %v97 = vld [vmem:[%s1 + $0x1d4] sm:$0xff]
  %v98 = vld [vmem:[%s1 + $0x1dc] sm:$0xf]
  %v99 = vld [vmem:[%s1 + $0x1e0] sm:$0xff]
  %v100 = vld [vmem:[%s1 + $0x1e8] sm:$0xff]
  %v101 = vld [vmem:[%s1 + $0x1f0] sm:$0xf]
  %v102 = vld [vmem:[%s1 + $0x1f4] sm:$0xff]
  %v103 = vld [vmem:[%s1 + $0x1fc] sm:$0xff]
  %v104 = vld [vmem:[%s1 + $0x204] sm:$0xf]
  %v105 = vld [vmem:[%s1 + $0x208] sm:$0xff]
  %v106 = vld [vmem:[%s1 + $0x210] sm:$0xff]
  %v107 = vld [vmem:[%s1 + $0x218] sm:$0xf]
  %v108 = vld [vmem:[%s1 + $0x21c] sm:$0xff]
  %v109 = vld [vmem:[%s1 + $0x224] sm:$0xff]
  %v110 = vld [vmem:[%s1 + $0x22c] sm:$0xf]
  %v111 = vld [vmem:[%s1 + $0x230] sm:$0xff]
  %v112 = vld [vmem:[%s1 + $0x238] sm:$0xff]
  %v113 = vld [vmem:[%s1 + $0x240] sm:$0xf]
  %v114 = vld [vmem:[%s1 + $0x244] sm:$0xff]
  %v115 = vld [vmem:[%s1 + $0x24c] sm:$0xff]
  %v116 = vld [vmem:[%s1 + $0x254] sm:$0xf]
  %v117 = vld [vmem:[%s1 + $0x258] sm:$0xff]
  %v118 = vld [vmem:[%s1 + $0x260] sm:$0xff]
  %v119 = vld [vmem:[%s1 + $0x268] sm:$0xf]
  %v120 = vld [vmem:[%s1 + $0x26c] sm:$0xff]
  %v121 = vld [vmem:[%s1 + $0x274] sm:$0xff]
  %v122 = vld [vmem:[%s1 + $0x27c] sm:$0xf]
  %v123 = vld [vmem:[%s3] sm:$0xf]
  %v124 = vld [vmem:[%s3 + $0x4] sm:$0xf]
  %v125 = vld [vmem:[%s3 + $0x8] sm:$0xf]
  %v126 = vld [vmem:[%s3 + $0xc] sm:$0xf]
  %v127 = vld [vmem:[%s3 + $0x10] sm:$0xf]
  %v128 = vld [vmem:[%s3 + $0x14] sm:$0xf]
  %v129 = vld [vmem:[%s3 + $0x18] sm:$0xf]
  %v130 = vld [vmem:[%s3 + $0x1c] sm:$0xf]
  %v131 = vld [vmem:[%s3 + $0x20] sm:$0xf]
  %v132 = vld [vmem:[%s3 + $0x24] sm:$0xf]
  %v133 = vld [vmem:[%s3 + $0x28] sm:$0xf]
  %v134 = vld [vmem:[%s3 + $0x2c] sm:$0xf]
  %v135 = vld [vmem:[%s3 + $0x30] sm:$0xf]
  %v136 = vld [vmem:[%s3 + $0x34] sm:$0xf]
  %v137 = vld [vmem:[%s3 + $0x38] sm:$0xf]
  %v138 = vld [vmem:[%s3 + $0x3c] sm:$0xf]
  %v139 = vld [vmem:[%s3 + $0x40] sm:$0xf]
  %v140 = vld [vmem:[%s3 + $0x44] sm:$0xf]
  %v141 = vld [vmem:[%s3 + $0x48] sm:$0xf]
  %v142 = vld [vmem:[%s3 + $0x4c] sm:$0xf]
  %v143 = vld [vmem:[%s3 + $0x50] sm:$0xf]
  %v144 = vld [vmem:[%s3 + $0x54] sm:$0xf]
  %v145 = vld [vmem:[%s3 + $0x58] sm:$0xf]
  %v146 = vld [vmem:[%s3 + $0x5c] sm:$0xf]
  %v147 = vld [vmem:[%s3 + $0x60] sm:$0xf]
  %v148 = vld [vmem:[%s3 + $0x64] sm:$0xf]
  %v149 = vld [vmem:[%s3 + $0x68] sm:$0xf]
  %v150 = vld [vmem:[%s3 + $0x6c] sm:$0xf]
  %v151 = vld [vmem:[%s3 + $0x70] sm:$0xf]
  %v152 = vld [vmem:[%s3 + $0x74] sm:$0xf]
  %v153 = vld [vmem:[%s3 + $0x78] sm:$0xf]
  %v154 = vld [vmem:[%s3 + $0x7c] sm:$0xf]
  %v155 = vld [vmem:[%s4] sm:$0xff]
  %v156 = vld [vmem:[%s4 + $0x8] sm:$0xff]
  %v157 = vld [vmem:[%s4 + $0x10] sm:$0xff]
  %v158 = vld [vmem:[%s4 + $0x18] sm:$0xff]
  %v159 = vld [vmem:[%s4 + $0x20] sm:$0xff]
  %v160 = vld [vmem:[%s4 + $0x28] sm:$0xff]
  %v161 = vld [vmem:[%s4 + $0x30] sm:$0xff]
  %v162 = vld [vmem:[%s4 + $0x38] sm:$0xff]
  %v163 = vld [vmem:[%s5] sm:$0xf]
  %v164 = vld [vmem:[%s2] sm:$0xff]
  %v165 = vld [vmem:[%s2 + $0x8] sm:$0xff]
  %v166 = vld [vmem:[%s2 + $0x10] sm:$0xff]
  %v167 = vld [vmem:[%s2 + $0x18] sm:$0xff]
  %v168 = vld [vmem:[%s2 + $0x20] sm:$0xff]
  %v169 = vld [vmem:[%s2 + $0x28] sm:$0xff]
  %v170 = vld [vmem:[%s2 + $0x30] sm:$0xff]
  %v171 = vld [vmem:[%s2 + $0x38] sm:$0xff]
  %v172 = vld [vmem:[%s2 + $0x40] sm:$0xff]
  %v173 = vld [vmem:[%s2 + $0x48] sm:$0xff]
  %v174 = vld [vmem:[%s2 + $0x50] sm:$0xff]
  %v175 = vld [vmem:[%s2 + $0x58] sm:$0xff]
  %v176 = vld [vmem:[%s2 + $0x60] sm:$0xff]
  %v177 = vld [vmem:[%s2 + $0x68] sm:$0xff]
  %v178 = vld [vmem:[%s2 + $0x70] sm:$0xff]
  %v179 = vld [vmem:[%s2 + $0x78] sm:$0xff]
  %v180 = vld [vmem:[%s6] sm:$0xff]
  %v181 = vld [vmem:[%s0] sm:$0xff]
  %v182 = vld [vmem:[%s0 + $0x8] sm:$0xff]
  %v183 = vld [vmem:[%s0 + $0x10] sm:$0xff]
  %v184 = vld [vmem:[%s0 + $0x18] sm:$0xff]
  %v185 = vld [vmem:[%s0 + $0x20] sm:$0xff]
  %v186 = vld [vmem:[%s0 + $0x28] sm:$0xff]
  %v187 = vld [vmem:[%s0 + $0x30] sm:$0xff]
  %v188 = vld [vmem:[%s0 + $0x38] sm:$0xff]
  %v189 = vld [vmem:[%s0 + $0x40] sm:$0xff]
  %v190 = vld [vmem:[%s0 + $0x48] sm:$0xff]
  %v191 = vld [vmem:[%s0 + $0x50] sm:$0xff]
  %v192 = vld [vmem:[%s0 + $0x58] sm:$0xff]
  %v193 = vld [vmem:[%s0 + $0x60] sm:$0xff]
  %v194 = vld [vmem:[%s0 + $0x68] sm:$0xff]
  %v195 = vld [vmem:[%s0 + $0x70] sm:$0xff]
  %v196 = vld [vmem:[%s0 + $0x78] sm:$0xff]
  %v197 = vld [vmem:[%s0 + $0x80] sm:$0xff]
  %v198 = vld [vmem:[%s0 + $0x88] sm:$0xff]
  %v199 = vld [vmem:[%s0 + $0x90] sm:$0xff]
  %v200 = vld [vmem:[%s0 + $0x98] sm:$0xff]
  %v201 = vld [vmem:[%s0 + $0xa0] sm:$0xff]
  %v202 = vld [vmem:[%s0 + $0xa8] sm:$0xff]
  %v203 = vld [vmem:[%s0 + $0xb0] sm:$0xff]
  %v204 = vld [vmem:[%s0 + $0xb8] sm:$0xff]
  %v205 = vld [vmem:[%s0 + $0xc0] sm:$0xff]
  %v206 = vld [vmem:[%s0 + $0xc8] sm:$0xff]
  %v207 = vld [vmem:[%s0 + $0xd0] sm:$0xff]
  %v208 = vld [vmem:[%s0 + $0xd8] sm:$0xff]
  %v209 = vld [vmem:[%s0 + $0xe0] sm:$0xff]
  %v210 = vld [vmem:[%s0 + $0xe8] sm:$0xff]
  %v211 = vld [vmem:[%s0 + $0xf0] sm:$0xff]
  %v212 = vld [vmem:[%s0 + $0xf8] sm:$0xff]
  %v213 = vld [vmem:[%s0 + $0x100] sm:$0xff]
  %v214 = vld [vmem:[%s0 + $0x108] sm:$0xff]
  %v215 = vld [vmem:[%s0 + $0x110] sm:$0xff]
  %v216 = vld [vmem:[%s0 + $0x118] sm:$0xff]
  %v217 = vld [vmem:[%s0 + $0x120] sm:$0xff]
  %v218 = vld [vmem:[%s0 + $0x128] sm:$0xff]
  %v219 = vld [vmem:[%s0 + $0x130] sm:$0xff]
  %v220 = vld [vmem:[%s0 + $0x138] sm:$0xff]
  %v221 = vld [vmem:[%s0 + $0x140] sm:$0xff]
  %v222 = vld [vmem:[%s0 + $0x148] sm:$0xff]
  %v223 = vld [vmem:[%s0 + $0x150] sm:$0xff]
  %v224 = vld [vmem:[%s0 + $0x158] sm:$0xff]
  %v225 = vld [vmem:[%s0 + $0x160] sm:$0xff]
  %v226 = vld [vmem:[%s0 + $0x168] sm:$0xff]
  %v227 = vld [vmem:[%s0 + $0x170] sm:$0xff]
  %v228 = vld [vmem:[%s0 + $0x178] sm:$0xff]
  %v229 = vld [vmem:[%s0 + $0x180] sm:$0xff]
  %v230 = vld [vmem:[%s0 + $0x188] sm:$0xff]
  %v231 = vld [vmem:[%s0 + $0x190] sm:$0xff]
  %v232 = vld [vmem:[%s0 + $0x198] sm:$0xff]
  %v233 = vld [vmem:[%s0 + $0x1a0] sm:$0xff]
  %v234 = vld [vmem:[%s0 + $0x1a8] sm:$0xff]
  %v235 = vld [vmem:[%s0 + $0x1b0] sm:$0xff]
  %v236 = vld [vmem:[%s0 + $0x1b8] sm:$0xff]
  %v237 = vld [vmem:[%s0 + $0x1c0] sm:$0xff]
  %v238 = vld [vmem:[%s0 + $0x1c8] sm:$0xff]
  %v239 = vld [vmem:[%s0 + $0x1d0] sm:$0xff]
  %v240 = vld [vmem:[%s0 + $0x1d8] sm:$0xff]
  %v241 = vld [vmem:[%s0 + $0x1e0] sm:$0xff]
  %v242 = vld [vmem:[%s0 + $0x1e8] sm:$0xff]
  %v243 = vld [vmem:[%s0 + $0x1f0] sm:$0xff]
  %v244 = vld [vmem:[%s0 + $0x1f8] sm:$0xff]
  %v245 = vld [vmem:[%s0 + $0x200] sm:$0xff]
  %v246 = vld [vmem:[%s0 + $0x208] sm:$0xff]
  %v247 = vld [vmem:[%s0 + $0x210] sm:$0xff]
  %v248 = vld [vmem:[%s0 + $0x218] sm:$0xff]
  %v249 = vld [vmem:[%s0 + $0x220] sm:$0xff]
  %v250 = vld [vmem:[%s0 + $0x228] sm:$0xff]
  %v251 = vld [vmem:[%s0 + $0x230] sm:$0xff]
  %v252 = vld [vmem:[%s0 + $0x238] sm:$0xff]
  %v253 = vld [vmem:[%s0 + $0x240] sm:$0xff]
  %v254 = vld [vmem:[%s0 + $0x248] sm:$0xff]
  %v255 = vld [vmem:[%s0 + $0x250] sm:$0xff]
  %v256 = vld [vmem:[%s0 + $0x258] sm:$0xff]
  %v257 = vld [vmem:[%s0 + $0x260] sm:$0xff]
  %v258 = vld [vmem:[%s0 + $0x268] sm:$0xff]
  %v259 = vld [vmem:[%s0 + $0x270] sm:$0xff]
  %v260 = vld [vmem:[%s0 + $0x278] sm:$0xff]
  %v261 = vld [vmem:[%s0 + $0x280] sm:$0xff]
  %v262 = vld [vmem:[%s0 + $0x288] sm:$0xff]
  %v263 = vld [vmem:[%s0 + $0x290] sm:$0xff]
  %v264 = vld [vmem:[%s0 + $0x298] sm:$0xff]
  %v265 = vld [vmem:[%s0 + $0x2a0] sm:$0xff]
  %v266 = vld [vmem:[%s0 + $0x2a8] sm:$0xff]
  %v267 = vld [vmem:[%s0 + $0x2b0] sm:$0xff]
  %v268 = vld [vmem:[%s0 + $0x2b8] sm:$0xff]
  %v269 = vld [vmem:[%s0 + $0x2c0] sm:$0xff]
  %v270 = vld [vmem:[%s0 + $0x2c8] sm:$0xff]
  %v271 = vld [vmem:[%s0 + $0x2d0] sm:$0xff]
  %v272 = vld [vmem:[%s0 + $0x2d8] sm:$0xff]
  %v273 = vld [vmem:[%s0 + $0x2e0] sm:$0xff]
  %v274 = vld [vmem:[%s0 + $0x2e8] sm:$0xff]
  %v275 = vld [vmem:[%s0 + $0x2f0] sm:$0xff]
  %v276 = vld [vmem:[%s0 + $0x2f8] sm:$0xff]
  %v277 = vld [vmem:[%s0 + $0x300] sm:$0xff]
  %v278 = vld [vmem:[%s0 + $0x308] sm:$0xff]
  %v279 = vld [vmem:[%s0 + $0x310] sm:$0xff]
  %v280 = vld [vmem:[%s0 + $0x318] sm:$0xff]
  %v281 = vld [vmem:[%s0 + $0x320] sm:$0xff]
  %v282 = vld [vmem:[%s0 + $0x328] sm:$0xff]
  %v283 = vld [vmem:[%s0 + $0x330] sm:$0xff]
  %v284 = vld [vmem:[%s0 + $0x338] sm:$0xff]
  %v285 = vld [vmem:[%s0 + $0x340] sm:$0xff]
  %v286 = vld [vmem:[%s0 + $0x348] sm:$0xff]
  %v287 = vld [vmem:[%s0 + $0x350] sm:$0xff]
  %v288 = vld [vmem:[%s0 + $0x358] sm:$0xff]
  %v289 = vld [vmem:[%s0 + $0x360] sm:$0xff]
  %v290 = vld [vmem:[%s0 + $0x368] sm:$0xff]
  %v291 = vld [vmem:[%s0 + $0x370] sm:$0xff]
  %v292 = vld [vmem:[%s0 + $0x378] sm:$0xff]
  %v293 = vld [vmem:[%s0 + $0x380] sm:$0xff]
  %v294 = vld [vmem:[%s0 + $0x388] sm:$0xff]
  %v295 = vld [vmem:[%s0 + $0x390] sm:$0xff]
  %v296 = vld [vmem:[%s0 + $0x398] sm:$0xff]
  %v297 = vld [vmem:[%s0 + $0x3a0] sm:$0xff]
  %v298 = vld [vmem:[%s0 + $0x3a8] sm:$0xff]
  %v299 = vld [vmem:[%s0 + $0x3b0] sm:$0xff]
  %v300 = vld [vmem:[%s0 + $0x3b8] sm:$0xff]
  %v301 = vld [vmem:[%s0 + $0x3c0] sm:$0xff]
  %v302 = vld [vmem:[%s0 + $0x3c8] sm:$0xff]
  %v303 = vld [vmem:[%s0 + $0x3d0] sm:$0xff]
  %v304 = vld [vmem:[%s0 + $0x3d8] sm:$0xff]
  %v305 = vld [vmem:[%s0 + $0x3e0] sm:$0xff]
  %v306 = vld [vmem:[%s0 + $0x3e8] sm:$0xff]
  %v307 = vld [vmem:[%s0 + $0x3f0] sm:$0xff]
  %v308 = vld [vmem:[%s0 + $0x3f8] sm:$0xff]
  %v309 = vld [vmem:[%s0 + $0x400] sm:$0xff]
  %v310 = vld [vmem:[%s0 + $0x408] sm:$0xff]
  %v311 = vld [vmem:[%s0 + $0x410] sm:$0xff]
  %v312 = vld [vmem:[%s0 + $0x418] sm:$0xff]
  %v313 = vld [vmem:[%s0 + $0x420] sm:$0xff]
  %v314 = vld [vmem:[%s0 + $0x428] sm:$0xff]
  %v315 = vld [vmem:[%s0 + $0x430] sm:$0xff]
  %v316 = vld [vmem:[%s0 + $0x438] sm:$0xff]
  %v317 = vld [vmem:[%s0 + $0x440] sm:$0xff]
  %v318 = vld [vmem:[%s0 + $0x448] sm:$0xff]
  %v319 = vld [vmem:[%s0 + $0x450] sm:$0xff]
  %v320 = vld [vmem:[%s0 + $0x458] sm:$0xff]
  %v321 = vld [vmem:[%s0 + $0x460] sm:$0xff]
  %v322 = vld [vmem:[%s0 + $0x468] sm:$0xff]
  %v323 = vld [vmem:[%s0 + $0x470] sm:$0xff]
  %v324 = vld [vmem:[%s0 + $0x478] sm:$0xff]
  %v325 = vpack.c.bf16 %v183, %v181
  %v326 = vpack.c.bf16 %v184, %v182
  %v327 = vpack.c.bf16 %v187, %v185
  %v328 = vpack.c.bf16 %v188, %v186
  %v329 = vpack.c.bf16 %v191, %v189
  %v330 = vpack.c.bf16 %v192, %v190
  %v331 = vpack.c.bf16 %v195, %v193
  %v332 = vpack.c.bf16 %v196, %v194
  %v333 = vpack.c.bf16 %v199, %v197
  %v334 = vpack.c.bf16 %v200, %v198
  %v335 = vpack.c.bf16 %v203, %v201
  %v336 = vpack.c.bf16 %v204, %v202
  %v337 = vpack.c.bf16 %v207, %v205
  %v338 = vpack.c.bf16 %v208, %v206
  %v339 = vpack.c.bf16 %v211, %v209
  %v340 = vpack.c.bf16 %v212, %v210
  %v341 = vpack.c.bf16 %v215, %v213
  %v342 = vpack.c.bf16 %v216, %v214
  %v343 = vpack.c.bf16 %v219, %v217
  %v344 = vpack.c.bf16 %v220, %v218
  %v345 = vpack.c.bf16 %v223, %v221
  %v346 = vpack.c.bf16 %v224, %v222
  %v347 = vpack.c.bf16 %v227, %v225
  %v348 = vpack.c.bf16 %v228, %v226
  %v349 = vpack.c.bf16 %v231, %v229
  %v350 = vpack.c.bf16 %v232, %v230
  %v351 = vpack.c.bf16 %v235, %v233
  %v352 = vpack.c.bf16 %v236, %v234
  %v353 = vpack.c.bf16 %v239, %v237
  %v354 = vpack.c.bf16 %v240, %v238
  %v355 = vpack.c.bf16 %v243, %v241
  %v356 = vpack.c.bf16 %v244, %v242
  %v357 = vpack.c.bf16 %v247, %v245
  %v358 = vpack.c.bf16 %v248, %v246
  %v359 = vpack.c.bf16 %v251, %v249
  %v360 = vpack.c.bf16 %v252, %v250
  %v361 = vpack.c.bf16 %v255, %v253
  %v362 = vpack.c.bf16 %v256, %v254
  %v363 = vpack.c.bf16 %v259, %v257
  %v364 = vpack.c.bf16 %v260, %v258
  %v365 = vpack.c.bf16 %v263, %v261
  %v366 = vpack.c.bf16 %v264, %v262
  %v367 = vpack.c.bf16 %v267, %v265
  %v368 = vpack.c.bf16 %v268, %v266
  %v369 = vpack.c.bf16 %v271, %v269
  %v370 = vpack.c.bf16 %v272, %v270
  %v371 = vpack.c.bf16 %v275, %v273
  %v372 = vpack.c.bf16 %v276, %v274
  %v373 = vpack.c.bf16 %v279, %v277
  %v374 = vpack.c.bf16 %v280, %v278
  %v375 = vpack.c.bf16 %v283, %v281
  %v376 = vpack.c.bf16 %v284, %v282
  %v377 = vpack.c.bf16 %v287, %v285
  %v378 = vpack.c.bf16 %v288, %v286
  %v379 = vpack.c.bf16 %v291, %v289
  %v380 = vpack.c.bf16 %v292, %v290
  %v381 = vpack.c.bf16 %v295, %v293
  %v382 = vpack.c.bf16 %v296, %v294
  %v383 = vpack.c.bf16 %v299, %v297
  %v384 = vpack.c.bf16 %v300, %v298
  %v385 = vpack.c.bf16 %v303, %v301
  %v386 = vpack.c.bf16 %v304, %v302
  %v387 = vpack.c.bf16 %v307, %v305
  %v388 = vpack.c.bf16 %v308, %v306
  %v389 = vpack.c.bf16 %v311, %v309
  %v390 = vpack.c.bf16 %v312, %v310
  %v391 = vpack.c.bf16 %v315, %v313
  %v392 = vpack.c.bf16 %v316, %v314
  %v393 = vpack.c.bf16 %v319, %v317
  %v394 = vpack.c.bf16 %v320, %v318
  %v395 = vpack.c.bf16 %v323, %v321
  %v396 = vpack.c.bf16 %v324, %v322
  %v493 = vunpack.c.l.b16 %v27
  %v494 = vunpack.c.h.b16 %v27
  %v495 = vunpack.c.l.b16 %v28
  %v496 = vunpack.c.h.b16 %v28
  %v497 = vunpack.c.l.b16 %v29
  %v498 = vunpack.c.l.b16 %v30
  %v499 = vunpack.c.h.b16 %v30
  %v500 = vunpack.c.l.b16 %v31
  %v501 = vunpack.c.h.b16 %v31
  %v502 = vunpack.c.l.b16 %v32
  %v503 = vunpack.c.l.b16 %v33
  %v504 = vunpack.c.h.b16 %v33
  %v505 = vunpack.c.l.b16 %v34
  %v506 = vunpack.c.h.b16 %v34
  %v507 = vunpack.c.l.b16 %v35
  %v508 = vunpack.c.l.b16 %v36
  %v509 = vunpack.c.h.b16 %v36
  %v510 = vunpack.c.l.b16 %v37
  %v511 = vunpack.c.h.b16 %v37
  %v512 = vunpack.c.l.b16 %v38
  %v513 = vunpack.c.l.b16 %v39
  %v514 = vunpack.c.h.b16 %v39
  %v515 = vunpack.c.l.b16 %v40
  %v516 = vunpack.c.h.b16 %v40
  %v517 = vunpack.c.l.b16 %v41
  %v518 = vunpack.c.l.b16 %v42
  %v519 = vunpack.c.h.b16 %v42
  %v520 = vunpack.c.l.b16 %v43
  %v521 = vunpack.c.h.b16 %v43
  %v522 = vunpack.c.l.b16 %v44
  %v523 = vunpack.c.l.b16 %v45
  %v524 = vunpack.c.h.b16 %v45
  %v525 = vunpack.c.l.b16 %v46
  %v526 = vunpack.c.h.b16 %v46
  %v527 = vunpack.c.l.b16 %v47
  %v528 = vunpack.c.l.b16 %v48
  %v529 = vunpack.c.h.b16 %v48
  %v530 = vunpack.c.l.b16 %v49
  %v531 = vunpack.c.h.b16 %v49
  %v532 = vunpack.c.l.b16 %v50
  %v533 = vunpack.c.l.b16 %v51
  %v534 = vunpack.c.h.b16 %v51
  %v535 = vunpack.c.l.b16 %v52
  %v536 = vunpack.c.h.b16 %v52
  %v537 = vunpack.c.l.b16 %v53
  %v538 = vunpack.c.l.b16 %v54
  %v539 = vunpack.c.h.b16 %v54
  %v540 = vunpack.c.l.b16 %v55
  %v541 = vunpack.c.h.b16 %v55
  %v542 = vunpack.c.l.b16 %v56
  %v543 = vunpack.c.l.b16 %v57
  %v544 = vunpack.c.h.b16 %v57
  %v545 = vunpack.c.l.b16 %v58
  %v546 = vunpack.c.h.b16 %v58
  %v547 = vunpack.c.l.b16 %v59
  %v548 = vunpack.c.l.b16 %v60
  %v549 = vunpack.c.h.b16 %v60
  %v550 = vunpack.c.l.b16 %v61
  %v551 = vunpack.c.h.b16 %v61
  %v552 = vunpack.c.l.b16 %v62
  %v553 = vunpack.c.l.b16 %v63
  %v554 = vunpack.c.h.b16 %v63
  %v555 = vunpack.c.l.b16 %v64
  %v556 = vunpack.c.h.b16 %v64
  %v557 = vunpack.c.l.b16 %v65
  %v558 = vunpack.c.l.b16 %v66
  %v559 = vunpack.c.h.b16 %v66
  %v560 = vunpack.c.l.b16 %v67
  %v561 = vunpack.c.h.b16 %v67
  %v562 = vunpack.c.l.b16 %v68
  %v563 = vunpack.c.l.b16 %v69
  %v564 = vunpack.c.h.b16 %v69
  %v565 = vunpack.c.l.b16 %v70
  %v566 = vunpack.c.h.b16 %v70
  %v567 = vunpack.c.l.b16 %v71
  %v568 = vunpack.c.l.b16 %v72
  %v569 = vunpack.c.h.b16 %v72
  %v570 = vunpack.c.l.b16 %v73
  %v571 = vunpack.c.h.b16 %v73
  %v572 = vunpack.c.l.b16 %v74
  %v573 = vunpack.c.l.b16 %v75
  %v574 = vunpack.c.h.b16 %v75
  %v575 = vunpack.c.l.b16 %v76
  %v576 = vunpack.c.h.b16 %v76
  %v577 = vunpack.c.l.b16 %v77
  %v578 = vunpack.c.l.b16 %v78
  %v579 = vunpack.c.h.b16 %v78
  %v580 = vunpack.c.l.b16 %v79
  %v581 = vunpack.c.h.b16 %v79
  %v582 = vunpack.c.l.b16 %v80
  %v583 = vunpack.c.l.b16 %v81
  %v584 = vunpack.c.h.b16 %v81
  %v585 = vunpack.c.l.b16 %v82
  %v586 = vunpack.c.h.b16 %v82
  %v587 = vunpack.c.l.b16 %v83
  %v588 = vunpack.c.l.b16 %v84
  %v589 = vunpack.c.h.b16 %v84
  %v590 = vunpack.c.l.b16 %v85
  %v591 = vunpack.c.h.b16 %v85
  %v592 = vunpack.c.l.b16 %v86
  %v593 = vunpack.c.l.b16 %v87
  %v594 = vunpack.c.h.b16 %v87
  %v595 = vunpack.c.l.b16 %v88
  %v596 = vunpack.c.h.b16 %v88
  %v597 = vunpack.c.l.b16 %v89
  %v598 = vunpack.c.l.b16 %v90
  %v599 = vunpack.c.h.b16 %v90
  %v600 = vunpack.c.l.b16 %v91
  %v601 = vunpack.c.h.b16 %v91
  %v602 = vunpack.c.l.b16 %v92
  %v603 = vunpack.c.l.b16 %v93
  %v604 = vunpack.c.h.b16 %v93
  %v605 = vunpack.c.l.b16 %v94
  %v606 = vunpack.c.h.b16 %v94
  %v607 = vunpack.c.l.b16 %v95
  %v608 = vunpack.c.l.b16 %v96
  %v609 = vunpack.c.h.b16 %v96
  %v610 = vunpack.c.l.b16 %v97
  %v611 = vunpack.c.h.b16 %v97
  %v612 = vunpack.c.l.b16 %v98
  %v613 = vunpack.c.l.b16 %v99
  %v614 = vunpack.c.h.b16 %v99
  %v615 = vunpack.c.l.b16 %v100
  %v616 = vunpack.c.h.b16 %v100
  %v617 = vunpack.c.l.b16 %v101
  %v618 = vunpack.c.l.b16 %v102
  %v619 = vunpack.c.h.b16 %v102
  %v620 = vunpack.c.l.b16 %v103
  %v621 = vunpack.c.h.b16 %v103
  %v622 = vunpack.c.l.b16 %v104
  %v623 = vunpack.c.l.b16 %v105
  %v624 = vunpack.c.h.b16 %v105
  %v625 = vunpack.c.l.b16 %v106
  %v626 = vunpack.c.h.b16 %v106
  %v627 = vunpack.c.l.b16 %v107
  %v628 = vunpack.c.l.b16 %v108
  %v629 = vunpack.c.h.b16 %v108
  %v630 = vunpack.c.l.b16 %v109
  %v631 = vunpack.c.h.b16 %v109
  %v632 = vunpack.c.l.b16 %v110
  %v633 = vunpack.c.l.b16 %v111
  %v634 = vunpack.c.h.b16 %v111
  %v635 = vunpack.c.l.b16 %v112
  %v636 = vunpack.c.h.b16 %v112
  %v637 = vunpack.c.l.b16 %v113
  %v638 = vunpack.c.l.b16 %v114
  %v639 = vunpack.c.h.b16 %v114
  %v640 = vunpack.c.l.b16 %v115
  %v641 = vunpack.c.h.b16 %v115
  %v642 = vunpack.c.l.b16 %v116
  %v643 = vunpack.c.l.b16 %v117
  %v644 = vunpack.c.h.b16 %v117
  %v645 = vunpack.c.l.b16 %v118
  %v646 = vunpack.c.h.b16 %v118
  %v647 = vunpack.c.l.b16 %v119
  %v648 = vunpack.c.l.b16 %v120
  %v649 = vunpack.c.h.b16 %v120
  %v650 = vunpack.c.l.b16 %v121
  %v651 = vunpack.c.h.b16 %v121
  %v652 = vunpack.c.l.b16 %v122
  %v653 = vpack.c.b16 %v498, %v493
  %v654 = vpack.c.b16 %v499, %v494
  %v655 = vpack.c.b16 %v500, %v495
  %v656 = vpack.c.b16 %v501, %v496
  %v657 = vpack.c.b16 %v502, %v497
  %v658 = vpack.c.b16 %v508, %v503
  %v659 = vpack.c.b16 %v509, %v504
  %v660 = vpack.c.b16 %v510, %v505
  %v661 = vpack.c.b16 %v511, %v506
  %v662 = vpack.c.b16 %v512, %v507
  %v663 = vpack.c.b16 %v518, %v513
  %v664 = vpack.c.b16 %v519, %v514
  %v665 = vpack.c.b16 %v520, %v515
  %v666 = vpack.c.b16 %v521, %v516
  %v667 = vpack.c.b16 %v522, %v517
  %v668 = vpack.c.b16 %v528, %v523
  %v669 = vpack.c.b16 %v529, %v524
  %v670 = vpack.c.b16 %v530, %v525
  %v671 = vpack.c.b16 %v531, %v526
  %v672 = vpack.c.b16 %v532, %v527
  %v673 = vpack.c.b16 %v538, %v533
  %v674 = vpack.c.b16 %v539, %v534
  %v675 = vpack.c.b16 %v540, %v535
  %v676 = vpack.c.b16 %v541, %v536
  %v677 = vpack.c.b16 %v542, %v537
  %v678 = vpack.c.b16 %v548, %v543
  %v679 = vpack.c.b16 %v549, %v544
  %v680 = vpack.c.b16 %v550, %v545
  %v681 = vpack.c.b16 %v551, %v546
  %v682 = vpack.c.b16 %v552, %v547
  %v683 = vpack.c.b16 %v558, %v553
  %v684 = vpack.c.b16 %v559, %v554
  %v685 = vpack.c.b16 %v560, %v555
  %v686 = vpack.c.b16 %v561, %v556
  %v687 = vpack.c.b16 %v562, %v557
  %v688 = vpack.c.b16 %v568, %v563
  %v689 = vpack.c.b16 %v569, %v564
  %v690 = vpack.c.b16 %v570, %v565
  %v691 = vpack.c.b16 %v571, %v566
  %v692 = vpack.c.b16 %v572, %v567
  %v693 = vpack.c.b16 %v578, %v573
  %v694 = vpack.c.b16 %v579, %v574
  %v695 = vpack.c.b16 %v580, %v575
  %v696 = vpack.c.b16 %v581, %v576
  %v697 = vpack.c.b16 %v582, %v577
  %v698 = vpack.c.b16 %v588, %v583
  %v699 = vpack.c.b16 %v589, %v584
  %v700 = vpack.c.b16 %v590, %v585
  %v701 = vpack.c.b16 %v591, %v586
  %v702 = vpack.c.b16 %v592, %v587
  %v703 = vpack.c.b16 %v598, %v593
  %v704 = vpack.c.b16 %v599, %v594
  %v705 = vpack.c.b16 %v600, %v595
  %v706 = vpack.c.b16 %v601, %v596
  %v707 = vpack.c.b16 %v602, %v597
  %v708 = vpack.c.b16 %v608, %v603
  %v709 = vpack.c.b16 %v609, %v604
  %v710 = vpack.c.b16 %v610, %v605
  %v711 = vpack.c.b16 %v611, %v606
  %v712 = vpack.c.b16 %v612, %v607
  %v713 = vpack.c.b16 %v618, %v613
  %v714 = vpack.c.b16 %v619, %v614
  %v715 = vpack.c.b16 %v620, %v615
  %v716 = vpack.c.b16 %v621, %v616
  %v717 = vpack.c.b16 %v622, %v617
  %v718 = vpack.c.b16 %v628, %v623
  %v719 = vpack.c.b16 %v629, %v624
  %v720 = vpack.c.b16 %v630, %v625
  %v721 = vpack.c.b16 %v631, %v626
  %v722 = vpack.c.b16 %v632, %v627
  %v723 = vpack.c.b16 %v638, %v633
  %v724 = vpack.c.b16 %v639, %v634
  %v725 = vpack.c.b16 %v640, %v635
  %v726 = vpack.c.b16 %v641, %v636
  %v727 = vpack.c.b16 %v642, %v637
  %v728 = vpack.c.b16 %v648, %v643
  %v729 = vpack.c.b16 %v649, %v644
  %v730 = vpack.c.b16 %v650, %v645
  %v731 = vpack.c.b16 %v651, %v646
  %v732 = vpack.c.b16 %v652, %v647
  %vm797 = vcmask 523264
  %v799 = vsel %vm797, %v657, 0
  %v802 = vsel %vm797, %v662, 0
  %v805 = vsel %vm797, %v667, 0
  %v808 = vsel %vm797, %v672, 0
  %v811 = vsel %vm797, %v677, 0
  %v814 = vsel %vm797, %v682, 0
  %v817 = vsel %vm797, %v687, 0
  %v820 = vsel %vm797, %v692, 0
  %v823 = vsel %vm797, %v697, 0
  %v826 = vsel %vm797, %v702, 0
  %v829 = vsel %vm797, %v707, 0
  %v832 = vsel %vm797, %v712, 0
  %v835 = vsel %vm797, %v717, 0
  %v838 = vsel %vm797, %v722, 0
  %v841 = vsel %vm797, %v727, 0
  %v844 = vsel %vm797, %v732, 0
  %846 = vmatprep.subr.bf16.mxu0 %v326
  %847 = vmatpush1.bf16.msra.mxu0 %v325
  %848 = vmatprep.subr.bf16.mxu0 %v328
  %849 = vmatpush1.bf16.msra.mxu0 %v327
  %850 = vmatprep.subr.bf16.mxu0 %v330
  %851 = vmatpush1.bf16.msra.mxu0 %v329
  %852 = vmatprep.subr.bf16.mxu0 %v332
  %853 = vmatpush1.bf16.msra.mxu0 %v331
  %854 = vmatprep.subr.bf16.mxu0 %v334
  %855 = vmatpush1.bf16.msra.mxu0 %v333
  %856 = vmatprep.subr.bf16.mxu0 %v336
  %857 = vmatpush1.bf16.msra.mxu0 %v335
  %858 = vmatprep.subr.bf16.mxu0 %v338
  %859 = vmatpush1.bf16.msra.mxu0 %v337
  %860 = vmatprep.subr.bf16.mxu0 %v340
  %861 = vmatpush1.bf16.msra.mxu0 %v339
  %862 = vmatprep.subr.bf16.mxu0 %v342
  %863 = vmatpush1.bf16.msra.mxu0 %v341
  %864 = vmatprep.subr.bf16.mxu0 %v344
  %865 = vmatpush1.bf16.msra.mxu0 %v343
  %866 = vmatprep.subr.bf16.mxu0 %v346
  %867 = vmatpush1.bf16.msra.mxu0 %v345
  %868 = vmatprep.subr.bf16.mxu0 %v348
  %869 = vmatpush1.bf16.msra.mxu0 %v347
  %870 = vmatprep.subr.bf16.mxu0 %v350
  %871 = vmatpush1.bf16.msra.mxu0 %v349
  %872 = vmatprep.subr.bf16.mxu0 %v352
  %873 = vmatpush1.bf16.msra.mxu0 %v351
  %874 = vmatprep.subr.bf16.mxu0 %v354
  %875 = vmatpush1.bf16.msra.mxu0 %v353
  %876 = vmatprep.subr.bf16.mxu0 %v356
  %877 = vmatpush1.bf16.msra.mxu0 %v355
  %878 = vmatprep.mubr.bf16.mxu0 %v654
  %879 = vmatmul.mubr.bf16.gmra.mrb[0].mxu0 %v653
  %v880 = vpop.f32.mrb[0].mxu0
  %v881 = vadd.f32 0.0, %v880
  %v882 = vpop.f32.mrb[0].mxu0
  %v883 = vadd.f32 0.0, %v882
  %v884 = vpop.f32.mrb[0].mxu0
  %v885 = vadd.f32 0.0, %v884
  %v886 = vpop.f32.mrb[0].mxu0
  %v887 = vadd.f32 0.0, %v886
  %888 = vmatprep.mubr.bf16.mxu0 %v659
  %889 = vmatmul.mubr.bf16.gmra.mrb[0].mxu0 %v658
  %v890 = vpop.f32.mrb[0].mxu0
  %v891 = vadd.f32 0.0, %v890
  %v892 = vpop.f32.mrb[0].mxu0
  %v893 = vadd.f32 0.0, %v892
  %v894 = vpop.f32.mrb[0].mxu0
  %v895 = vadd.f32 0.0, %v894
  %v896 = vpop.f32.mrb[0].mxu0
  %v897 = vadd.f32 0.0, %v896
  %898 = vmatprep.mubr.bf16.mxu0 %v664
  %899 = vmatmul.mubr.bf16.gmra.mrb[0].mxu0 %v663
  %v900 = vpop.f32.mrb[0].mxu0
  %v901 = vadd.f32 0.0, %v900
  %v902 = vpop.f32.mrb[0].mxu0
  %v903 = vadd.f32 0.0, %v902
  %v904 = vpop.f32.mrb[0].mxu0
  %v905 = vadd.f32 0.0, %v904
  %v906 = vpop.f32.mrb[0].mxu0
  %v907 = vadd.f32 0.0, %v906
  %908 = vmatprep.mubr.bf16.mxu0 %v669
  %909 = vmatmul.mubr.bf16.gmra.mrb[0].mxu0 %v668
  %v910 = vpop.f32.mrb[0].mxu0
  %v911 = vadd.f32 0.0, %v910
  %v912 = vpop.f32.mrb[0].mxu0
  %v913 = vadd.f32 0.0, %v912
  %v914 = vpop.f32.mrb[0].mxu0
  %v915 = vadd.f32 0.0, %v914
  %v916 = vpop.f32.mrb[0].mxu0
  %v917 = vadd.f32 0.0, %v916
  %918 = vmatprep.mubr.bf16.mxu0 %v674
  %919 = vmatmul.mubr.bf16.gmra.mrb[0].mxu0 %v673
  %v920 = vpop.f32.mrb[0].mxu0
  %v921 = vadd.f32 0.0, %v920
  %v922 = vpop.f32.mrb[0].mxu0
  %v923 = vadd.f32 0.0, %v922
  %v924 = vpop.f32.mrb[0].mxu0
  %v925 = vadd.f32 0.0, %v924
  %v926 = vpop.f32.mrb[0].mxu0
  %v927 = vadd.f32 0.0, %v926
  %928 = vmatprep.mubr.bf16.mxu0 %v679
  %929 = vmatmul.mubr.bf16.gmra.mrb[0].mxu0 %v678
  %v930 = vpop.f32.mrb[0].mxu0
  %v931 = vadd.f32 0.0, %v930
  %v932 = vpop.f32.mrb[0].mxu0
  %v933 = vadd.f32 0.0, %v932
  %v934 = vpop.f32.mrb[0].mxu0
  %v935 = vadd.f32 0.0, %v934
  %v936 = vpop.f32.mrb[0].mxu0
  %v937 = vadd.f32 0.0, %v936
  %938 = vmatprep.mubr.bf16.mxu0 %v684
  %939 = vmatmul.mubr.bf16.gmra.mrb[0].mxu0 %v683
  %v940 = vpop.f32.mrb[0].mxu0
  %v941 = vadd.f32 0.0, %v940
  %v942 = vpop.f32.mrb[0].mxu0
  %v943 = vadd.f32 0.0, %v942
  %v944 = vpop.f32.mrb[0].mxu0
  %v945 = vadd.f32 0.0, %v944
  %v946 = vpop.f32.mrb[0].mxu0
  %v947 = vadd.f32 0.0, %v946
  %948 = vmatprep.mubr.bf16.mxu0 %v689
  %949 = vmatmul.mubr.bf16.gmra.mrb[0].mxu0 %v688
  %v950 = vpop.f32.mrb[0].mxu0
  %v951 = vadd.f32 0.0, %v950
  %v952 = vpop.f32.mrb[0].mxu0
  %v953 = vadd.f32 0.0, %v952
  %v954 = vpop.f32.mrb[0].mxu0
  %v955 = vadd.f32 0.0, %v954
  %v956 = vpop.f32.mrb[0].mxu0
  %v957 = vadd.f32 0.0, %v956
  %958 = vmatprep.mubr.bf16.mxu0 %v694
  %959 = vmatmul.mubr.bf16.gmra.mrb[0].mxu0 %v693
  %v960 = vpop.f32.mrb[0].mxu0
  %v961 = vadd.f32 0.0, %v960
  %v962 = vpop.f32.mrb[0].mxu0
  %v963 = vadd.f32 0.0, %v962
  %v964 = vpop.f32.mrb[0].mxu0
  %v965 = vadd.f32 0.0, %v964
  %v966 = vpop.f32.mrb[0].mxu0
  %v967 = vadd.f32 0.0, %v966
  %968 = vmatprep.mubr.bf16.mxu0 %v699
  %969 = vmatmul.mubr.bf16.gmra.mrb[0].mxu0 %v698
  %v970 = vpop.f32.mrb[0].mxu0
  %v971 = vadd.f32 0.0, %v970
  %v972 = vpop.f32.mrb[0].mxu0
  %v973 = vadd.f32 0.0, %v972
  %v974 = vpop.f32.mrb[0].mxu0
  %v975 = vadd.f32 0.0, %v974
  %v976 = vpop.f32.mrb[0].mxu0
  %v977 = vadd.f32 0.0, %v976
  %978 = vmatprep.mubr.bf16.mxu0 %v704
  %979 = vmatmul.mubr.bf16.gmra.mrb[0].mxu0 %v703
  %v980 = vpop.f32.mrb[0].mxu0
  %v981 = vadd.f32 0.0, %v980
  %v982 = vpop.f32.mrb[0].mxu0
  %v983 = vadd.f32 0.0, %v982
  %v984 = vpop.f32.mrb[0].mxu0
  %v985 = vadd.f32 0.0, %v984
  %v986 = vpop.f32.mrb[0].mxu0
  %v987 = vadd.f32 0.0, %v986
  %988 = vmatprep.mubr.bf16.mxu0 %v709
  %989 = vmatmul.mubr.bf16.gmra.mrb[0].mxu0 %v708
  %v990 = vpop.f32.mrb[0].mxu0
  %v991 = vadd.f32 0.0, %v990
  %v992 = vpop.f32.mrb[0].mxu0
  %v993 = vadd.f32 0.0, %v992
  %v994 = vpop.f32.mrb[0].mxu0
  %v995 = vadd.f32 0.0, %v994
  %v996 = vpop.f32.mrb[0].mxu0
  %v997 = vadd.f32 0.0, %v996
  %998 = vmatprep.mubr.bf16.mxu0 %v714
  %999 = vmatmul.mubr.bf16.gmra.mrb[0].mxu0 %v713
  %v1000 = vpop.f32.mrb[0].mxu0
  %v1001 = vadd.f32 0.0, %v1000
  %v1002 = vpop.f32.mrb[0].mxu0
  %v1003 = vadd.f32 0.0, %v1002
  %v1004 = vpop.f32.mrb[0].mxu0
  %v1005 = vadd.f32 0.0, %v1004
  %v1006 = vpop.f32.mrb[0].mxu0
  %v1007 = vadd.f32 0.0, %v1006
  %1008 = vmatprep.mubr.bf16.mxu0 %v719
  %1009 = vmatmul.mubr.bf16.gmra.mrb[0].mxu0 %v718
  %v1010 = vpop.f32.mrb[0].mxu0
  %v1011 = vadd.f32 0.0, %v1010
  %v1012 = vpop.f32.mrb[0].mxu0
  %v1013 = vadd.f32 0.0, %v1012
  %v1014 = vpop.f32.mrb[0].mxu0
  %v1015 = vadd.f32 0.0, %v1014
  %v1016 = vpop.f32.mrb[0].mxu0
  %v1017 = vadd.f32 0.0, %v1016
  %1018 = vmatprep.mubr.bf16.mxu0 %v724
  %1019 = vmatmul.mubr.bf16.gmra.mrb[0].mxu0 %v723
  %v1020 = vpop.f32.mrb[0].mxu0
  %v1021 = vadd.f32 0.0, %v1020
  %v1022 = vpop.f32.mrb[0].mxu0
  %v1023 = vadd.f32 0.0, %v1022
  %v1024 = vpop.f32.mrb[0].mxu0
  %v1025 = vadd.f32 0.0, %v1024
  %v1026 = vpop.f32.mrb[0].mxu0
  %v1027 = vadd.f32 0.0, %v1026
  %1028 = vmatprep.mubr.bf16.mxu0 %v729
  %1029 = vmatmul.mubr.bf16.gmra.mrb[0].mxu0 %v728
  %v1030 = vpop.f32.mrb[0].mxu0
  %v1031 = vadd.f32 0.0, %v1030
  %v1032 = vpop.f32.mrb[0].mxu0
  %v1033 = vadd.f32 0.0, %v1032
  %v1034 = vpop.f32.mrb[0].mxu0
  %v1035 = vadd.f32 0.0, %v1034
  %v1036 = vpop.f32.mrb[0].mxu0
  %v1037 = vadd.f32 0.0, %v1036
  %1038 = vdwg.mxu0
  %1039 = vmatprep.subr.bf16.mxu0 %v358
  %1040 = vmatpush1.bf16.msra.mxu0 %v357
  %1041 = vmatprep.subr.bf16.mxu0 %v360
  %1042 = vmatpush1.bf16.msra.mxu0 %v359
  %1043 = vmatprep.subr.bf16.mxu0 %v362
  %1044 = vmatpush1.bf16.msra.mxu0 %v361
  %1045 = vmatprep.subr.bf16.mxu0 %v364
  %1046 = vmatpush1.bf16.msra.mxu0 %v363
  %1047 = vmatprep.subr.bf16.mxu0 %v366
  %1048 = vmatpush1.bf16.msra.mxu0 %v365
  %1049 = vmatprep.subr.bf16.mxu0 %v368
  %1050 = vmatpush1.bf16.msra.mxu0 %v367
  %1051 = vmatprep.subr.bf16.mxu0 %v370
  %1052 = vmatpush1.bf16.msra.mxu0 %v369
  %1053 = vmatprep.subr.bf16.mxu0 %v372
  %1054 = vmatpush1.bf16.msra.mxu0 %v371
  %1055 = vmatprep.subr.bf16.mxu0 %v374
  %1056 = vmatpush1.bf16.msra.mxu0 %v373
  %1057 = vmatprep.subr.bf16.mxu0 %v376
  %1058 = vmatpush1.bf16.msra.mxu0 %v375
  %1059 = vmatprep.subr.bf16.mxu0 %v378
  %1060 = vmatpush1.bf16.msra.mxu0 %v377
  %1061 = vmatprep.subr.bf16.mxu0 %v380
  %1062 = vmatpush1.bf16.msra.mxu0 %v379
  %1063 = vmatprep.subr.bf16.mxu0 %v382
  %1064 = vmatpush1.bf16.msra.mxu0 %v381
  %1065 = vmatprep.subr.bf16.mxu0 %v384
  %1066 = vmatpush1.bf16.msra.mxu0 %v383
  %1067 = vmatprep.subr.bf16.mxu0 %v386
  %1068 = vmatpush1.bf16.msra.mxu0 %v385
  %1069 = vmatprep.subr.bf16.mxu0 %v388
  %1070 = vmatpush1.bf16.msra.mxu0 %v387
  %1071 = vmatprep.mubr.bf16.mxu0 %v656
  %1072 = vmatmul.mubr.bf16.gmra.mrb[0].mxu0 %v655
  %v1073 = vpop.f32.mrb[0].mxu0
  %v1074 = vadd.f32 %v881, %v1073
  %v1075 = vpop.f32.mrb[0].mxu0
  %v1076 = vadd.f32 %v883, %v1075
  %v1077 = vpop.f32.mrb[0].mxu0
  %v1078 = vadd.f32 %v885, %v1077
  %v1079 = vpop.f32.mrb[0].mxu0
  %v1080 = vadd.f32 %v887, %v1079
  %1081 = vmatprep.mubr.bf16.mxu0 %v661
  %1082 = vmatmul.mubr.bf16.gmra.mrb[0].mxu0 %v660
  %v1083 = vpop.f32.mrb[0].mxu0
  %v1084 = vadd.f32 %v891, %v1083
  %v1085 = vpop.f32.mrb[0].mxu0
  %v1086 = vadd.f32 %v893, %v1085
  %v1087 = vpop.f32.mrb[0].mxu0
  %v1088 = vadd.f32 %v895, %v1087
  %v1089 = vpop.f32.mrb[0].mxu0
  %v1090 = vadd.f32 %v897, %v1089
  %1091 = vmatprep.mubr.bf16.mxu0 %v666
  %1092 = vmatmul.mubr.bf16.gmra.mrb[0].mxu0 %v665
  %v1093 = vpop.f32.mrb[0].mxu0
  %v1094 = vadd.f32 %v901, %v1093
  %v1095 = vpop.f32.mrb[0].mxu0
  %v1096 = vadd.f32 %v903, %v1095
  %v1097 = vpop.f32.mrb[0].mxu0
  %v1098 = vadd.f32 %v905, %v1097
  %v1099 = vpop.f32.mrb[0].mxu0
  %v1100 = vadd.f32 %v907, %v1099
  %1101 = vmatprep.mubr.bf16.mxu0 %v671
  %1102 = vmatmul.mubr.bf16.gmra.mrb[0].mxu0 %v670
  %v1103 = vpop.f32.mrb[0].mxu0
  %v1104 = vadd.f32 %v911, %v1103
  %v1105 = vpop.f32.mrb[0].mxu0
  %v1106 = vadd.f32 %v913, %v1105
  %v1107 = vpop.f32.mrb[0].mxu0
  %v1108 = vadd.f32 %v915, %v1107
  %v1109 = vpop.f32.mrb[0].mxu0
  %v1110 = vadd.f32 %v917, %v1109
  %1111 = vmatprep.mubr.bf16.mxu0 %v676
  %1112 = vmatmul.mubr.bf16.gmra.mrb[0].mxu0 %v675
  %v1113 = vpop.f32.mrb[0].mxu0
  %v1114 = vadd.f32 %v921, %v1113
  %v1115 = vpop.f32.mrb[0].mxu0
  %v1116 = vadd.f32 %v923, %v1115
  %v1117 = vpop.f32.mrb[0].mxu0
  %v1118 = vadd.f32 %v925, %v1117
  %v1119 = vpop.f32.mrb[0].mxu0
  %v1120 = vadd.f32 %v927, %v1119
  %1121 = vmatprep.mubr.bf16.mxu0 %v681
  %1122 = vmatmul.mubr.bf16.gmra.mrb[0].mxu0 %v680
  %v1123 = vpop.f32.mrb[0].mxu0
  %v1124 = vadd.f32 %v931, %v1123
  %v1125 = vpop.f32.mrb[0].mxu0
  %v1126 = vadd.f32 %v933, %v1125
  %v1127 = vpop.f32.mrb[0].mxu0
  %v1128 = vadd.f32 %v935, %v1127
  %v1129 = vpop.f32.mrb[0].mxu0
  %v1130 = vadd.f32 %v937, %v1129
  %1131 = vmatprep.mubr.bf16.mxu0 %v686
  %1132 = vmatmul.mubr.bf16.gmra.mrb[0].mxu0 %v685
  %v1133 = vpop.f32.mrb[0].mxu0
  %v1134 = vadd.f32 %v941, %v1133
  %v1135 = vpop.f32.mrb[0].mxu0
  %v1136 = vadd.f32 %v943, %v1135
  %v1137 = vpop.f32.mrb[0].mxu0
  %v1138 = vadd.f32 %v945, %v1137
  %v1139 = vpop.f32.mrb[0].mxu0
  %v1140 = vadd.f32 %v947, %v1139
  %1141 = vmatprep.mubr.bf16.mxu0 %v691
  %1142 = vmatmul.mubr.bf16.gmra.mrb[0].mxu0 %v690
  %v1143 = vpop.f32.mrb[0].mxu0
  %v1144 = vadd.f32 %v951, %v1143
  %v1145 = vpop.f32.mrb[0].mxu0
  %v1146 = vadd.f32 %v953, %v1145
  %v1147 = vpop.f32.mrb[0].mxu0
  %v1148 = vadd.f32 %v955, %v1147
  %v1149 = vpop.f32.mrb[0].mxu0
  %v1150 = vadd.f32 %v957, %v1149
  %1151 = vmatprep.mubr.bf16.mxu0 %v696
  %1152 = vmatmul.mubr.bf16.gmra.mrb[0].mxu0 %v695
  %v1153 = vpop.f32.mrb[0].mxu0
  %v1154 = vadd.f32 %v961, %v1153
  %v1155 = vpop.f32.mrb[0].mxu0
  %v1156 = vadd.f32 %v963, %v1155
  %v1157 = vpop.f32.mrb[0].mxu0
  %v1158 = vadd.f32 %v965, %v1157
  %v1159 = vpop.f32.mrb[0].mxu0
  %v1160 = vadd.f32 %v967, %v1159
  %1161 = vmatprep.mubr.bf16.mxu0 %v701
  %1162 = vmatmul.mubr.bf16.gmra.mrb[0].mxu0 %v700
  %v1163 = vpop.f32.mrb[0].mxu0
  %v1164 = vadd.f32 %v971, %v1163
  %v1165 = vpop.f32.mrb[0].mxu0
  %v1166 = vadd.f32 %v973, %v1165
  %v1167 = vpop.f32.mrb[0].mxu0
  %v1168 = vadd.f32 %v975, %v1167
  %v1169 = vpop.f32.mrb[0].mxu0
  %v1170 = vadd.f32 %v977, %v1169
  %1171 = vmatprep.mubr.bf16.mxu0 %v706
  %1172 = vmatmul.mubr.bf16.gmra.mrb[0].mxu0 %v705
  %v1173 = vpop.f32.mrb[0].mxu0
  %v1174 = vadd.f32 %v981, %v1173
  %v1175 = vpop.f32.mrb[0].mxu0
  %v1176 = vadd.f32 %v983, %v1175
  %v1177 = vpop.f32.mrb[0].mxu0
  %v1178 = vadd.f32 %v985, %v1177
  %v1179 = vpop.f32.mrb[0].mxu0
  %v1180 = vadd.f32 %v987, %v1179
  %1181 = vmatprep.mubr.bf16.mxu0 %v711
  %1182 = vmatmul.mubr.bf16.gmra.mrb[0].mxu0 %v710
  %v1183 = vpop.f32.mrb[0].mxu0
  %v1184 = vadd.f32 %v991, %v1183
  %v1185 = vpop.f32.mrb[0].mxu0
  %v1186 = vadd.f32 %v993, %v1185
  %v1187 = vpop.f32.mrb[0].mxu0
  %v1188 = vadd.f32 %v995, %v1187
  %v1189 = vpop.f32.mrb[0].mxu0
  %v1190 = vadd.f32 %v997, %v1189
  %1191 = vmatprep.mubr.bf16.mxu0 %v716
  %1192 = vmatmul.mubr.bf16.gmra.mrb[0].mxu0 %v715
  %v1193 = vpop.f32.mrb[0].mxu0
  %v1194 = vadd.f32 %v1001, %v1193
  %v1195 = vpop.f32.mrb[0].mxu0
  %v1196 = vadd.f32 %v1003, %v1195
  %v1197 = vpop.f32.mrb[0].mxu0
  %v1198 = vadd.f32 %v1005, %v1197
  %v1199 = vpop.f32.mrb[0].mxu0
  %v1200 = vadd.f32 %v1007, %v1199
  %1201 = vmatprep.mubr.bf16.mxu0 %v721
  %1202 = vmatmul.mubr.bf16.gmra.mrb[0].mxu0 %v720
  %v1203 = vpop.f32.mrb[0].mxu0
  %v1204 = vadd.f32 %v1011, %v1203
  %v1205 = vpop.f32.mrb[0].mxu0
  %v1206 = vadd.f32 %v1013, %v1205
  %v1207 = vpop.f32.mrb[0].mxu0
  %v1208 = vadd.f32 %v1015, %v1207
  %v1209 = vpop.f32.mrb[0].mxu0
  %v1210 = vadd.f32 %v1017, %v1209
  %1211 = vmatprep.mubr.bf16.mxu0 %v726
  %1212 = vmatmul.mubr.bf16.gmra.mrb[0].mxu0 %v725
  %v1213 = vpop.f32.mrb[0].mxu0
  %v1214 = vadd.f32 %v1021, %v1213
  %v1215 = vpop.f32.mrb[0].mxu0
  %v1216 = vadd.f32 %v1023, %v1215
  %v1217 = vpop.f32.mrb[0].mxu0
  %v1218 = vadd.f32 %v1025, %v1217
  %v1219 = vpop.f32.mrb[0].mxu0
  %v1220 = vadd.f32 %v1027, %v1219
  %1221 = vmatprep.mubr.bf16.mxu0 %v731
  %1222 = vmatmul.mubr.bf16.gmra.mrb[0].mxu0 %v730
  %v1223 = vpop.f32.mrb[0].mxu0
  %v1224 = vadd.f32 %v1031, %v1223
  %v1225 = vpop.f32.mrb[0].mxu0
  %v1226 = vadd.f32 %v1033, %v1225
  %v1227 = vpop.f32.mrb[0].mxu0
  %v1228 = vadd.f32 %v1035, %v1227
  %v1229 = vpop.f32.mrb[0].mxu0
  %v1230 = vadd.f32 %v1037, %v1229
  %1231 = vdwg.mxu0
  %1232 = vmatprep.subr.bf16.mxu0 %v390
  %1233 = vmatpush1.bf16.msra.mxu0 %v389
  %1234 = vmatprep.subr.bf16.mxu0 %v392
  %1235 = vmatpush1.bf16.msra.mxu0 %v391
  %1236 = vmatprep.subr.bf16.mxu0 %v394
  %1237 = vmatpush1.bf16.msra.mxu0 %v393
  %1238 = vmatprep.subr.bf16.mxu0 %v396
  %1239 = vmatpush1.bf16.msra.mxu0 %v395
  %1240 = vmatprep.subr.bf16.mxu0 0
  %1241 = vmatpush1.bf16.msra.mxu0 0
  %1242 = vmatprep.subr.bf16.mxu0 0
  %1243 = vmatpush1.bf16.msra.mxu0 0
  %1244 = vmatprep.subr.bf16.mxu0 0
  %1245 = vmatpush1.bf16.msra.mxu0 0
  %1246 = vmatprep.subr.bf16.mxu0 0
  %1247 = vmatpush1.bf16.msra.mxu0 0
  %1248 = vmatprep.subr.bf16.mxu0 0
  %1249 = vmatpush1.bf16.msra.mxu0 0
  %1250 = vmatprep.subr.bf16.mxu0 0
  %1251 = vmatpush1.bf16.msra.mxu0 0
  %1252 = vmatprep.subr.bf16.mxu0 0
  %1253 = vmatpush1.bf16.msra.mxu0 0
  %1254 = vmatprep.subr.bf16.mxu0 0
  %1255 = vmatpush1.bf16.msra.mxu0 0
  %1256 = vmatprep.subr.bf16.mxu0 0
  %1257 = vmatpush1.bf16.msra.mxu0 0
  %1258 = vmatprep.subr.bf16.mxu0 0
  %1259 = vmatpush1.bf16.msra.mxu0 0
  %1260 = vmatprep.subr.bf16.mxu0 0
  %1261 = vmatpush1.bf16.msra.mxu0 0
  %1262 = vmatprep.subr.bf16.mxu0 0
  %1263 = vmatpush1.bf16.msra.mxu0 0
  %1264 = vmatprep.mubr.bf16.mxu0 0
  %1265 = vmatmul.mubr.bf16.gmra.mrb[0].mxu0 %v799
  %v1266 = vpop.f32.mrb[0].mxu0
  %v1267 = vadd.f32 %v1074, %v1266
  %v1268 = vpop.f32.mrb[0].mxu0
  %v1269 = vadd.f32 %v1076, %v1268
  %v1270 = vpop.f32.mrb[0].mxu0
  %v1271 = vadd.f32 %v1078, %v1270
  %v1272 = vpop.f32.mrb[0].mxu0
  %v1273 = vadd.f32 %v1080, %v1272
  %1274 = vmatprep.mubr.bf16.mxu0 0
  %1275 = vmatmul.mubr.bf16.gmra.mrb[0].mxu0 %v802
  %v1276 = vpop.f32.mrb[0].mxu0
  %v1277 = vadd.f32 %v1084, %v1276
  %v1278 = vpop.f32.mrb[0].mxu0
  %v1279 = vadd.f32 %v1086, %v1278
  %v1280 = vpop.f32.mrb[0].mxu0
  %v1281 = vadd.f32 %v1088, %v1280
  %v1282 = vpop.f32.mrb[0].mxu0
  %v1283 = vadd.f32 %v1090, %v1282
  %1284 = vmatprep.mubr.bf16.mxu0 0
  %1285 = vmatmul.mubr.bf16.gmra.mrb[0].mxu0 %v805
  %v1286 = vpop.f32.mrb[0].mxu0
  %v1287 = vadd.f32 %v1094, %v1286
  %v1288 = vpop.f32.mrb[0].mxu0
  %v1289 = vadd.f32 %v1096, %v1288
  %v1290 = vpop.f32.mrb[0].mxu0
  %v1291 = vadd.f32 %v1098, %v1290
  %v1292 = vpop.f32.mrb[0].mxu0
  %v1293 = vadd.f32 %v1100, %v1292
  %1294 = vmatprep.mubr.bf16.mxu0 0
  %1295 = vmatmul.mubr.bf16.gmra.mrb[0].mxu0 %v808
  %v1296 = vpop.f32.mrb[0].mxu0
  %v1297 = vadd.f32 %v1104, %v1296
  %v1298 = vpop.f32.mrb[0].mxu0
  %v1299 = vadd.f32 %v1106, %v1298
  %v1300 = vpop.f32.mrb[0].mxu0
  %v1301 = vadd.f32 %v1108, %v1300
  %v1302 = vpop.f32.mrb[0].mxu0
  %v1303 = vadd.f32 %v1110, %v1302
  %1304 = vmatprep.mubr.bf16.mxu0 0
  %1305 = vmatmul.mubr.bf16.gmra.mrb[0].mxu0 %v811
  %v1306 = vpop.f32.mrb[0].mxu0
  %v1307 = vadd.f32 %v1114, %v1306
  %v1308 = vpop.f32.mrb[0].mxu0
  %v1309 = vadd.f32 %v1116, %v1308
  %v1310 = vpop.f32.mrb[0].mxu0
  %v1311 = vadd.f32 %v1118, %v1310
  %v1312 = vpop.f32.mrb[0].mxu0
  %v1313 = vadd.f32 %v1120, %v1312
  %1314 = vmatprep.mubr.bf16.mxu0 0
  %1315 = vmatmul.mubr.bf16.gmra.mrb[0].mxu0 %v814
  %v1316 = vpop.f32.mrb[0].mxu0
  %v1317 = vadd.f32 %v1124, %v1316
  %v1318 = vpop.f32.mrb[0].mxu0
  %v1319 = vadd.f32 %v1126, %v1318
  %v1320 = vpop.f32.mrb[0].mxu0
  %v1321 = vadd.f32 %v1128, %v1320
  %v1322 = vpop.f32.mrb[0].mxu0
  %v1323 = vadd.f32 %v1130, %v1322
  %1324 = vmatprep.mubr.bf16.mxu0 0
  %1325 = vmatmul.mubr.bf16.gmra.mrb[0].mxu0 %v817
  %v1326 = vpop.f32.mrb[0].mxu0
  %v1327 = vadd.f32 %v1134, %v1326
  %v1328 = vpop.f32.mrb[0].mxu0
  %v1329 = vadd.f32 %v1136, %v1328
  %v1330 = vpop.f32.mrb[0].mxu0
  %v1331 = vadd.f32 %v1138, %v1330
  %v1332 = vpop.f32.mrb[0].mxu0
  %v1333 = vadd.f32 %v1140, %v1332
  %1334 = vmatprep.mubr.bf16.mxu0 0
  %1335 = vmatmul.mubr.bf16.gmra.mrb[0].mxu0 %v820
  %v1336 = vpop.f32.mrb[0].mxu0
  %v1337 = vadd.f32 %v1144, %v1336
  %v1338 = vpop.f32.mrb[0].mxu0
  %v1339 = vadd.f32 %v1146, %v1338
  %v1340 = vpop.f32.mrb[0].mxu0
  %v1341 = vadd.f32 %v1148, %v1340
  %v1342 = vpop.f32.mrb[0].mxu0
  %v1343 = vadd.f32 %v1150, %v1342
  %1344 = vmatprep.mubr.bf16.mxu0 0
  %1345 = vmatmul.mubr.bf16.gmra.mrb[0].mxu0 %v823
  %v1346 = vpop.f32.mrb[0].mxu0
  %v1347 = vadd.f32 %v1154, %v1346
  %v1348 = vpop.f32.mrb[0].mxu0
  %v1349 = vadd.f32 %v1156, %v1348
  %v1350 = vpop.f32.mrb[0].mxu0
  %v1351 = vadd.f32 %v1158, %v1350
  %v1352 = vpop.f32.mrb[0].mxu0
  %v1353 = vadd.f32 %v1160, %v1352
  %1354 = vmatprep.mubr.bf16.mxu0 0
  %1355 = vmatmul.mubr.bf16.gmra.mrb[0].mxu0 %v826
  %v1356 = vpop.f32.mrb[0].mxu0
  %v1357 = vadd.f32 %v1164, %v1356
  %v1358 = vpop.f32.mrb[0].mxu0
  %v1359 = vadd.f32 %v1166, %v1358
  %v1360 = vpop.f32.mrb[0].mxu0
  %v1361 = vadd.f32 %v1168, %v1360
  %v1362 = vpop.f32.mrb[0].mxu0
  %v1363 = vadd.f32 %v1170, %v1362
  %1364 = vmatprep.mubr.bf16.mxu0 0
  %1365 = vmatmul.mubr.bf16.gmra.mrb[0].mxu0 %v829
  %v1366 = vpop.f32.mrb[0].mxu0
  %v1367 = vadd.f32 %v1174, %v1366
  %v1368 = vpop.f32.mrb[0].mxu0
  %v1369 = vadd.f32 %v1176, %v1368
  %v1370 = vpop.f32.mrb[0].mxu0
  %v1371 = vadd.f32 %v1178, %v1370
  %v1372 = vpop.f32.mrb[0].mxu0
  %v1373 = vadd.f32 %v1180, %v1372
  %1374 = vmatprep.mubr.bf16.mxu0 0
  %1375 = vmatmul.mubr.bf16.gmra.mrb[0].mxu0 %v832
  %v1376 = vpop.f32.mrb[0].mxu0
  %v1377 = vadd.f32 %v1184, %v1376
  %v1378 = vpop.f32.mrb[0].mxu0
  %v1379 = vadd.f32 %v1186, %v1378
  %v1380 = vpop.f32.mrb[0].mxu0
  %v1381 = vadd.f32 %v1188, %v1380
  %v1382 = vpop.f32.mrb[0].mxu0
  %v1383 = vadd.f32 %v1190, %v1382
  %1384 = vmatprep.mubr.bf16.mxu0 0
  %1385 = vmatmul.mubr.bf16.gmra.mrb[0].mxu0 %v835
  %v1386 = vpop.f32.mrb[0].mxu0
  %v1387 = vadd.f32 %v1194, %v1386
  %v1388 = vpop.f32.mrb[0].mxu0
  %v1389 = vadd.f32 %v1196, %v1388
  %v1390 = vpop.f32.mrb[0].mxu0
  %v1391 = vadd.f32 %v1198, %v1390
  %v1392 = vpop.f32.mrb[0].mxu0
  %v1393 = vadd.f32 %v1200, %v1392
  %1394 = vmatprep.mubr.bf16.mxu0 0
  %1395 = vmatmul.mubr.bf16.gmra.mrb[0].mxu0 %v838
  %v1396 = vpop.f32.mrb[0].mxu0
  %v1397 = vadd.f32 %v1204, %v1396
  %v1398 = vpop.f32.mrb[0].mxu0
  %v1399 = vadd.f32 %v1206, %v1398
  %v1400 = vpop.f32.mrb[0].mxu0
  %v1401 = vadd.f32 %v1208, %v1400
  %v1402 = vpop.f32.mrb[0].mxu0
  %v1403 = vadd.f32 %v1210, %v1402
  %1404 = vmatprep.mubr.bf16.mxu0 0
  %1405 = vmatmul.mubr.bf16.gmra.mrb[0].mxu0 %v841
  %v1406 = vpop.f32.mrb[0].mxu0
  %v1407 = vadd.f32 %v1214, %v1406
  %v1408 = vpop.f32.mrb[0].mxu0
  %v1409 = vadd.f32 %v1216, %v1408
  %v1410 = vpop.f32.mrb[0].mxu0
  %v1411 = vadd.f32 %v1218, %v1410
  %v1412 = vpop.f32.mrb[0].mxu0
  %v1413 = vadd.f32 %v1220, %v1412
  %1414 = vmatprep.mubr.bf16.mxu0 0
  %1415 = vmatmul.mubr.bf16.gmra.mrb[0].mxu0 %v844
  %v1416 = vpop.f32.mrb[0].mxu0
  %v1417 = vadd.f32 %v1224, %v1416
  %v1418 = vpop.f32.mrb[0].mxu0
  %v1419 = vadd.f32 %v1226, %v1418
  %v1420 = vpop.f32.mrb[0].mxu0
  %v1421 = vadd.f32 %v1228, %v1420
  %v1422 = vpop.f32.mrb[0].mxu0
  %v1423 = vadd.f32 %v1230, %v1422
  %1424 = vdwg.mxu0
  %v1425 = vpack.c.bf16 %v1351, %v1347
  %v1426 = vpack.c.bf16 %v1353, %v1349
  %v1427 = vpack.c.bf16 %v1361, %v1357
  %v1428 = vpack.c.bf16 %v1363, %v1359
  %v1429 = vpack.c.bf16 %v1371, %v1367
  %v1430 = vpack.c.bf16 %v1373, %v1369
  %v1431 = vpack.c.bf16 %v1381, %v1377
  %v1432 = vpack.c.bf16 %v1383, %v1379
  %v1433 = vpack.c.bf16 %v1391, %v1387
  %v1434 = vpack.c.bf16 %v1393, %v1389
  %v1435 = vpack.c.bf16 %v1401, %v1397
  %v1436 = vpack.c.bf16 %v1403, %v1399
  %v1437 = vpack.c.bf16 %v1411, %v1407
  %v1438 = vpack.c.bf16 %v1413, %v1409
  %v1439 = vpack.c.bf16 %v1421, %v1417
  %v1440 = vpack.c.bf16 %v1423, %v1419
  %v1473 = vunpack.c.l.b16 %v123
  %v1474 = vunpack.c.l.b16 %v124
  %v1475 = vunpack.c.l.b16 %v125
  %v1476 = vunpack.c.l.b16 %v126
  %v1477 = vunpack.c.l.b16 %v127
  %v1478 = vunpack.c.l.b16 %v128
  %v1479 = vunpack.c.l.b16 %v129
  %v1480 = vunpack.c.l.b16 %v130
  %v1481 = vunpack.c.l.b16 %v131
  %v1482 = vunpack.c.l.b16 %v132
  %v1483 = vunpack.c.l.b16 %v133
  %v1484 = vunpack.c.l.b16 %v134
  %v1485 = vunpack.c.l.b16 %v135
  %v1486 = vunpack.c.l.b16 %v136
  %v1487 = vunpack.c.l.b16 %v137
  %v1488 = vunpack.c.l.b16 %v138
  %v1489 = vunpack.c.l.b16 %v139
  %v1490 = vunpack.c.l.b16 %v140
  %v1491 = vunpack.c.l.b16 %v141
  %v1492 = vunpack.c.l.b16 %v142
  %v1493 = vunpack.c.l.b16 %v143
  %v1494 = vunpack.c.l.b16 %v144
  %v1495 = vunpack.c.l.b16 %v145
  %v1496 = vunpack.c.l.b16 %v146
  %v1497 = vunpack.c.l.b16 %v147
  %v1498 = vunpack.c.l.b16 %v148
  %v1499 = vunpack.c.l.b16 %v149
  %v1500 = vunpack.c.l.b16 %v150
  %v1501 = vunpack.c.l.b16 %v151
  %v1502 = vunpack.c.l.b16 %v152
  %v1503 = vunpack.c.l.b16 %v153
  %v1504 = vunpack.c.l.b16 %v154
  %v1505 = vpack.c.b16 %v1474, %v1473
  %v1506 = vpack.c.b16 %v1476, %v1475
  %v1507 = vpack.c.b16 %v1478, %v1477
  %v1508 = vpack.c.b16 %v1480, %v1479
  %v1509 = vpack.c.b16 %v1482, %v1481
  %v1510 = vpack.c.b16 %v1484, %v1483
  %v1511 = vpack.c.b16 %v1486, %v1485
  %v1512 = vpack.c.b16 %v1488, %v1487
  %v1513 = vpack.c.b16 %v1490, %v1489
  %v1514 = vpack.c.b16 %v1492, %v1491
  %v1515 = vpack.c.b16 %v1494, %v1493
  %v1516 = vpack.c.b16 %v1496, %v1495
  %v1517 = vpack.c.b16 %v1498, %v1497
  %v1518 = vpack.c.b16 %v1500, %v1499
  %v1519 = vpack.c.b16 %v1502, %v1501
  %v1520 = vpack.c.b16 %v1504, %v1503
  %1537 = vmatprep.subr.bf16.mxu0 0
  %1538 = vmatpush1.bf16.msra.mxu0 %v1505
  %1539 = vmatprep.subr.bf16.mxu0 0
  %1540 = vmatpush1.bf16.msra.mxu0 %v1506
  %1541 = vmatprep.subr.bf16.mxu0 0
  %1542 = vmatpush1.bf16.msra.mxu0 %v1507
  %1543 = vmatprep.subr.bf16.mxu0 0
  %1544 = vmatpush1.bf16.msra.mxu0 %v1508
  %1545 = vmatprep.subr.bf16.mxu0 0
  %1546 = vmatpush1.bf16.msra.mxu0 %v1509
  %1547 = vmatprep.subr.bf16.mxu0 0
  %1548 = vmatpush1.bf16.msra.mxu0 %v1510
  %1549 = vmatprep.subr.bf16.mxu0 0
  %1550 = vmatpush1.bf16.msra.mxu0 %v1511
  %1551 = vmatprep.subr.bf16.mxu0 0
  %1552 = vmatpush1.bf16.msra.mxu0 %v1512
  %1553 = vmatprep.subr.bf16.mxu0 0
  %1554 = vmatpush1.bf16.msra.mxu0 %v1513
  %1555 = vmatprep.subr.bf16.mxu0 0
  %1556 = vmatpush1.bf16.msra.mxu0 %v1514
  %1557 = vmatprep.subr.bf16.mxu0 0
  %1558 = vmatpush1.bf16.msra.mxu0 %v1515
  %1559 = vmatprep.subr.bf16.mxu0 0
  %1560 = vmatpush1.bf16.msra.mxu0 %v1516
  %1561 = vmatprep.subr.bf16.mxu0 0
  %1562 = vmatpush1.bf16.msra.mxu0 %v1517
  %1563 = vmatprep.subr.bf16.mxu0 0
  %1564 = vmatpush1.bf16.msra.mxu0 %v1518
  %1565 = vmatprep.subr.bf16.mxu0 0
  %1566 = vmatpush1.bf16.msra.mxu0 %v1519
  %1567 = vmatprep.subr.bf16.mxu0 0
  %1568 = vmatpush1.bf16.msra.mxu0 %v1520
  %1569 = vmatprep.mubr.bf16.mxu0 %v1426
  %1570 = vmatmul.mubr.bf16.gmra.mrb[0].mxu0 %v1425
  %v1571 = vpop.f32.mrb[0].mxu0
  %v1572 = vadd.f32 0.0, %v1571
  %v1573 = vpop.f32.mrb[0].mxu0
  %v1574 = vpop.f32.mrb[0].mxu0
  %v1575 = vadd.f32 0.0, %v1574
  %v1576 = vpop.f32.mrb[0].mxu0
  %1577 = vmatprep.mubr.bf16.mxu0 %v1428
  %1578 = vmatmul.mubr.bf16.gmra.mrb[0].mxu0 %v1427
  %v1579 = vpop.f32.mrb[0].mxu0
  %v1580 = vadd.f32 0.0, %v1579
  %v1581 = vpop.f32.mrb[0].mxu0
  %v1582 = vpop.f32.mrb[0].mxu0
  %v1583 = vadd.f32 0.0, %v1582
  %v1584 = vpop.f32.mrb[0].mxu0
  %1585 = vmatprep.mubr.bf16.mxu0 %v1430
  %1586 = vmatmul.mubr.bf16.gmra.mrb[0].mxu0 %v1429
  %v1587 = vpop.f32.mrb[0].mxu0
  %v1588 = vadd.f32 0.0, %v1587
  %v1589 = vpop.f32.mrb[0].mxu0
  %v1590 = vpop.f32.mrb[0].mxu0
  %v1591 = vadd.f32 0.0, %v1590
  %v1592 = vpop.f32.mrb[0].mxu0
  %1593 = vmatprep.mubr.bf16.mxu0 %v1432
  %1594 = vmatmul.mubr.bf16.gmra.mrb[0].mxu0 %v1431
  %v1595 = vpop.f32.mrb[0].mxu0
  %v1596 = vadd.f32 0.0, %v1595
  %v1597 = vpop.f32.mrb[0].mxu0
  %v1598 = vpop.f32.mrb[0].mxu0
  %v1599 = vadd.f32 0.0, %v1598
  %v1600 = vpop.f32.mrb[0].mxu0
  %1601 = vmatprep.mubr.bf16.mxu0 %v1434
  %1602 = vmatmul.mubr.bf16.gmra.mrb[0].mxu0 %v1433
  %v1603 = vpop.f32.mrb[0].mxu0
  %v1604 = vadd.f32 0.0, %v1603
  %v1605 = vpop.f32.mrb[0].mxu0
  %v1606 = vpop.f32.mrb[0].mxu0
  %v1607 = vadd.f32 0.0, %v1606
  %v1608 = vpop.f32.mrb[0].mxu0
  %1609 = vmatprep.mubr.bf16.mxu0 %v1436
  %1610 = vmatmul.mubr.bf16.gmra.mrb[0].mxu0 %v1435
  %v1611 = vpop.f32.mrb[0].mxu0
  %v1612 = vadd.f32 0.0, %v1611
  %v1613 = vpop.f32.mrb[0].mxu0
  %v1614 = vpop.f32.mrb[0].mxu0
  %v1615 = vadd.f32 0.0, %v1614
  %v1616 = vpop.f32.mrb[0].mxu0
  %1617 = vmatprep.mubr.bf16.mxu0 %v1438
  %1618 = vmatmul.mubr.bf16.gmra.mrb[0].mxu0 %v1437
  %v1619 = vpop.f32.mrb[0].mxu0
  %v1620 = vadd.f32 0.0, %v1619
  %v1621 = vpop.f32.mrb[0].mxu0
  %v1622 = vpop.f32.mrb[0].mxu0
  %v1623 = vadd.f32 0.0, %v1622
  %v1624 = vpop.f32.mrb[0].mxu0
  %1625 = vmatprep.mubr.bf16.mxu0 %v1440
  %1626 = vmatmul.mubr.bf16.gmra.mrb[0].mxu0 %v1439
  %v1627 = vpop.f32.mrb[0].mxu0
  %v1628 = vadd.f32 0.0, %v1627
  %v1629 = vpop.f32.mrb[0].mxu0
  %v1630 = vpop.f32.mrb[0].mxu0
  %v1631 = vadd.f32 0.0, %v1630
  %v1632 = vpop.f32.mrb[0].mxu0
  %1633 = vdwg.mxu0
  %v1634 = vxor.u32 %v1572, 2147483648
  %v1635 = vxor.u32 %v1575, 2147483648
  %v1636 = vxor.u32 %v1580, 2147483648
  %v1637 = vxor.u32 %v1583, 2147483648
  %v1638 = vxor.u32 %v1588, 2147483648
  %v1639 = vxor.u32 %v1591, 2147483648
  %v1640 = vxor.u32 %v1596, 2147483648
  %v1641 = vxor.u32 %v1599, 2147483648
  %v1642 = vxor.u32 %v1604, 2147483648
  %v1643 = vxor.u32 %v1607, 2147483648
  %v1644 = vxor.u32 %v1612, 2147483648
  %v1645 = vxor.u32 %v1615, 2147483648
  %v1646 = vxor.u32 %v1620, 2147483648
  %v1647 = vxor.u32 %v1623, 2147483648
  %v1648 = vxor.u32 %v1628, 2147483648
  %v1649 = vxor.u32 %v1631, 2147483648
  %v1650 = vmul.f32 %v1634, 1.442695
  %v1651 = vpow.pop %v1650
  %v1652 = vmul.f32 %v1635, 1.442695
  %v1653 = vpow.pop %v1652
  %v1654 = vmul.f32 %v1636, 1.442695
  %v1655 = vpow.pop %v1654
  %v1656 = vmul.f32 %v1637, 1.442695
  %v1657 = vpow.pop %v1656
  %v1658 = vmul.f32 %v1638, 1.442695
  %v1659 = vpow.pop %v1658
  %v1660 = vmul.f32 %v1639, 1.442695
  %v1661 = vpow.pop %v1660
  %v1662 = vmul.f32 %v1640, 1.442695
  %v1663 = vpow.pop %v1662
  %v1664 = vmul.f32 %v1641, 1.442695
  %v1665 = vpow.pop %v1664
  %v1666 = vmul.f32 %v1642, 1.442695
  %v1667 = vpow.pop %v1666
  %v1668 = vmul.f32 %v1643, 1.442695
  %v1669 = vpow.pop %v1668
  %v1670 = vmul.f32 %v1644, 1.442695
  %v1671 = vpow.pop %v1670
  %v1672 = vmul.f32 %v1645, 1.442695
  %v1673 = vpow.pop %v1672
  %v1674 = vmul.f32 %v1646, 1.442695
  %v1675 = vpow.pop %v1674
  %v1676 = vmul.f32 %v1647, 1.442695
  %v1677 = vpow.pop %v1676
  %v1678 = vmul.f32 %v1648, 1.442695
  %v1679 = vpow.pop %v1678
  %v1680 = vmul.f32 %v1649, 1.442695
  %v1681 = vpow.pop %v1680
  %v1682 = vadd.f32 %v1651, 1.0
  %v1683 = vadd.f32 %v1653, 1.0
  %v1684 = vadd.f32 %v1655, 1.0
  %v1685 = vadd.f32 %v1657, 1.0
  %v1686 = vadd.f32 %v1659, 1.0
  %v1687 = vadd.f32 %v1661, 1.0
  %v1688 = vadd.f32 %v1663, 1.0
  %v1689 = vadd.f32 %v1665, 1.0
  %v1690 = vadd.f32 %v1667, 1.0
  %v1691 = vadd.f32 %v1669, 1.0
  %v1692 = vadd.f32 %v1671, 1.0
  %v1693 = vadd.f32 %v1673, 1.0
  %v1694 = vadd.f32 %v1675, 1.0
  %v1695 = vadd.f32 %v1677, 1.0
  %v1696 = vadd.f32 %v1679, 1.0
  %v1697 = vadd.f32 %v1681, 1.0
  %v1698 = vrcp.pop %v1682
  %v1699 = vmul.f32 1.0, %v1698
  %v1700 = vrcp.pop %v1683
  %v1701 = vmul.f32 1.0, %v1700
  %v1702 = vrcp.pop %v1684
  %v1703 = vmul.f32 1.0, %v1702
  %v1704 = vrcp.pop %v1685
  %v1705 = vmul.f32 1.0, %v1704
  %v1706 = vrcp.pop %v1686
  %v1707 = vmul.f32 1.0, %v1706
  %v1708 = vrcp.pop %v1687
  %v1709 = vmul.f32 1.0, %v1708
  %v1710 = vrcp.pop %v1688
  %v1711 = vmul.f32 1.0, %v1710
  %v1712 = vrcp.pop %v1689
  %v1713 = vmul.f32 1.0, %v1712
  %v1714 = vrcp.pop %v1690
  %v1715 = vmul.f32 1.0, %v1714
  %v1716 = vrcp.pop %v1691
  %v1717 = vmul.f32 1.0, %v1716
  %v1718 = vrcp.pop %v1692
  %v1719 = vmul.f32 1.0, %v1718
  %v1720 = vrcp.pop %v1693
  %v1721 = vmul.f32 1.0, %v1720
  %v1722 = vrcp.pop %v1694
  %v1723 = vmul.f32 1.0, %v1722
  %v1724 = vrcp.pop %v1695
  %v1725 = vmul.f32 1.0, %v1724
  %v1726 = vrcp.pop %v1696
  %v1727 = vmul.f32 1.0, %v1726
  %v1728 = vrcp.pop %v1697
  %v1729 = vmul.f32 1.0, %v1728
  %v1730 = vpack.c.bf16 %v1701, %v1699
  %v1731 = vpack.c.bf16 %v1705, %v1703
  %v1732 = vpack.c.bf16 %v1709, %v1707
  %v1733 = vpack.c.bf16 %v1713, %v1711
  %v1734 = vpack.c.bf16 %v1717, %v1715
  %v1735 = vpack.c.bf16 %v1721, %v1719
  %v1736 = vpack.c.bf16 %v1725, %v1723
  %v1737 = vpack.c.bf16 %v1729, %v1727
  %v1746 = vunpack.c.l.b16 %v155
  %v1747 = vunpack.c.h.b16 %v155
  %v1748 = vunpack.c.l.b16 %v156
  %v1749 = vunpack.c.h.b16 %v156
  %v1750 = vunpack.c.l.b16 %v157
  %v1751 = vunpack.c.h.b16 %v157
  %v1752 = vunpack.c.l.b16 %v158
  %v1753 = vunpack.c.h.b16 %v158
  %v1754 = vunpack.c.l.b16 %v159
  %v1755 = vunpack.c.h.b16 %v159
  %v1756 = vunpack.c.l.b16 %v160
  %v1757 = vunpack.c.h.b16 %v160
  %v1758 = vunpack.c.l.b16 %v161
  %v1759 = vunpack.c.h.b16 %v161
  %v1760 = vunpack.c.l.b16 %v162
  %v1761 = vunpack.c.h.b16 %v162
  %v1762 = vpack.c.b16 %v1748, %v1746
  %v1763 = vpack.c.b16 %v1749, %v1747
  %v1764 = vpack.c.b16 %v1752, %v1750
  %v1765 = vpack.c.b16 %v1753, %v1751
  %v1766 = vpack.c.b16 %v1756, %v1754
  %v1767 = vpack.c.b16 %v1757, %v1755
  %v1768 = vpack.c.b16 %v1760, %v1758
  %v1769 = vpack.c.b16 %v1761, %v1759
  %v1779 = vsel %vm797, %v1730, 0
  %v1782 = vsel %vm797, %v1731, 0
  %v1785 = vsel %vm797, %v1732, 0
  %v1788 = vsel %vm797, %v1733, 0
  %v1791 = vsel %vm797, %v1734, 0
  %v1794 = vsel %vm797, %v1735, 0
  %v1797 = vsel %vm797, %v1736, 0
  %v1800 = vsel %vm797, %v1737, 0
  %1802 = vmatprep.subr.bf16.mxu0 %v1763
  %1803 = vmatpush1.bf16.msra.mxu0 %v1762
  %1804 = vmatprep.subr.bf16.mxu0 %v1765
  %1805 = vmatpush1.bf16.msra.mxu0 %v1764
  %1806 = vmatprep.subr.bf16.mxu0 %v1767
  %1807 = vmatpush1.bf16.msra.mxu0 %v1766
  %1808 = vmatprep.subr.bf16.mxu0 %v1769
  %1809 = vmatpush1.bf16.msra.mxu0 %v1768
  %1810 = vmatprep.subr.bf16.mxu0 0
  %1811 = vmatpush1.bf16.msra.mxu0 0
  %1812 = vmatprep.subr.bf16.mxu0 0
  %1813 = vmatpush1.bf16.msra.mxu0 0
  %1814 = vmatprep.subr.bf16.mxu0 0
  %1815 = vmatpush1.bf16.msra.mxu0 0
  %1816 = vmatprep.subr.bf16.mxu0 0
  %1817 = vmatpush1.bf16.msra.mxu0 0
  %1818 = vmatprep.subr.bf16.mxu0 0
  %1819 = vmatpush1.bf16.msra.mxu0 0
  %1820 = vmatprep.subr.bf16.mxu0 0
  %1821 = vmatpush1.bf16.msra.mxu0 0
  %1822 = vmatprep.subr.bf16.mxu0 0
  %1823 = vmatpush1.bf16.msra.mxu0 0
  %1824 = vmatprep.subr.bf16.mxu0 0
  %1825 = vmatpush1.bf16.msra.mxu0 0
  %1826 = vmatprep.subr.bf16.mxu0 0
  %1827 = vmatpush1.bf16.msra.mxu0 0
  %1828 = vmatprep.subr.bf16.mxu0 0
  %1829 = vmatpush1.bf16.msra.mxu0 0
  %1830 = vmatprep.subr.bf16.mxu0 0
  %1831 = vmatpush1.bf16.msra.mxu0 0
  %1832 = vmatprep.subr.bf16.mxu0 0
  %1833 = vmatpush1.bf16.msra.mxu0 0
  %1834 = vmatprep.mubr.bf16.mxu0 0
  %1835 = vmatmul.mubr.bf16.gmra.mrb[0].mxu0 %v1779
  %v1836 = vpop.f32.mrb[0].mxu0
  %v1837 = vadd.f32 0.0, %v1836
  %v1838 = vpop.f32.mrb[0].mxu0
  %v1839 = vadd.f32 0.0, %v1838
  %v1840 = vpop.f32.mrb[0].mxu0
  %v1841 = vadd.f32 0.0, %v1840
  %v1842 = vpop.f32.mrb[0].mxu0
  %v1843 = vadd.f32 0.0, %v1842
  %1844 = vmatprep.mubr.bf16.mxu0 0
  %1845 = vmatmul.mubr.bf16.gmra.mrb[0].mxu0 %v1782
  %v1846 = vpop.f32.mrb[0].mxu0
  %v1847 = vadd.f32 0.0, %v1846
  %v1848 = vpop.f32.mrb[0].mxu0
  %v1849 = vadd.f32 0.0, %v1848
  %v1850 = vpop.f32.mrb[0].mxu0
  %v1851 = vadd.f32 0.0, %v1850
  %v1852 = vpop.f32.mrb[0].mxu0
  %v1853 = vadd.f32 0.0, %v1852
  %1854 = vmatprep.mubr.bf16.mxu0 0
  %1855 = vmatmul.mubr.bf16.gmra.mrb[0].mxu0 %v1785
  %v1856 = vpop.f32.mrb[0].mxu0
  %v1857 = vadd.f32 0.0, %v1856
  %v1858 = vpop.f32.mrb[0].mxu0
  %v1859 = vadd.f32 0.0, %v1858
  %v1860 = vpop.f32.mrb[0].mxu0
  %v1861 = vadd.f32 0.0, %v1860
  %v1862 = vpop.f32.mrb[0].mxu0
  %v1863 = vadd.f32 0.0, %v1862
  %1864 = vmatprep.mubr.bf16.mxu0 0
  %1865 = vmatmul.mubr.bf16.gmra.mrb[0].mxu0 %v1788
  %v1866 = vpop.f32.mrb[0].mxu0
  %v1867 = vadd.f32 0.0, %v1866
  %v1868 = vpop.f32.mrb[0].mxu0
  %v1869 = vadd.f32 0.0, %v1868
  %v1870 = vpop.f32.mrb[0].mxu0
  %v1871 = vadd.f32 0.0, %v1870
  %v1872 = vpop.f32.mrb[0].mxu0
  %v1873 = vadd.f32 0.0, %v1872
  %1874 = vmatprep.mubr.bf16.mxu0 0
  %1875 = vmatmul.mubr.bf16.gmra.mrb[0].mxu0 %v1791
  %v1876 = vpop.f32.mrb[0].mxu0
  %v1877 = vadd.f32 0.0, %v1876
  %v1878 = vpop.f32.mrb[0].mxu0
  %v1879 = vadd.f32 0.0, %v1878
  %v1880 = vpop.f32.mrb[0].mxu0
  %v1881 = vadd.f32 0.0, %v1880
  %v1882 = vpop.f32.mrb[0].mxu0
  %v1883 = vadd.f32 0.0, %v1882
  %1884 = vmatprep.mubr.bf16.mxu0 0
  %1885 = vmatmul.mubr.bf16.gmra.mrb[0].mxu0 %v1794
  %v1886 = vpop.f32.mrb[0].mxu0
  %v1887 = vadd.f32 0.0, %v1886
  %v1888 = vpop.f32.mrb[0].mxu0
  %v1889 = vadd.f32 0.0, %v1888
  %v1890 = vpop.f32.mrb[0].mxu0
  %v1891 = vadd.f32 0.0, %v1890
  %v1892 = vpop.f32.mrb[0].mxu0
  %v1893 = vadd.f32 0.0, %v1892
  %1894 = vmatprep.mubr.bf16.mxu0 0
  %1895 = vmatmul.mubr.bf16.gmra.mrb[0].mxu0 %v1797
  %v1896 = vpop.f32.mrb[0].mxu0
  %v1897 = vadd.f32 0.0, %v1896
  %v1898 = vpop.f32.mrb[0].mxu0
  %v1899 = vadd.f32 0.0, %v1898
  %v1900 = vpop.f32.mrb[0].mxu0
  %v1901 = vadd.f32 0.0, %v1900
  %v1902 = vpop.f32.mrb[0].mxu0
  %v1903 = vadd.f32 0.0, %v1902
  %1904 = vmatprep.mubr.bf16.mxu0 0
  %1905 = vmatmul.mubr.bf16.gmra.mrb[0].mxu0 %v1800
  %v1906 = vpop.f32.mrb[0].mxu0
  %v1907 = vadd.f32 0.0, %v1906
  %v1908 = vpop.f32.mrb[0].mxu0
  %v1909 = vadd.f32 0.0, %v1908
  %v1910 = vpop.f32.mrb[0].mxu0
  %v1911 = vadd.f32 0.0, %v1910
  %v1912 = vpop.f32.mrb[0].mxu0
  %v1913 = vadd.f32 0.0, %v1912
  %1914 = vdwg.mxu0
  %1916 = vset.pattern.permute.xlu0 0
  %1917 = vperm.xlu0 %1916, %v164
  %v1918 = vpop.permute.xlu0 %1917
  %1921 = vset.pattern.permute.xlu0 0
  %1922 = vperm.xlu0 %1921, %v165
  %v1923 = vpop.permute.xlu0 %1922
  %1926 = vset.pattern.permute.xlu0 0
  %1927 = vperm.xlu0 %1926, %v166
  %v1928 = vpop.permute.xlu0 %1927
  %1931 = vset.pattern.permute.xlu0 0
  %1932 = vperm.xlu0 %1931, %v167
  %v1933 = vpop.permute.xlu0 %1932
  %1936 = vset.pattern.permute.xlu0 0
  %1937 = vperm.xlu0 %1936, %v168
  %v1938 = vpop.permute.xlu0 %1937
  %1941 = vset.pattern.permute.xlu0 0
  %1942 = vperm.xlu0 %1941, %v169
  %v1943 = vpop.permute.xlu0 %1942
  %1946 = vset.pattern.permute.xlu0 0
  %1947 = vperm.xlu0 %1946, %v170
  %v1948 = vpop.permute.xlu0 %1947
  %1951 = vset.pattern.permute.xlu0 0
  %1952 = vperm.xlu0 %1951, %v171
  %v1953 = vpop.permute.xlu0 %1952
  %1956 = vset.pattern.permute.xlu0 0
  %1957 = vperm.xlu0 %1956, %v172
  %v1958 = vpop.permute.xlu0 %1957
  %1961 = vset.pattern.permute.xlu0 0
  %1962 = vperm.xlu0 %1961, %v173
  %v1963 = vpop.permute.xlu0 %1962
  %1966 = vset.pattern.permute.xlu0 0
  %1967 = vperm.xlu0 %1966, %v174
  %v1968 = vpop.permute.xlu0 %1967
  %1971 = vset.pattern.permute.xlu0 0
  %1972 = vperm.xlu0 %1971, %v175
  %v1973 = vpop.permute.xlu0 %1972
  %1976 = vset.pattern.permute.xlu0 0
  %1977 = vperm.xlu0 %1976, %v176
  %v1978 = vpop.permute.xlu0 %1977
  %1981 = vset.pattern.permute.xlu0 0
  %1982 = vperm.xlu0 %1981, %v177
  %v1983 = vpop.permute.xlu0 %1982
  %1986 = vset.pattern.permute.xlu0 0
  %1987 = vperm.xlu0 %1986, %v178
  %v1988 = vpop.permute.xlu0 %1987
  %1991 = vset.pattern.permute.xlu0 0
  %1992 = vperm.xlu0 %1991, %v179
  %v1993 = vpop.permute.xlu0 %1992
  %v1995 = vadd.f32 %v1267, %v1918
  %v1996 = vadd.f32 %v1269, %v1918
  %v1997 = vadd.f32 %v1271, %v1923
  %v1998 = vadd.f32 %v1273, %v1923
  %v1999 = vadd.f32 %v1277, %v1928
  %v2000 = vadd.f32 %v1279, %v1928
  %v2001 = vadd.f32 %v1281, %v1933
  %v2002 = vadd.f32 %v1283, %v1933
  %v2003 = vadd.f32 %v1287, %v1938
  %v2004 = vadd.f32 %v1289, %v1938
  %v2005 = vadd.f32 %v1291, %v1943
  %v2006 = vadd.f32 %v1293, %v1943
  %v2007 = vadd.f32 %v1297, %v1948
  %v2008 = vadd.f32 %v1299, %v1948
  %v2009 = vadd.f32 %v1301, %v1953
  %v2010 = vadd.f32 %v1303, %v1953
  %v2011 = vadd.f32 %v1307, %v1958
  %v2012 = vadd.f32 %v1309, %v1958
  %v2013 = vadd.f32 %v1311, %v1963
  %v2014 = vadd.f32 %v1313, %v1963
  %v2015 = vadd.f32 %v1317, %v1968
  %v2016 = vadd.f32 %v1319, %v1968
  %v2017 = vadd.f32 %v1321, %v1973
  %v2018 = vadd.f32 %v1323, %v1973
  %v2019 = vadd.f32 %v1327, %v1978
  %v2020 = vadd.f32 %v1329, %v1978
  %v2021 = vadd.f32 %v1331, %v1983
  %v2022 = vadd.f32 %v1333, %v1983
  %v2023 = vadd.f32 %v1337, %v1988
  %v2024 = vadd.f32 %v1339, %v1988
  %v2025 = vadd.f32 %v1341, %v1993
  %v2026 = vadd.f32 %v1343, %v1993
  %v2027 = vmax.f32 %v1995, 0.0
  %v2028 = vmax.f32 %v1996, 0.0
  %v2029 = vmax.f32 %v1997, 0.0
  %v2030 = vmax.f32 %v1998, 0.0
  %v2031 = vmax.f32 %v1999, 0.0
  %v2032 = vmax.f32 %v2000, 0.0
  %v2033 = vmax.f32 %v2001, 0.0
  %v2034 = vmax.f32 %v2002, 0.0
  %v2035 = vmax.f32 %v2003, 0.0
  %v2036 = vmax.f32 %v2004, 0.0
  %v2037 = vmax.f32 %v2005, 0.0
  %v2038 = vmax.f32 %v2006, 0.0
  %v2039 = vmax.f32 %v2007, 0.0
  %v2040 = vmax.f32 %v2008, 0.0
  %v2041 = vmax.f32 %v2009, 0.0
  %v2042 = vmax.f32 %v2010, 0.0
  %v2043 = vmax.f32 %v2011, 0.0
  %v2044 = vmax.f32 %v2012, 0.0
  %v2045 = vmax.f32 %v2013, 0.0
  %v2046 = vmax.f32 %v2014, 0.0
  %v2047 = vmax.f32 %v2015, 0.0
  %v2048 = vmax.f32 %v2016, 0.0
  %v2049 = vmax.f32 %v2017, 0.0
  %v2050 = vmax.f32 %v2018, 0.0
  %v2051 = vmax.f32 %v2019, 0.0
  %v2052 = vmax.f32 %v2020, 0.0
  %v2053 = vmax.f32 %v2021, 0.0
  %v2054 = vmax.f32 %v2022, 0.0
  %v2055 = vmax.f32 %v2023, 0.0
  %v2056 = vmax.f32 %v2024, 0.0
  %v2057 = vmax.f32 %v2025, 0.0
  %v2058 = vmax.f32 %v2026, 0.0
  %v2059 = vmul.f32 %v2027, %v1837
  %v2060 = vmul.f32 %v2028, %v1839
  %v2061 = vmul.f32 %v2029, %v1841
  %v2062 = vmul.f32 %v2030, %v1843
  %v2063 = vmul.f32 %v2031, %v1847
  %v2064 = vmul.f32 %v2032, %v1849
  %v2065 = vmul.f32 %v2033, %v1851
  %v2066 = vmul.f32 %v2034, %v1853
  %v2067 = vmul.f32 %v2035, %v1857
  %v2068 = vmul.f32 %v2036, %v1859
  %v2069 = vmul.f32 %v2037, %v1861
  %v2070 = vmul.f32 %v2038, %v1863
  %v2071 = vmul.f32 %v2039, %v1867
  %v2072 = vmul.f32 %v2040, %v1869
  %v2073 = vmul.f32 %v2041, %v1871
  %v2074 = vmul.f32 %v2042, %v1873
  %v2075 = vmul.f32 %v2043, %v1877
  %v2076 = vmul.f32 %v2044, %v1879
  %v2077 = vmul.f32 %v2045, %v1881
  %v2078 = vmul.f32 %v2046, %v1883
  %v2079 = vmul.f32 %v2047, %v1887
  %v2080 = vmul.f32 %v2048, %v1889
  %v2081 = vmul.f32 %v2049, %v1891
  %v2082 = vmul.f32 %v2050, %v1893
  %v2083 = vmul.f32 %v2051, %v1897
  %v2084 = vmul.f32 %v2052, %v1899
  %v2085 = vmul.f32 %v2053, %v1901
  %v2086 = vmul.f32 %v2054, %v1903
  %v2087 = vmul.f32 %v2055, %v1907
  %v2088 = vmul.f32 %v2056, %v1909
  %v2089 = vmul.f32 %v2057, %v1911
  %v2090 = vmul.f32 %v2058, %v1913
  %v2091 = vpack.c.bf16 %v2061, %v2059
  %v2092 = vpack.c.bf16 %v2062, %v2060
  %v2093 = vpack.c.bf16 %v2065, %v2063
  %v2094 = vpack.c.bf16 %v2066, %v2064
  %v2095 = vpack.c.bf16 %v2069, %v2067
  %v2096 = vpack.c.bf16 %v2070, %v2068
  %v2097 = vpack.c.bf16 %v2073, %v2071
  %v2098 = vpack.c.bf16 %v2074, %v2072
  %v2099 = vpack.c.bf16 %v2077, %v2075
  %v2100 = vpack.c.bf16 %v2078, %v2076
  %v2101 = vpack.c.bf16 %v2081, %v2079
  %v2102 = vpack.c.bf16 %v2082, %v2080
  %v2103 = vpack.c.bf16 %v2085, %v2083
  %v2104 = vpack.c.bf16 %v2086, %v2084
  %v2105 = vpack.c.bf16 %v2089, %v2087
  %v2106 = vpack.c.bf16 %v2090, %v2088
  %2108 = vset.pattern.permute.xlu0 0
  %2109 = vperm.xlu0 %2108, %v180
  %v2110 = vpop.permute.xlu0 %2109
  %2112 = vmatprep.subr.bf16.mxu0 %v2092
  %2113 = vmatpush1.bf16.msra.mxu0 %v2091
  %2114 = vmatprep.subr.bf16.mxu0 %v2094
  %2115 = vmatpush1.bf16.msra.mxu0 %v2093
  %2116 = vmatprep.subr.bf16.mxu0 %v2096
  %2117 = vmatpush1.bf16.msra.mxu0 %v2095
  %2118 = vmatprep.subr.bf16.mxu0 %v2098
  %2119 = vmatpush1.bf16.msra.mxu0 %v2097
  %2120 = vmatprep.subr.bf16.mxu0 %v2100
  %2121 = vmatpush1.bf16.msra.mxu0 %v2099
  %2122 = vmatprep.subr.bf16.mxu0 %v2102
  %2123 = vmatpush1.bf16.msra.mxu0 %v2101
  %2124 = vmatprep.subr.bf16.mxu0 %v2104
  %2125 = vmatpush1.bf16.msra.mxu0 %v2103
  %2126 = vmatprep.subr.bf16.mxu0 %v2106
  %2127 = vmatpush1.bf16.msra.mxu0 %v2105
  %2128 = vmatprep.subr.bf16.mxu0 0
  %2129 = vmatpush1.bf16.msra.mxu0 0
  %2130 = vmatprep.subr.bf16.mxu0 0
  %2131 = vmatpush1.bf16.msra.mxu0 0
  %2132 = vmatprep.subr.bf16.mxu0 0
  %2133 = vmatpush1.bf16.msra.mxu0 0
  %2134 = vmatprep.subr.bf16.mxu0 0
  %2135 = vmatpush1.bf16.msra.mxu0 0
  %2136 = vmatprep.subr.bf16.mxu0 0
  %2137 = vmatpush1.bf16.msra.mxu0 0
  %2138 = vmatprep.subr.bf16.mxu0 0
  %2139 = vmatpush1.bf16.msra.mxu0 0
  %2140 = vmatprep.subr.bf16.mxu0 0
  %2141 = vmatpush1.bf16.msra.mxu0 0
  %2142 = vmatprep.subr.bf16.mxu0 0
  %2143 = vmatpush1.bf16.msra.mxu0 0
  %2144 = vmatprep.mubr.bf16.mxu0 0
  %2145 = vmatmul.mubr.bf16.gmra.mrb[0].mxu0 %v163
  %v2146 = vpop.f32.mrb[0].mxu0
  %v2147 = vadd.f32 %v2110, %v2146
  %v2148 = vpop.f32.mrb[0].mxu0
  %v2149 = vadd.f32 %v2110, %v2148
  %v2150 = vpop.f32.mrb[0].mxu0
  %v2151 = vpop.f32.mrb[0].mxu0
  %2152 = vdwg.mxu0
  %2153 = vst [vmem:[%s7] sm:$0xff] %v2147
  %2154 = vst [vmem:[%s7 + $0x8] sm:$0xff] %v2149
  %s2155 = scalar_lea.vmem %s0, 1152
  %v2156 = vld [vmem:[%s2155] sm:$0xff]
  %v2157 = vld [vmem:[%s2155 + $0x8] sm:$0xff]
  %v2158 = vld [vmem:[%s2155 + $0x10] sm:$0xff]
  %v2159 = vld [vmem:[%s2155 + $0x18] sm:$0xff]
  %v2160 = vld [vmem:[%s2155 + $0x20] sm:$0xff]
  %v2161 = vld [vmem:[%s2155 + $0x28] sm:$0xff]
  %v2162 = vld [vmem:[%s2155 + $0x30] sm:$0xff]
  %v2163 = vld [vmem:[%s2155 + $0x38] sm:$0xff]
  %v2164 = vld [vmem:[%s2155 + $0x40] sm:$0xff]
  %v2165 = vld [vmem:[%s2155 + $0x48] sm:$0xff]
  %v2166 = vld [vmem:[%s2155 + $0x50] sm:$0xff]
  %v2167 = vld [vmem:[%s2155 + $0x58] sm:$0xff]
  %v2168 = vld [vmem:[%s2155 + $0x60] sm:$0xff]
  %v2169 = vld [vmem:[%s2155 + $0x68] sm:$0xff]
  %v2170 = vld [vmem:[%s2155 + $0x70] sm:$0xff]
  %v2171 = vld [vmem:[%s2155 + $0x78] sm:$0xff]
  %v2172 = vld [vmem:[%s2155 + $0x80] sm:$0xff]
  %v2173 = vld [vmem:[%s2155 + $0x88] sm:$0xff]
  %v2174 = vld [vmem:[%s2155 + $0x90] sm:$0xff]
  %v2175 = vld [vmem:[%s2155 + $0x98] sm:$0xff]
  %v2176 = vld [vmem:[%s2155 + $0xa0] sm:$0xff]
  %v2177 = vld [vmem:[%s2155 + $0xa8] sm:$0xff]
  %v2178 = vld [vmem:[%s2155 + $0xb0] sm:$0xff]
  %v2179 = vld [vmem:[%s2155 + $0xb8] sm:$0xff]
  %v2180 = vld [vmem:[%s2155 + $0xc0] sm:$0xff]
  %v2181 = vld [vmem:[%s2155 + $0xc8] sm:$0xff]
  %v2182 = vld [vmem:[%s2155 + $0xd0] sm:$0xff]
  %v2183 = vld [vmem:[%s2155 + $0xd8] sm:$0xff]
  %v2184 = vld [vmem:[%s2155 + $0xe0] sm:$0xff]
  %v2185 = vld [vmem:[%s2155 + $0xe8] sm:$0xff]
  %v2186 = vld [vmem:[%s2155 + $0xf0] sm:$0xff]
  %v2187 = vld [vmem:[%s2155 + $0xf8] sm:$0xff]
  %v2188 = vld [vmem:[%s2155 + $0x100] sm:$0xff]
  %v2189 = vld [vmem:[%s2155 + $0x108] sm:$0xff]
  %v2190 = vld [vmem:[%s2155 + $0x110] sm:$0xff]
  %v2191 = vld [vmem:[%s2155 + $0x118] sm:$0xff]
  %v2192 = vld [vmem:[%s2155 + $0x120] sm:$0xff]
  %v2193 = vld [vmem:[%s2155 + $0x128] sm:$0xff]
  %v2194 = vld [vmem:[%s2155 + $0x130] sm:$0xff]
  %v2195 = vld [vmem:[%s2155 + $0x138] sm:$0xff]
  %v2196 = vld [vmem:[%s2155 + $0x140] sm:$0xff]
  %v2197 = vld [vmem:[%s2155 + $0x148] sm:$0xff]
  %v2198 = vld [vmem:[%s2155 + $0x150] sm:$0xff]
  %v2199 = vld [vmem:[%s2155 + $0x158] sm:$0xff]
  %v2200 = vld [vmem:[%s2155 + $0x160] sm:$0xff]
  %v2201 = vld [vmem:[%s2155 + $0x168] sm:$0xff]
  %v2202 = vld [vmem:[%s2155 + $0x170] sm:$0xff]
  %v2203 = vld [vmem:[%s2155 + $0x178] sm:$0xff]
  %v2204 = vld [vmem:[%s2155 + $0x180] sm:$0xff]
  %v2205 = vld [vmem:[%s2155 + $0x188] sm:$0xff]
  %v2206 = vld [vmem:[%s2155 + $0x190] sm:$0xff]
  %v2207 = vld [vmem:[%s2155 + $0x198] sm:$0xff]
  %v2208 = vld [vmem:[%s2155 + $0x1a0] sm:$0xff]
  %v2209 = vld [vmem:[%s2155 + $0x1a8] sm:$0xff]
  %v2210 = vld [vmem:[%s2155 + $0x1b0] sm:$0xff]
  %v2211 = vld [vmem:[%s2155 + $0x1b8] sm:$0xff]
  %v2212 = vld [vmem:[%s2155 + $0x1c0] sm:$0xff]
  %v2213 = vld [vmem:[%s2155 + $0x1c8] sm:$0xff]
  %v2214 = vld [vmem:[%s2155 + $0x1d0] sm:$0xff]
  %v2215 = vld [vmem:[%s2155 + $0x1d8] sm:$0xff]
  %v2216 = vld [vmem:[%s2155 + $0x1e0] sm:$0xff]
  %v2217 = vld [vmem:[%s2155 + $0x1e8] sm:$0xff]
  %v2218 = vld [vmem:[%s2155 + $0x1f0] sm:$0xff]
  %v2219 = vld [vmem:[%s2155 + $0x1f8] sm:$0xff]
  %v2220 = vld [vmem:[%s2155 + $0x200] sm:$0xff]
  %v2221 = vld [vmem:[%s2155 + $0x208] sm:$0xff]
  %v2222 = vld [vmem:[%s2155 + $0x210] sm:$0xff]
  %v2223 = vld [vmem:[%s2155 + $0x218] sm:$0xff]
  %v2224 = vld [vmem:[%s2155 + $0x220] sm:$0xff]
  %v2225 = vld [vmem:[%s2155 + $0x228] sm:$0xff]
  %v2226 = vld [vmem:[%s2155 + $0x230] sm:$0xff]
  %v2227 = vld [vmem:[%s2155 + $0x238] sm:$0xff]
  %v2228 = vld [vmem:[%s2155 + $0x240] sm:$0xff]
  %v2229 = vld [vmem:[%s2155 + $0x248] sm:$0xff]
  %v2230 = vld [vmem:[%s2155 + $0x250] sm:$0xff]
  %v2231 = vld [vmem:[%s2155 + $0x258] sm:$0xff]
  %v2232 = vld [vmem:[%s2155 + $0x260] sm:$0xff]
  %v2233 = vld [vmem:[%s2155 + $0x268] sm:$0xff]
  %v2234 = vld [vmem:[%s2155 + $0x270] sm:$0xff]
  %v2235 = vld [vmem:[%s2155 + $0x278] sm:$0xff]
  %v2236 = vld [vmem:[%s2155 + $0x280] sm:$0xff]
  %v2237 = vld [vmem:[%s2155 + $0x288] sm:$0xff]
  %v2238 = vld [vmem:[%s2155 + $0x290] sm:$0xff]
  %v2239 = vld [vmem:[%s2155 + $0x298] sm:$0xff]
  %v2240 = vld [vmem:[%s2155 + $0x2a0] sm:$0xff]
  %v2241 = vld [vmem:[%s2155 + $0x2a8] sm:$0xff]
  %v2242 = vld [vmem:[%s2155 + $0x2b0] sm:$0xff]
  %v2243 = vld [vmem:[%s2155 + $0x2b8] sm:$0xff]
  %v2244 = vld [vmem:[%s2155 + $0x2c0] sm:$0xff]
  %v2245 = vld [vmem:[%s2155 + $0x2c8] sm:$0xff]
  %v2246 = vld [vmem:[%s2155 + $0x2d0] sm:$0xff]
  %v2247 = vld [vmem:[%s2155 + $0x2d8] sm:$0xff]
  %v2248 = vld [vmem:[%s2155 + $0x2e0] sm:$0xff]
  %v2249 = vld [vmem:[%s2155 + $0x2e8] sm:$0xff]
  %v2250 = vld [vmem:[%s2155 + $0x2f0] sm:$0xff]
  %v2251 = vld [vmem:[%s2155 + $0x2f8] sm:$0xff]
  %v2252 = vld [vmem:[%s2155 + $0x300] sm:$0xff]
  %v2253 = vld [vmem:[%s2155 + $0x308] sm:$0xff]
  %v2254 = vld [vmem:[%s2155 + $0x310] sm:$0xff]
  %v2255 = vld [vmem:[%s2155 + $0x318] sm:$0xff]
  %v2256 = vld [vmem:[%s2155 + $0x320] sm:$0xff]
  %v2257 = vld [vmem:[%s2155 + $0x328] sm:$0xff]
  %v2258 = vld [vmem:[%s2155 + $0x330] sm:$0xff]
  %v2259 = vld [vmem:[%s2155 + $0x338] sm:$0xff]
  %v2260 = vld [vmem:[%s2155 + $0x340] sm:$0xff]
  %v2261 = vld [vmem:[%s2155 + $0x348] sm:$0xff]
  %v2262 = vld [vmem:[%s2155 + $0x350] sm:$0xff]
  %v2263 = vld [vmem:[%s2155 + $0x358] sm:$0xff]
  %v2264 = vld [vmem:[%s2155 + $0x360] sm:$0xff]
  %v2265 = vld [vmem:[%s2155 + $0x368] sm:$0xff]
  %v2266 = vld [vmem:[%s2155 + $0x370] sm:$0xff]
  %v2267 = vld [vmem:[%s2155 + $0x378] sm:$0xff]
  %v2268 = vld [vmem:[%s2155 + $0x380] sm:$0xff]
  %v2269 = vld [vmem:[%s2155 + $0x388] sm:$0xff]
  %v2270 = vld [vmem:[%s2155 + $0x390] sm:$0xff]
  %v2271 = vld [vmem:[%s2155 + $0x398] sm:$0xff]
  %v2272 = vld [vmem:[%s2155 + $0x3a0] sm:$0xff]
  %v2273 = vld [vmem:[%s2155 + $0x3a8] sm:$0xff]
  %v2274 = vld [vmem:[%s2155 + $0x3b0] sm:$0xff]
  %v2275 = vld [vmem:[%s2155 + $0x3b8] sm:$0xff]
  %v2276 = vld [vmem:[%s2155 + $0x3c0] sm:$0xff]
  %v2277 = vld [vmem:[%s2155 + $0x3c8] sm:$0xff]
  %v2278 = vld [vmem:[%s2155 + $0x3d0] sm:$0xff]
  %v2279 = vld [vmem:[%s2155 + $0x3d8] sm:$0xff]
  %v2280 = vld [vmem:[%s2155 + $0x3e0] sm:$0xff]
  %v2281 = vld [vmem:[%s2155 + $0x3e8] sm:$0xff]
  %v2282 = vld [vmem:[%s2155 + $0x3f0] sm:$0xff]
  %v2283 = vld [vmem:[%s2155 + $0x3f8] sm:$0xff]
  %v2284 = vld [vmem:[%s2155 + $0x400] sm:$0xff]
  %v2285 = vld [vmem:[%s2155 + $0x408] sm:$0xff]
  %v2286 = vld [vmem:[%s2155 + $0x410] sm:$0xff]
  %v2287 = vld [vmem:[%s2155 + $0x418] sm:$0xff]
  %v2288 = vld [vmem:[%s2155 + $0x420] sm:$0xff]
  %v2289 = vld [vmem:[%s2155 + $0x428] sm:$0xff]
  %v2290 = vld [vmem:[%s2155 + $0x430] sm:$0xff]
  %v2291 = vld [vmem:[%s2155 + $0x438] sm:$0xff]
  %v2292 = vld [vmem:[%s2155 + $0x440] sm:$0xff]
  %v2293 = vld [vmem:[%s2155 + $0x448] sm:$0xff]
  %v2294 = vld [vmem:[%s2155 + $0x450] sm:$0xff]
  %v2295 = vld [vmem:[%s2155 + $0x458] sm:$0xff]
  %v2296 = vld [vmem:[%s2155 + $0x460] sm:$0xff]
  %v2297 = vld [vmem:[%s2155 + $0x468] sm:$0xff]
  %v2298 = vld [vmem:[%s2155 + $0x470] sm:$0xff]
  %v2299 = vld [vmem:[%s2155 + $0x478] sm:$0xff]
  %v2300 = vpack.c.bf16 %v2158, %v2156
  %v2301 = vpack.c.bf16 %v2159, %v2157
  %v2302 = vpack.c.bf16 %v2162, %v2160
  %v2303 = vpack.c.bf16 %v2163, %v2161
  %v2304 = vpack.c.bf16 %v2166, %v2164
  %v2305 = vpack.c.bf16 %v2167, %v2165
  %v2306 = vpack.c.bf16 %v2170, %v2168
  %v2307 = vpack.c.bf16 %v2171, %v2169
  %v2308 = vpack.c.bf16 %v2174, %v2172
  %v2309 = vpack.c.bf16 %v2175, %v2173
  %v2310 = vpack.c.bf16 %v2178, %v2176
  %v2311 = vpack.c.bf16 %v2179, %v2177
  %v2312 = vpack.c.bf16 %v2182, %v2180
  %v2313 = vpack.c.bf16 %v2183, %v2181
  %v2314 = vpack.c.bf16 %v2186, %v2184
  %v2315 = vpack.c.bf16 %v2187, %v2185
  %v2316 = vpack.c.bf16 %v2190, %v2188
  %v2317 = vpack.c.bf16 %v2191, %v2189
  %v2318 = vpack.c.bf16 %v2194, %v2192
  %v2319 = vpack.c.bf16 %v2195, %v2193
  %v2320 = vpack.c.bf16 %v2198, %v2196
  %v2321 = vpack.c.bf16 %v2199, %v2197
  %v2322 = vpack.c.bf16 %v2202, %v2200
  %v2323 = vpack.c.bf16 %v2203, %v2201
  %v2324 = vpack.c.bf16 %v2206, %v2204
  %v2325 = vpack.c.bf16 %v2207, %v2205
  %v2326 = vpack.c.bf16 %v2210, %v2208
  %v2327 = vpack.c.bf16 %v2211, %v2209
  %v2328 = vpack.c.bf16 %v2214, %v2212
  %v2329 = vpack.c.bf16 %v2215, %v2213
  %v2330 = vpack.c.bf16 %v2218, %v2216
  %v2331 = vpack.c.bf16 %v2219, %v2217
  %v2332 = vpack.c.bf16 %v2222, %v2220
  %v2333 = vpack.c.bf16 %v2223, %v2221
  %v2334 = vpack.c.bf16 %v2226, %v2224
  %v2335 = vpack.c.bf16 %v2227, %v2225
  %v2336 = vpack.c.bf16 %v2230, %v2228
  %v2337 = vpack.c.bf16 %v2231, %v2229
  %v2338 = vpack.c.bf16 %v2234, %v2232
  %v2339 = vpack.c.bf16 %v2235, %v2233
  %v2340 = vpack.c.bf16 %v2238, %v2236
  %v2341 = vpack.c.bf16 %v2239, %v2237
  %v2342 = vpack.c.bf16 %v2242, %v2240
  %v2343 = vpack.c.bf16 %v2243, %v2241
  %v2344 = vpack.c.bf16 %v2246, %v2244
  %v2345 = vpack.c.bf16 %v2247, %v2245
  %v2346 = vpack.c.bf16 %v2250, %v2248
  %v2347 = vpack.c.bf16 %v2251, %v2249
  %v2348 = vpack.c.bf16 %v2254, %v2252
  %v2349 = vpack.c.bf16 %v2255, %v2253
  %v2350 = vpack.c.bf16 %v2258, %v2256
  %v2351 = vpack.c.bf16 %v2259, %v2257
  %v2352 = vpack.c.bf16 %v2262, %v2260
  %v2353 = vpack.c.bf16 %v2263, %v2261
  %v2354 = vpack.c.bf16 %v2266, %v2264
  %v2355 = vpack.c.bf16 %v2267, %v2265
  %v2356 = vpack.c.bf16 %v2270, %v2268
  %v2357 = vpack.c.bf16 %v2271, %v2269
  %v2358 = vpack.c.bf16 %v2274, %v2272
  %v2359 = vpack.c.bf16 %v2275, %v2273
  %v2360 = vpack.c.bf16 %v2278, %v2276
  %v2361 = vpack.c.bf16 %v2279, %v2277
  %v2362 = vpack.c.bf16 %v2282, %v2280
  %v2363 = vpack.c.bf16 %v2283, %v2281
  %v2364 = vpack.c.bf16 %v2286, %v2284
  %v2365 = vpack.c.bf16 %v2287, %v2285
  %v2366 = vpack.c.bf16 %v2290, %v2288
  %v2367 = vpack.c.bf16 %v2291, %v2289
  %v2368 = vpack.c.bf16 %v2294, %v2292
  %v2369 = vpack.c.bf16 %v2295, %v2293
  %v2370 = vpack.c.bf16 %v2298, %v2296
  %v2371 = vpack.c.bf16 %v2299, %v2297
  %2372 = vmatprep.subr.bf16.mxu0 %v2301
  %2373 = vmatpush1.bf16.msra.mxu0 %v2300
  %2374 = vmatprep.subr.bf16.mxu0 %v2303
  %2375 = vmatpush1.bf16.msra.mxu0 %v2302
  %2376 = vmatprep.subr.bf16.mxu0 %v2305
  %2377 = vmatpush1.bf16.msra.mxu0 %v2304
  %2378 = vmatprep.subr.bf16.mxu0 %v2307
  %2379 = vmatpush1.bf16.msra.mxu0 %v2306
  %2380 = vmatprep.subr.bf16.mxu0 %v2309
  %2381 = vmatpush1.bf16.msra.mxu0 %v2308
  %2382 = vmatprep.subr.bf16.mxu0 %v2311
  %2383 = vmatpush1.bf16.msra.mxu0 %v2310
  %2384 = vmatprep.subr.bf16.mxu0 %v2313
  %2385 = vmatpush1.bf16.msra.mxu0 %v2312
  %2386 = vmatprep.subr.bf16.mxu0 %v2315
  %2387 = vmatpush1.bf16.msra.mxu0 %v2314
  %2388 = vmatprep.subr.bf16.mxu0 %v2317
  %2389 = vmatpush1.bf16.msra.mxu0 %v2316
  %2390 = vmatprep.subr.bf16.mxu0 %v2319
  %2391 = vmatpush1.bf16.msra.mxu0 %v2318
  %2392 = vmatprep.subr.bf16.mxu0 %v2321
  %2393 = vmatpush1.bf16.msra.mxu0 %v2320
  %2394 = vmatprep.subr.bf16.mxu0 %v2323
  %2395 = vmatpush1.bf16.msra.mxu0 %v2322
  %2396 = vmatprep.subr.bf16.mxu0 %v2325
  %2397 = vmatpush1.bf16.msra.mxu0 %v2324
  %2398 = vmatprep.subr.bf16.mxu0 %v2327
  %2399 = vmatpush1.bf16.msra.mxu0 %v2326
  %2400 = vmatprep.subr.bf16.mxu0 %v2329
  %2401 = vmatpush1.bf16.msra.mxu0 %v2328
  %2402 = vmatprep.subr.bf16.mxu0 %v2331
  %2403 = vmatpush1.bf16.msra.mxu0 %v2330
  %2404 = vmatprep.mubr.bf16.mxu0 %v654
  %2405 = vmatmul.mubr.bf16.gmra.mrb[0].mxu0 %v653
  %v2406 = vpop.f32.mrb[0].mxu0
  %v2407 = vadd.f32 0.0, %v2406
  %v2408 = vpop.f32.mrb[0].mxu0
  %v2409 = vadd.f32 0.0, %v2408
  %v2410 = vpop.f32.mrb[0].mxu0
  %v2411 = vadd.f32 0.0, %v2410
  %v2412 = vpop.f32.mrb[0].mxu0
  %v2413 = vadd.f32 0.0, %v2412
  %2414 = vmatprep.mubr.bf16.mxu0 %v659
  %2415 = vmatmul.mubr.bf16.gmra.mrb[0].mxu0 %v658
  %v2416 = vpop.f32.mrb[0].mxu0
  %v2417 = vadd.f32 0.0, %v2416
  %v2418 = vpop.f32.mrb[0].mxu0
  %v2419 = vadd.f32 0.0, %v2418
  %v2420 = vpop.f32.mrb[0].mxu0
  %v2421 = vadd.f32 0.0, %v2420
  %v2422 = vpop.f32.mrb[0].mxu0
  %v2423 = vadd.f32 0.0, %v2422
  %2424 = vmatprep.mubr.bf16.mxu0 %v664
  %2425 = vmatmul.mubr.bf16.gmra.mrb[0].mxu0 %v663
  %v2426 = vpop.f32.mrb[0].mxu0
  %v2427 = vadd.f32 0.0, %v2426
  %v2428 = vpop.f32.mrb[0].mxu0
  %v2429 = vadd.f32 0.0, %v2428
  %v2430 = vpop.f32.mrb[0].mxu0
  %v2431 = vadd.f32 0.0, %v2430
  %v2432 = vpop.f32.mrb[0].mxu0
  %v2433 = vadd.f32 0.0, %v2432
  %2434 = vmatprep.mubr.bf16.mxu0 %v669
  %2435 = vmatmul.mubr.bf16.gmra.mrb[0].mxu0 %v668
  %v2436 = vpop.f32.mrb[0].mxu0
  %v2437 = vadd.f32 0.0, %v2436
  %v2438 = vpop.f32.mrb[0].mxu0
  %v2439 = vadd.f32 0.0, %v2438
  %v2440 = vpop.f32.mrb[0].mxu0
  %v2441 = vadd.f32 0.0, %v2440
  %v2442 = vpop.f32.mrb[0].mxu0
  %v2443 = vadd.f32 0.0, %v2442
  %2444 = vmatprep.mubr.bf16.mxu0 %v674
  %2445 = vmatmul.mubr.bf16.gmra.mrb[0].mxu0 %v673
  %v2446 = vpop.f32.mrb[0].mxu0
  %v2447 = vadd.f32 0.0, %v2446
  %v2448 = vpop.f32.mrb[0].mxu0
  %v2449 = vadd.f32 0.0, %v2448
  %v2450 = vpop.f32.mrb[0].mxu0
  %v2451 = vadd.f32 0.0, %v2450
  %v2452 = vpop.f32.mrb[0].mxu0
  %v2453 = vadd.f32 0.0, %v2452
  %2454 = vmatprep.mubr.bf16.mxu0 %v679
  %2455 = vmatmul.mubr.bf16.gmra.mrb[0].mxu0 %v678
  %v2456 = vpop.f32.mrb[0].mxu0
  %v2457 = vadd.f32 0.0, %v2456
  %v2458 = vpop.f32.mrb[0].mxu0
  %v2459 = vadd.f32 0.0, %v2458
  %v2460 = vpop.f32.mrb[0].mxu0
  %v2461 = vadd.f32 0.0, %v2460
  %v2462 = vpop.f32.mrb[0].mxu0
  %v2463 = vadd.f32 0.0, %v2462
  %2464 = vmatprep.mubr.bf16.mxu0 %v684
  %2465 = vmatmul.mubr.bf16.gmra.mrb[0].mxu0 %v683
  %v2466 = vpop.f32.mrb[0].mxu0
  %v2467 = vadd.f32 0.0, %v2466
  %v2468 = vpop.f32.mrb[0].mxu0
  %v2469 = vadd.f32 0.0, %v2468
  %v2470 = vpop.f32.mrb[0].mxu0
  %v2471 = vadd.f32 0.0, %v2470
  %v2472 = vpop.f32.mrb[0].mxu0
  %v2473 = vadd.f32 0.0, %v2472
  %2474 = vmatprep.mubr.bf16.mxu0 %v689
  %2475 = vmatmul.mubr.bf16.gmra.mrb[0].mxu0 %v688
  %v2476 = vpop.f32.mrb[0].mxu0
  %v2477 = vadd.f32 0.0, %v2476
  %v2478 = vpop.f32.mrb[0].mxu0
  %v2479 = vadd.f32 0.0, %v2478
  %v2480 = vpop.f32.mrb[0].mxu0
  %v2481 = vadd.f32 0.0, %v2480
  %v2482 = vpop.f32.mrb[0].mxu0
  %v2483 = vadd.f32 0.0, %v2482
  %2484 = vmatprep.mubr.bf16.mxu0 %v694
  %2485 = vmatmul.mubr.bf16.gmra.mrb[0].mxu0 %v693
  %v2486 = vpop.f32.mrb[0].mxu0
  %v2487 = vadd.f32 0.0, %v2486
  %v2488 = vpop.f32.mrb[0].mxu0
  %v2489 = vadd.f32 0.0, %v2488
  %v2490 = vpop.f32.mrb[0].mxu0
  %v2491 = vadd.f32 0.0, %v2490
  %v2492 = vpop.f32.mrb[0].mxu0
  %v2493 = vadd.f32 0.0, %v2492
  %2494 = vmatprep.mubr.bf16.mxu0 %v699
  %2495 = vmatmul.mubr.bf16.gmra.mrb[0].mxu0 %v698
  %v2496 = vpop.f32.mrb[0].mxu0
  %v2497 = vadd.f32 0.0, %v2496
  %v2498 = vpop.f32.mrb[0].mxu0
  %v2499 = vadd.f32 0.0, %v2498
  %v2500 = vpop.f32.mrb[0].mxu0
  %v2501 = vadd.f32 0.0, %v2500
  %v2502 = vpop.f32.mrb[0].mxu0
  %v2503 = vadd.f32 0.0, %v2502
  %2504 = vmatprep.mubr.bf16.mxu0 %v704
  %2505 = vmatmul.mubr.bf16.gmra.mrb[0].mxu0 %v703
  %v2506 = vpop.f32.mrb[0].mxu0
  %v2507 = vadd.f32 0.0, %v2506
  %v2508 = vpop.f32.mrb[0].mxu0
  %v2509 = vadd.f32 0.0, %v2508
  %v2510 = vpop.f32.mrb[0].mxu0
  %v2511 = vadd.f32 0.0, %v2510
  %v2512 = vpop.f32.mrb[0].mxu0
  %v2513 = vadd.f32 0.0, %v2512
  %2514 = vmatprep.mubr.bf16.mxu0 %v709
  %2515 = vmatmul.mubr.bf16.gmra.mrb[0].mxu0 %v708
  %v2516 = vpop.f32.mrb[0].mxu0
  %v2517 = vadd.f32 0.0, %v2516
  %v2518 = vpop.f32.mrb[0].mxu0
  %v2519 = vadd.f32 0.0, %v2518
  %v2520 = vpop.f32.mrb[0].mxu0
  %v2521 = vadd.f32 0.0, %v2520
  %v2522 = vpop.f32.mrb[0].mxu0
  %v2523 = vadd.f32 0.0, %v2522
  %2524 = vmatprep.mubr.bf16.mxu0 %v714
  %2525 = vmatmul.mubr.bf16.gmra.mrb[0].mxu0 %v713
  %v2526 = vpop.f32.mrb[0].mxu0
  %v2527 = vadd.f32 0.0, %v2526
  %v2528 = vpop.f32.mrb[0].mxu0
  %v2529 = vadd.f32 0.0, %v2528
  %v2530 = vpop.f32.mrb[0].mxu0
  %v2531 = vadd.f32 0.0, %v2530
  %v2532 = vpop.f32.mrb[0].mxu0
  %v2533 = vadd.f32 0.0, %v2532
  %2534 = vmatprep.mubr.bf16.mxu0 %v719
  %2535 = vmatmul.mubr.bf16.gmra.mrb[0].mxu0 %v718
  %v2536 = vpop.f32.mrb[0].mxu0
  %v2537 = vadd.f32 0.0, %v2536
  %v2538 = vpop.f32.mrb[0].mxu0
  %v2539 = vadd.f32 0.0, %v2538
  %v2540 = vpop.f32.mrb[0].mxu0
  %v2541 = vadd.f32 0.0, %v2540
  %v2542 = vpop.f32.mrb[0].mxu0
  %v2543 = vadd.f32 0.0, %v2542
  %2544 = vmatprep.mubr.bf16.mxu0 %v724
  %2545 = vmatmul.mubr.bf16.gmra.mrb[0].mxu0 %v723
  %v2546 = vpop.f32.mrb[0].mxu0
  %v2547 = vadd.f32 0.0, %v2546
  %v2548 = vpop.f32.mrb[0].mxu0
  %v2549 = vadd.f32 0.0, %v2548
  %v2550 = vpop.f32.mrb[0].mxu0
  %v2551 = vadd.f32 0.0, %v2550
  %v2552 = vpop.f32.mrb[0].mxu0
  %v2553 = vadd.f32 0.0, %v2552
  %2554 = vmatprep.mubr.bf16.mxu0 %v729
  %2555 = vmatmul.mubr.bf16.gmra.mrb[0].mxu0 %v728
  %v2556 = vpop.f32.mrb[0].mxu0
  %v2557 = vadd.f32 0.0, %v2556
  %v2558 = vpop.f32.mrb[0].mxu0
  %v2559 = vadd.f32 0.0, %v2558
  %v2560 = vpop.f32.mrb[0].mxu0
  %v2561 = vadd.f32 0.0, %v2560
  %v2562 = vpop.f32.mrb[0].mxu0
  %v2563 = vadd.f32 0.0, %v2562
  %2564 = vdwg.mxu0
  %2565 = vmatprep.subr.bf16.mxu0 %v2333
  %2566 = vmatpush1.bf16.msra.mxu0 %v2332
  %2567 = vmatprep.subr.bf16.mxu0 %v2335
  %2568 = vmatpush1.bf16.msra.mxu0 %v2334
  %2569 = vmatprep.subr.bf16.mxu0 %v2337
  %2570 = vmatpush1.bf16.msra.mxu0 %v2336
  %2571 = vmatprep.subr.bf16.mxu0 %v2339
  %2572 = vmatpush1.bf16.msra.mxu0 %v2338
  %2573 = vmatprep.subr.bf16.mxu0 %v2341
  %2574 = vmatpush1.bf16.msra.mxu0 %v2340
  %2575 = vmatprep.subr.bf16.mxu0 %v2343
  %2576 = vmatpush1.bf16.msra.mxu0 %v2342
  %2577 = vmatprep.subr.bf16.mxu0 %v2345
  %2578 = vmatpush1.bf16.msra.mxu0 %v2344
  %2579 = vmatprep.subr.bf16.mxu0 %v2347
  %2580 = vmatpush1.bf16.msra.mxu0 %v2346
  %2581 = vmatprep.subr.bf16.mxu0 %v2349
  %2582 = vmatpush1.bf16.msra.mxu0 %v2348
  %2583 = vmatprep.subr.bf16.mxu0 %v2351
  %2584 = vmatpush1.bf16.msra.mxu0 %v2350
  %2585 = vmatprep.subr.bf16.mxu0 %v2353
  %2586 = vmatpush1.bf16.msra.mxu0 %v2352
  %2587 = vmatprep.subr.bf16.mxu0 %v2355
  %2588 = vmatpush1.bf16.msra.mxu0 %v2354
  %2589 = vmatprep.subr.bf16.mxu0 %v2357
  %2590 = vmatpush1.bf16.msra.mxu0 %v2356
  %2591 = vmatprep.subr.bf16.mxu0 %v2359
  %2592 = vmatpush1.bf16.msra.mxu0 %v2358
  %2593 = vmatprep.subr.bf16.mxu0 %v2361
  %2594 = vmatpush1.bf16.msra.mxu0 %v2360
  %2595 = vmatprep.subr.bf16.mxu0 %v2363
  %2596 = vmatpush1.bf16.msra.mxu0 %v2362
  %2597 = vmatprep.mubr.bf16.mxu0 %v656
  %2598 = vmatmul.mubr.bf16.gmra.mrb[0].mxu0 %v655
  %v2599 = vpop.f32.mrb[0].mxu0
  %v2600 = vadd.f32 %v2407, %v2599
  %v2601 = vpop.f32.mrb[0].mxu0
  %v2602 = vadd.f32 %v2409, %v2601
  %v2603 = vpop.f32.mrb[0].mxu0
  %v2604 = vadd.f32 %v2411, %v2603
  %v2605 = vpop.f32.mrb[0].mxu0
  %v2606 = vadd.f32 %v2413, %v2605
  %2607 = vmatprep.mubr.bf16.mxu0 %v661
  %2608 = vmatmul.mubr.bf16.gmra.mrb[0].mxu0 %v660
  %v2609 = vpop.f32.mrb[0].mxu0
  %v2610 = vadd.f32 %v2417, %v2609
  %v2611 = vpop.f32.mrb[0].mxu0
  %v2612 = vadd.f32 %v2419, %v2611
  %v2613 = vpop.f32.mrb[0].mxu0
  %v2614 = vadd.f32 %v2421, %v2613
  %v2615 = vpop.f32.mrb[0].mxu0
  %v2616 = vadd.f32 %v2423, %v2615
  %2617 = vmatprep.mubr.bf16.mxu0 %v666
  %2618 = vmatmul.mubr.bf16.gmra.mrb[0].mxu0 %v665
  %v2619 = vpop.f32.mrb[0].mxu0
  %v2620 = vadd.f32 %v2427, %v2619
  %v2621 = vpop.f32.mrb[0].mxu0
  %v2622 = vadd.f32 %v2429, %v2621
  %v2623 = vpop.f32.mrb[0].mxu0
  %v2624 = vadd.f32 %v2431, %v2623
  %v2625 = vpop.f32.mrb[0].mxu0
  %v2626 = vadd.f32 %v2433, %v2625
  %2627 = vmatprep.mubr.bf16.mxu0 %v671
  %2628 = vmatmul.mubr.bf16.gmra.mrb[0].mxu0 %v670
  %v2629 = vpop.f32.mrb[0].mxu0
  %v2630 = vadd.f32 %v2437, %v2629
  %v2631 = vpop.f32.mrb[0].mxu0
  %v2632 = vadd.f32 %v2439, %v2631
  %v2633 = vpop.f32.mrb[0].mxu0
  %v2634 = vadd.f32 %v2441, %v2633
  %v2635 = vpop.f32.mrb[0].mxu0
  %v2636 = vadd.f32 %v2443, %v2635
  %2637 = vmatprep.mubr.bf16.mxu0 %v676
  %2638 = vmatmul.mubr.bf16.gmra.mrb[0].mxu0 %v675
  %v2639 = vpop.f32.mrb[0].mxu0
  %v2640 = vadd.f32 %v2447, %v2639
  %v2641 = vpop.f32.mrb[0].mxu0
  %v2642 = vadd.f32 %v2449, %v2641
  %v2643 = vpop.f32.mrb[0].mxu0
  %v2644 = vadd.f32 %v2451, %v2643
  %v2645 = vpop.f32.mrb[0].mxu0
  %v2646 = vadd.f32 %v2453, %v2645
  %2647 = vmatprep.mubr.bf16.mxu0 %v681
  %2648 = vmatmul.mubr.bf16.gmra.mrb[0].mxu0 %v680
  %v2649 = vpop.f32.mrb[0].mxu0
  %v2650 = vadd.f32 %v2457, %v2649
  %v2651 = vpop.f32.mrb[0].mxu0
  %v2652 = vadd.f32 %v2459, %v2651
  %v2653 = vpop.f32.mrb[0].mxu0
  %v2654 = vadd.f32 %v2461, %v2653
  %v2655 = vpop.f32.mrb[0].mxu0
  %v2656 = vadd.f32 %v2463, %v2655
  %2657 = vmatprep.mubr.bf16.mxu0 %v686
  %2658 = vmatmul.mubr.bf16.gmra.mrb[0].mxu0 %v685
  %v2659 = vpop.f32.mrb[0].mxu0
  %v2660 = vadd.f32 %v2467, %v2659
  %v2661 = vpop.f32.mrb[0].mxu0
  %v2662 = vadd.f32 %v2469, %v2661
  %v2663 = vpop.f32.mrb[0].mxu0
  %v2664 = vadd.f32 %v2471, %v2663
  %v2665 = vpop.f32.mrb[0].mxu0
  %v2666 = vadd.f32 %v2473, %v2665
  %2667 = vmatprep.mubr.bf16.mxu0 %v691
  %2668 = vmatmul.mubr.bf16.gmra.mrb[0].mxu0 %v690
  %v2669 = vpop.f32.mrb[0].mxu0
  %v2670 = vadd.f32 %v2477, %v2669
  %v2671 = vpop.f32.mrb[0].mxu0
  %v2672 = vadd.f32 %v2479, %v2671
  %v2673 = vpop.f32.mrb[0].mxu0
  %v2674 = vadd.f32 %v2481, %v2673
  %v2675 = vpop.f32.mrb[0].mxu0
  %v2676 = vadd.f32 %v2483, %v2675
  %2677 = vmatprep.mubr.bf16.mxu0 %v696
  %2678 = vmatmul.mubr.bf16.gmra.mrb[0].mxu0 %v695
  %v2679 = vpop.f32.mrb[0].mxu0
  %v2680 = vadd.f32 %v2487, %v2679
  %v2681 = vpop.f32.mrb[0].mxu0
  %v2682 = vadd.f32 %v2489, %v2681
  %v2683 = vpop.f32.mrb[0].mxu0
  %v2684 = vadd.f32 %v2491, %v2683
  %v2685 = vpop.f32.mrb[0].mxu0
  %v2686 = vadd.f32 %v2493, %v2685
  %2687 = vmatprep.mubr.bf16.mxu0 %v701
  %2688 = vmatmul.mubr.bf16.gmra.mrb[0].mxu0 %v700
  %v2689 = vpop.f32.mrb[0].mxu0
  %v2690 = vadd.f32 %v2497, %v2689
  %v2691 = vpop.f32.mrb[0].mxu0
  %v2692 = vadd.f32 %v2499, %v2691
  %v2693 = vpop.f32.mrb[0].mxu0
  %v2694 = vadd.f32 %v2501, %v2693
  %v2695 = vpop.f32.mrb[0].mxu0
  %v2696 = vadd.f32 %v2503, %v2695
  %2697 = vmatprep.mubr.bf16.mxu0 %v706
  %2698 = vmatmul.mubr.bf16.gmra.mrb[0].mxu0 %v705
  %v2699 = vpop.f32.mrb[0].mxu0
  %v2700 = vadd.f32 %v2507, %v2699
  %v2701 = vpop.f32.mrb[0].mxu0
  %v2702 = vadd.f32 %v2509, %v2701
  %v2703 = vpop.f32.mrb[0].mxu0
  %v2704 = vadd.f32 %v2511, %v2703
  %v2705 = vpop.f32.mrb[0].mxu0
  %v2706 = vadd.f32 %v2513, %v2705
  %2707 = vmatprep.mubr.bf16.mxu0 %v711
  %2708 = vmatmul.mubr.bf16.gmra.mrb[0].mxu0 %v710
  %v2709 = vpop.f32.mrb[0].mxu0
  %v2710 = vadd.f32 %v2517, %v2709
  %v2711 = vpop.f32.mrb[0].mxu0
  %v2712 = vadd.f32 %v2519, %v2711
  %v2713 = vpop.f32.mrb[0].mxu0
  %v2714 = vadd.f32 %v2521, %v2713
  %v2715 = vpop.f32.mrb[0].mxu0
  %v2716 = vadd.f32 %v2523, %v2715
  %2717 = vmatprep.mubr.bf16.mxu0 %v716
  %2718 = vmatmul.mubr.bf16.gmra.mrb[0].mxu0 %v715
  %v2719 = vpop.f32.mrb[0].mxu0
  %v2720 = vadd.f32 %v2527, %v2719
  %v2721 = vpop.f32.mrb[0].mxu0
  %v2722 = vadd.f32 %v2529, %v2721
  %v2723 = vpop.f32.mrb[0].mxu0
  %v2724 = vadd.f32 %v2531, %v2723
  %v2725 = vpop.f32.mrb[0].mxu0
  %v2726 = vadd.f32 %v2533, %v2725
  %2727 = vmatprep.mubr.bf16.mxu0 %v721
  %2728 = vmatmul.mubr.bf16.gmra.mrb[0].mxu0 %v720
  %v2729 = vpop.f32.mrb[0].mxu0
  %v2730 = vadd.f32 %v2537, %v2729
  %v2731 = vpop.f32.mrb[0].mxu0
  %v2732 = vadd.f32 %v2539, %v2731
  %v2733 = vpop.f32.mrb[0].mxu0
  %v2734 = vadd.f32 %v2541, %v2733
  %v2735 = vpop.f32.mrb[0].mxu0
  %v2736 = vadd.f32 %v2543, %v2735
  %2737 = vmatprep.mubr.bf16.mxu0 %v726
  %2738 = vmatmul.mubr.bf16.gmra.mrb[0].mxu0 %v725
  %v2739 = vpop.f32.mrb[0].mxu0
  %v2740 = vadd.f32 %v2547, %v2739
  %v2741 = vpop.f32.mrb[0].mxu0
  %v2742 = vadd.f32 %v2549, %v2741
  %v2743 = vpop.f32.mrb[0].mxu0
  %v2744 = vadd.f32 %v2551, %v2743
  %v2745 = vpop.f32.mrb[0].mxu0
  %v2746 = vadd.f32 %v2553, %v2745
  %2747 = vmatprep.mubr.bf16.mxu0 %v731
  %2748 = vmatmul.mubr.bf16.gmra.mrb[0].mxu0 %v730
  %v2749 = vpop.f32.mrb[0].mxu0
  %v2750 = vadd.f32 %v2557, %v2749
  %v2751 = vpop.f32.mrb[0].mxu0
  %v2752 = vadd.f32 %v2559, %v2751
  %v2753 = vpop.f32.mrb[0].mxu0
  %v2754 = vadd.f32 %v2561, %v2753
  %v2755 = vpop.f32.mrb[0].mxu0
  %v2756 = vadd.f32 %v2563, %v2755
  %2757 = vdwg.mxu0
  %2758 = vmatprep.subr.bf16.mxu0 %v2365
  %2759 = vmatpush1.bf16.msra.mxu0 %v2364
  %2760 = vmatprep.subr.bf16.mxu0 %v2367
  %2761 = vmatpush1.bf16.msra.mxu0 %v2366
  %2762 = vmatprep.subr.bf16.mxu0 %v2369
  %2763 = vmatpush1.bf16.msra.mxu0 %v2368
  %2764 = vmatprep.subr.bf16.mxu0 %v2371
  %2765 = vmatpush1.bf16.msra.mxu0 %v2370
  %2766 = vmatprep.subr.bf16.mxu0 0
  %2767 = vmatpush1.bf16.msra.mxu0 0
  %2768 = vmatprep.subr.bf16.mxu0 0
  %2769 = vmatpush1.bf16.msra.mxu0 0
  %2770 = vmatprep.subr.bf16.mxu0 0
  %2771 = vmatpush1.bf16.msra.mxu0 0
  %2772 = vmatprep.subr.bf16.mxu0 0
  %2773 = vmatpush1.bf16.msra.mxu0 0
  %2774 = vmatprep.subr.bf16.mxu0 0
  %2775 = vmatpush1.bf16.msra.mxu0 0
  %2776 = vmatprep.subr.bf16.mxu0 0
  %2777 = vmatpush1.bf16.msra.mxu0 0
  %2778 = vmatprep.subr.bf16.mxu0 0
  %2779 = vmatpush1.bf16.msra.mxu0 0
  %2780 = vmatprep.subr.bf16.mxu0 0
  %2781 = vmatpush1.bf16.msra.mxu0 0
  %2782 = vmatprep.subr.bf16.mxu0 0
  %2783 = vmatpush1.bf16.msra.mxu0 0
  %2784 = vmatprep.subr.bf16.mxu0 0
  %2785 = vmatpush1.bf16.msra.mxu0 0
  %2786 = vmatprep.subr.bf16.mxu0 0
  %2787 = vmatpush1.bf16.msra.mxu0 0
  %2788 = vmatprep.subr.bf16.mxu0 0
  %2789 = vmatpush1.bf16.msra.mxu0 0
  %2790 = vmatprep.mubr.bf16.mxu0 0
  %2791 = vmatmul.mubr.bf16.gmra.mrb[0].mxu0 %v799
  %v2792 = vpop.f32.mrb[0].mxu0
  %v2793 = vadd.f32 %v2600, %v2792
  %v2794 = vpop.f32.mrb[0].mxu0
  %v2795 = vadd.f32 %v2602, %v2794
  %v2796 = vpop.f32.mrb[0].mxu0
  %v2797 = vadd.f32 %v2604, %v2796
  %v2798 = vpop.f32.mrb[0].mxu0
  %v2799 = vadd.f32 %v2606, %v2798
  %2800 = vmatprep.mubr.bf16.mxu0 0
  %2801 = vmatmul.mubr.bf16.gmra.mrb[0].mxu0 %v802
  %v2802 = vpop.f32.mrb[0].mxu0
  %v2803 = vadd.f32 %v2610, %v2802
  %v2804 = vpop.f32.mrb[0].mxu0
  %v2805 = vadd.f32 %v2612, %v2804
  %v2806 = vpop.f32.mrb[0].mxu0
  %v2807 = vadd.f32 %v2614, %v2806
  %v2808 = vpop.f32.mrb[0].mxu0
  %v2809 = vadd.f32 %v2616, %v2808
  %2810 = vmatprep.mubr.bf16.mxu0 0
  %2811 = vmatmul.mubr.bf16.gmra.mrb[0].mxu0 %v805
  %v2812 = vpop.f32.mrb[0].mxu0
  %v2813 = vadd.f32 %v2620, %v2812
  %v2814 = vpop.f32.mrb[0].mxu0
  %v2815 = vadd.f32 %v2622, %v2814
  %v2816 = vpop.f32.mrb[0].mxu0
  %v2817 = vadd.f32 %v2624, %v2816
  %v2818 = vpop.f32.mrb[0].mxu0
  %v2819 = vadd.f32 %v2626, %v2818
  %2820 = vmatprep.mubr.bf16.mxu0 0
  %2821 = vmatmul.mubr.bf16.gmra.mrb[0].mxu0 %v808
  %v2822 = vpop.f32.mrb[0].mxu0
  %v2823 = vadd.f32 %v2630, %v2822
  %v2824 = vpop.f32.mrb[0].mxu0
  %v2825 = vadd.f32 %v2632, %v2824
  %v2826 = vpop.f32.mrb[0].mxu0
  %v2827 = vadd.f32 %v2634, %v2826
  %v2828 = vpop.f32.mrb[0].mxu0
  %v2829 = vadd.f32 %v2636, %v2828
  %2830 = vmatprep.mubr.bf16.mxu0 0
  %2831 = vmatmul.mubr.bf16.gmra.mrb[0].mxu0 %v811
  %v2832 = vpop.f32.mrb[0].mxu0
  %v2833 = vadd.f32 %v2640, %v2832
  %v2834 = vpop.f32.mrb[0].mxu0
  %v2835 = vadd.f32 %v2642, %v2834
  %v2836 = vpop.f32.mrb[0].mxu0
  %v2837 = vadd.f32 %v2644, %v2836
  %v2838 = vpop.f32.mrb[0].mxu0
  %v2839 = vadd.f32 %v2646, %v2838
  %2840 = vmatprep.mubr.bf16.mxu0 0
  %2841 = vmatmul.mubr.bf16.gmra.mrb[0].mxu0 %v814
  %v2842 = vpop.f32.mrb[0].mxu0
  %v2843 = vadd.f32 %v2650, %v2842
  %v2844 = vpop.f32.mrb[0].mxu0
  %v2845 = vadd.f32 %v2652, %v2844
  %v2846 = vpop.f32.mrb[0].mxu0
  %v2847 = vadd.f32 %v2654, %v2846
  %v2848 = vpop.f32.mrb[0].mxu0
  %v2849 = vadd.f32 %v2656, %v2848
  %2850 = vmatprep.mubr.bf16.mxu0 0
  %2851 = vmatmul.mubr.bf16.gmra.mrb[0].mxu0 %v817
  %v2852 = vpop.f32.mrb[0].mxu0
  %v2853 = vadd.f32 %v2660, %v2852
  %v2854 = vpop.f32.mrb[0].mxu0
  %v2855 = vadd.f32 %v2662, %v2854
  %v2856 = vpop.f32.mrb[0].mxu0
  %v2857 = vadd.f32 %v2664, %v2856
  %v2858 = vpop.f32.mrb[0].mxu0
  %v2859 = vadd.f32 %v2666, %v2858
  %2860 = vmatprep.mubr.bf16.mxu0 0
  %2861 = vmatmul.mubr.bf16.gmra.mrb[0].mxu0 %v820
  %v2862 = vpop.f32.mrb[0].mxu0
  %v2863 = vadd.f32 %v2670, %v2862
  %v2864 = vpop.f32.mrb[0].mxu0
  %v2865 = vadd.f32 %v2672, %v2864
  %v2866 = vpop.f32.mrb[0].mxu0
  %v2867 = vadd.f32 %v2674, %v2866
  %v2868 = vpop.f32.mrb[0].mxu0
  %v2869 = vadd.f32 %v2676, %v2868
  %2870 = vmatprep.mubr.bf16.mxu0 0
  %2871 = vmatmul.mubr.bf16.gmra.mrb[0].mxu0 %v823
  %v2872 = vpop.f32.mrb[0].mxu0
  %v2873 = vadd.f32 %v2680, %v2872
  %v2874 = vpop.f32.mrb[0].mxu0
  %v2875 = vadd.f32 %v2682, %v2874
  %v2876 = vpop.f32.mrb[0].mxu0
  %v2877 = vadd.f32 %v2684, %v2876
  %v2878 = vpop.f32.mrb[0].mxu0
  %v2879 = vadd.f32 %v2686, %v2878
  %2880 = vmatprep.mubr.bf16.mxu0 0
  %2881 = vmatmul.mubr.bf16.gmra.mrb[0].mxu0 %v826
  %v2882 = vpop.f32.mrb[0].mxu0
  %v2883 = vadd.f32 %v2690, %v2882
  %v2884 = vpop.f32.mrb[0].mxu0
  %v2885 = vadd.f32 %v2692, %v2884
  %v2886 = vpop.f32.mrb[0].mxu0
  %v2887 = vadd.f32 %v2694, %v2886
  %v2888 = vpop.f32.mrb[0].mxu0
  %v2889 = vadd.f32 %v2696, %v2888
  %2890 = vmatprep.mubr.bf16.mxu0 0
  %2891 = vmatmul.mubr.bf16.gmra.mrb[0].mxu0 %v829
  %v2892 = vpop.f32.mrb[0].mxu0
  %v2893 = vadd.f32 %v2700, %v2892
  %v2894 = vpop.f32.mrb[0].mxu0
  %v2895 = vadd.f32 %v2702, %v2894
  %v2896 = vpop.f32.mrb[0].mxu0
  %v2897 = vadd.f32 %v2704, %v2896
  %v2898 = vpop.f32.mrb[0].mxu0
  %v2899 = vadd.f32 %v2706, %v2898
  %2900 = vmatprep.mubr.bf16.mxu0 0
  %2901 = vmatmul.mubr.bf16.gmra.mrb[0].mxu0 %v832
  %v2902 = vpop.f32.mrb[0].mxu0
  %v2903 = vadd.f32 %v2710, %v2902
  %v2904 = vpop.f32.mrb[0].mxu0
  %v2905 = vadd.f32 %v2712, %v2904
  %v2906 = vpop.f32.mrb[0].mxu0
  %v2907 = vadd.f32 %v2714, %v2906
  %v2908 = vpop.f32.mrb[0].mxu0
  %v2909 = vadd.f32 %v2716, %v2908
  %2910 = vmatprep.mubr.bf16.mxu0 0
  %2911 = vmatmul.mubr.bf16.gmra.mrb[0].mxu0 %v835
  %v2912 = vpop.f32.mrb[0].mxu0
  %v2913 = vadd.f32 %v2720, %v2912
  %v2914 = vpop.f32.mrb[0].mxu0
  %v2915 = vadd.f32 %v2722, %v2914
  %v2916 = vpop.f32.mrb[0].mxu0
  %v2917 = vadd.f32 %v2724, %v2916
  %v2918 = vpop.f32.mrb[0].mxu0
  %v2919 = vadd.f32 %v2726, %v2918
  %2920 = vmatprep.mubr.bf16.mxu0 0
  %2921 = vmatmul.mubr.bf16.gmra.mrb[0].mxu0 %v838
  %v2922 = vpop.f32.mrb[0].mxu0
  %v2923 = vadd.f32 %v2730, %v2922
  %v2924 = vpop.f32.mrb[0].mxu0
  %v2925 = vadd.f32 %v2732, %v2924
  %v2926 = vpop.f32.mrb[0].mxu0
  %v2927 = vadd.f32 %v2734, %v2926
  %v2928 = vpop.f32.mrb[0].mxu0
  %v2929 = vadd.f32 %v2736, %v2928
  %2930 = vmatprep.mubr.bf16.mxu0 0
  %2931 = vmatmul.mubr.bf16.gmra.mrb[0].mxu0 %v841
  %v2932 = vpop.f32.mrb[0].mxu0
  %v2933 = vadd.f32 %v2740, %v2932
  %v2934 = vpop.f32.mrb[0].mxu0
  %v2935 = vadd.f32 %v2742, %v2934
  %v2936 = vpop.f32.mrb[0].mxu0
  %v2937 = vadd.f32 %v2744, %v2936
  %v2938 = vpop.f32.mrb[0].mxu0
  %v2939 = vadd.f32 %v2746, %v2938
  %2940 = vmatprep.mubr.bf16.mxu0 0
  %2941 = vmatmul.mubr.bf16.gmra.mrb[0].mxu0 %v844
  %v2942 = vpop.f32.mrb[0].mxu0
  %v2943 = vadd.f32 %v2750, %v2942
  %v2944 = vpop.f32.mrb[0].mxu0
  %v2945 = vadd.f32 %v2752, %v2944
  %v2946 = vpop.f32.mrb[0].mxu0
  %v2947 = vadd.f32 %v2754, %v2946
  %v2948 = vpop.f32.mrb[0].mxu0
  %v2949 = vadd.f32 %v2756, %v2948
  %2950 = vdwg.mxu0
  %v2951 = vpack.c.bf16 %v2877, %v2873
  %v2952 = vpack.c.bf16 %v2879, %v2875
  %v2953 = vpack.c.bf16 %v2887, %v2883
  %v2954 = vpack.c.bf16 %v2889, %v2885
  %v2955 = vpack.c.bf16 %v2897, %v2893
  %v2956 = vpack.c.bf16 %v2899, %v2895
  %v2957 = vpack.c.bf16 %v2907, %v2903
  %v2958 = vpack.c.bf16 %v2909, %v2905
  %v2959 = vpack.c.bf16 %v2917, %v2913
  %v2960 = vpack.c.bf16 %v2919, %v2915
  %v2961 = vpack.c.bf16 %v2927, %v2923
  %v2962 = vpack.c.bf16 %v2929, %v2925
  %v2963 = vpack.c.bf16 %v2937, %v2933
  %v2964 = vpack.c.bf16 %v2939, %v2935
  %v2965 = vpack.c.bf16 %v2947, %v2943
  %v2966 = vpack.c.bf16 %v2949, %v2945
  %2967 = vmatprep.subr.bf16.mxu0 0
  %2968 = vmatpush1.bf16.msra.mxu0 %v1505
  %2969 = vmatprep.subr.bf16.mxu0 0
  %2970 = vmatpush1.bf16.msra.mxu0 %v1506
  %2971 = vmatprep.subr.bf16.mxu0 0
  %2972 = vmatpush1.bf16.msra.mxu0 %v1507
  %2973 = vmatprep.subr.bf16.mxu0 0
  %2974 = vmatpush1.bf16.msra.mxu0 %v1508
  %2975 = vmatprep.subr.bf16.mxu0 0
  %2976 = vmatpush1.bf16.msra.mxu0 %v1509
  %2977 = vmatprep.subr.bf16.mxu0 0
  %2978 = vmatpush1.bf16.msra.mxu0 %v1510
  %2979 = vmatprep.subr.bf16.mxu0 0
  %2980 = vmatpush1.bf16.msra.mxu0 %v1511
  %2981 = vmatprep.subr.bf16.mxu0 0
  %2982 = vmatpush1.bf16.msra.mxu0 %v1512
  %2983 = vmatprep.subr.bf16.mxu0 0
  %2984 = vmatpush1.bf16.msra.mxu0 %v1513
  %2985 = vmatprep.subr.bf16.mxu0 0
  %2986 = vmatpush1.bf16.msra.mxu0 %v1514
  %2987 = vmatprep.subr.bf16.mxu0 0
  %2988 = vmatpush1.bf16.msra.mxu0 %v1515
  %2989 = vmatprep.subr.bf16.mxu0 0
  %2990 = vmatpush1.bf16.msra.mxu0 %v1516
  %2991 = vmatprep.subr.bf16.mxu0 0
  %2992 = vmatpush1.bf16.msra.mxu0 %v1517
  %2993 = vmatprep.subr.bf16.mxu0 0
  %2994 = vmatpush1.bf16.msra.mxu0 %v1518
  %2995 = vmatprep.subr.bf16.mxu0 0
  %2996 = vmatpush1.bf16.msra.mxu0 %v1519
  %2997 = vmatprep.subr.bf16.mxu0 0
  %2998 = vmatpush1.bf16.msra.mxu0 %v1520
  %2999 = vmatprep.mubr.bf16.mxu0 %v2952
  %3000 = vmatmul.mubr.bf16.gmra.mrb[0].mxu0 %v2951
  %v3001 = vpop.f32.mrb[0].mxu0
  %v3002 = vadd.f32 0.0, %v3001
  %v3003 = vpop.f32.mrb[0].mxu0
  %v3004 = vpop.f32.mrb[0].mxu0
  %v3005 = vadd.f32 0.0, %v3004
  %v3006 = vpop.f32.mrb[0].mxu0
  %3007 = vmatprep.mubr.bf16.mxu0 %v2954
  %3008 = vmatmul.mubr.bf16.gmra.mrb[0].mxu0 %v2953
  %v3009 = vpop.f32.mrb[0].mxu0
  %v3010 = vadd.f32 0.0, %v3009
  %v3011 = vpop.f32.mrb[0].mxu0
  %v3012 = vpop.f32.mrb[0].mxu0
  %v3013 = vadd.f32 0.0, %v3012
  %v3014 = vpop.f32.mrb[0].mxu0
  %3015 = vmatprep.mubr.bf16.mxu0 %v2956
  %3016 = vmatmul.mubr.bf16.gmra.mrb[0].mxu0 %v2955
  %v3017 = vpop.f32.mrb[0].mxu0
  %v3018 = vadd.f32 0.0, %v3017
  %v3019 = vpop.f32.mrb[0].mxu0
  %v3020 = vpop.f32.mrb[0].mxu0
  %v3021 = vadd.f32 0.0, %v3020
  %v3022 = vpop.f32.mrb[0].mxu0
  %3023 = vmatprep.mubr.bf16.mxu0 %v2958
  %3024 = vmatmul.mubr.bf16.gmra.mrb[0].mxu0 %v2957
  %v3025 = vpop.f32.mrb[0].mxu0
  %v3026 = vadd.f32 0.0, %v3025
  %v3027 = vpop.f32.mrb[0].mxu0
  %v3028 = vpop.f32.mrb[0].mxu0
  %v3029 = vadd.f32 0.0, %v3028
  %v3030 = vpop.f32.mrb[0].mxu0
  %3031 = vmatprep.mubr.bf16.mxu0 %v2960
  %3032 = vmatmul.mubr.bf16.gmra.mrb[0].mxu0 %v2959
  %v3033 = vpop.f32.mrb[0].mxu0
  %v3034 = vadd.f32 0.0, %v3033
  %v3035 = vpop.f32.mrb[0].mxu0
  %v3036 = vpop.f32.mrb[0].mxu0
  %v3037 = vadd.f32 0.0, %v3036
  %v3038 = vpop.f32.mrb[0].mxu0
  %3039 = vmatprep.mubr.bf16.mxu0 %v2962
  %3040 = vmatmul.mubr.bf16.gmra.mrb[0].mxu0 %v2961
  %v3041 = vpop.f32.mrb[0].mxu0
  %v3042 = vadd.f32 0.0, %v3041
  %v3043 = vpop.f32.mrb[0].mxu0
  %v3044 = vpop.f32.mrb[0].mxu0
  %v3045 = vadd.f32 0.0, %v3044
  %v3046 = vpop.f32.mrb[0].mxu0
  %3047 = vmatprep.mubr.bf16.mxu0 %v2964
  %3048 = vmatmul.mubr.bf16.gmra.mrb[0].mxu0 %v2963
  %v3049 = vpop.f32.mrb[0].mxu0
  %v3050 = vadd.f32 0.0, %v3049
  %v3051 = vpop.f32.mrb[0].mxu0
  %v3052 = vpop.f32.mrb[0].mxu0
  %v3053 = vadd.f32 0.0, %v3052
  %v3054 = vpop.f32.mrb[0].mxu0
  %3055 = vmatprep.mubr.bf16.mxu0 %v2966
  %3056 = vmatmul.mubr.bf16.gmra.mrb[0].mxu0 %v2965
  %v3057 = vpop.f32.mrb[0].mxu0
  %v3058 = vadd.f32 0.0, %v3057
  %v3059 = vpop.f32.mrb[0].mxu0
  %v3060 = vpop.f32.mrb[0].mxu0
  %v3061 = vadd.f32 0.0, %v3060
  %v3062 = vpop.f32.mrb[0].mxu0
  %3063 = vdwg.mxu0
  %v3064 = vxor.u32 %v3002, 2147483648
  %v3065 = vxor.u32 %v3005, 2147483648
  %v3066 = vxor.u32 %v3010, 2147483648
  %v3067 = vxor.u32 %v3013, 2147483648
  %v3068 = vxor.u32 %v3018, 2147483648
  %v3069 = vxor.u32 %v3021, 2147483648
  %v3070 = vxor.u32 %v3026, 2147483648
  %v3071 = vxor.u32 %v3029, 2147483648
  %v3072 = vxor.u32 %v3034, 2147483648
  %v3073 = vxor.u32 %v3037, 2147483648
  %v3074 = vxor.u32 %v3042, 2147483648
  %v3075 = vxor.u32 %v3045, 2147483648
  %v3076 = vxor.u32 %v3050, 2147483648
  %v3077 = vxor.u32 %v3053, 2147483648
  %v3078 = vxor.u32 %v3058, 2147483648
  %v3079 = vxor.u32 %v3061, 2147483648
  %v3080 = vmul.f32 %v3064, 1.442695
  %v3081 = vpow.pop %v3080
  %v3082 = vmul.f32 %v3065, 1.442695
  %v3083 = vpow.pop %v3082
  %v3084 = vmul.f32 %v3066, 1.442695
  %v3085 = vpow.pop %v3084
  %v3086 = vmul.f32 %v3067, 1.442695
  %v3087 = vpow.pop %v3086
  %v3088 = vmul.f32 %v3068, 1.442695
  %v3089 = vpow.pop %v3088
  %v3090 = vmul.f32 %v3069, 1.442695
  %v3091 = vpow.pop %v3090
  %v3092 = vmul.f32 %v3070, 1.442695
  %v3093 = vpow.pop %v3092
  %v3094 = vmul.f32 %v3071, 1.442695
  %v3095 = vpow.pop %v3094
  %v3096 = vmul.f32 %v3072, 1.442695
  %v3097 = vpow.pop %v3096
  %v3098 = vmul.f32 %v3073, 1.442695
  %v3099 = vpow.pop %v3098
  %v3100 = vmul.f32 %v3074, 1.442695
  %v3101 = vpow.pop %v3100
  %v3102 = vmul.f32 %v3075, 1.442695
  %v3103 = vpow.pop %v3102
  %v3104 = vmul.f32 %v3076, 1.442695
  %v3105 = vpow.pop %v3104
  %v3106 = vmul.f32 %v3077, 1.442695
  %v3107 = vpow.pop %v3106
  %v3108 = vmul.f32 %v3078, 1.442695
  %v3109 = vpow.pop %v3108
  %v3110 = vmul.f32 %v3079, 1.442695
  %v3111 = vpow.pop %v3110
  %v3112 = vadd.f32 %v3081, 1.0
  %v3113 = vadd.f32 %v3083, 1.0
  %v3114 = vadd.f32 %v3085, 1.0
  %v3115 = vadd.f32 %v3087, 1.0
  %v3116 = vadd.f32 %v3089, 1.0
  %v3117 = vadd.f32 %v3091, 1.0
  %v3118 = vadd.f32 %v3093, 1.0
  %v3119 = vadd.f32 %v3095, 1.0
  %v3120 = vadd.f32 %v3097, 1.0
  %v3121 = vadd.f32 %v3099, 1.0
  %v3122 = vadd.f32 %v3101, 1.0
  %v3123 = vadd.f32 %v3103, 1.0
  %v3124 = vadd.f32 %v3105, 1.0
  %v3125 = vadd.f32 %v3107, 1.0
  %v3126 = vadd.f32 %v3109, 1.0
  %v3127 = vadd.f32 %v3111, 1.0
  %v3128 = vrcp.pop %v3112
  %v3129 = vmul.f32 1.0, %v3128
  %v3130 = vrcp.pop %v3113
  %v3131 = vmul.f32 1.0, %v3130
  %v3132 = vrcp.pop %v3114
  %v3133 = vmul.f32 1.0, %v3132
  %v3134 = vrcp.pop %v3115
  %v3135 = vmul.f32 1.0, %v3134
  %v3136 = vrcp.pop %v3116
  %v3137 = vmul.f32 1.0, %v3136
  %v3138 = vrcp.pop %v3117
  %v3139 = vmul.f32 1.0, %v3138
  %v3140 = vrcp.pop %v3118
  %v3141 = vmul.f32 1.0, %v3140
  %v3142 = vrcp.pop %v3119
  %v3143 = vmul.f32 1.0, %v3142
  %v3144 = vrcp.pop %v3120
  %v3145 = vmul.f32 1.0, %v3144
  %v3146 = vrcp.pop %v3121
  %v3147 = vmul.f32 1.0, %v3146
  %v3148 = vrcp.pop %v3122
  %v3149 = vmul.f32 1.0, %v3148
  %v3150 = vrcp.pop %v3123
  %v3151 = vmul.f32 1.0, %v3150
  %v3152 = vrcp.pop %v3124
  %v3153 = vmul.f32 1.0, %v3152
  %v3154 = vrcp.pop %v3125
  %v3155 = vmul.f32 1.0, %v3154
  %v3156 = vrcp.pop %v3126
  %v3157 = vmul.f32 1.0, %v3156
  %v3158 = vrcp.pop %v3127
  %v3159 = vmul.f32 1.0, %v3158
  %v3160 = vpack.c.bf16 %v3131, %v3129
  %v3161 = vpack.c.bf16 %v3135, %v3133
  %v3162 = vpack.c.bf16 %v3139, %v3137
  %v3163 = vpack.c.bf16 %v3143, %v3141
  %v3164 = vpack.c.bf16 %v3147, %v3145
  %v3165 = vpack.c.bf16 %v3151, %v3149
  %v3166 = vpack.c.bf16 %v3155, %v3153
  %v3167 = vpack.c.bf16 %v3159, %v3157
  %v3169 = vsel %vm797, %v3160, 0
  %v3172 = vsel %vm797, %v3161, 0
  %v3175 = vsel %vm797, %v3162, 0
  %v3178 = vsel %vm797, %v3163, 0
  %v3181 = vsel %vm797, %v3164, 0
  %v3184 = vsel %vm797, %v3165, 0
  %v3187 = vsel %vm797, %v3166, 0
  %v3190 = vsel %vm797, %v3167, 0
  %3192 = vmatprep.subr.bf16.mxu0 %v1763
  %3193 = vmatpush1.bf16.msra.mxu0 %v1762
  %3194 = vmatprep.subr.bf16.mxu0 %v1765
  %3195 = vmatpush1.bf16.msra.mxu0 %v1764
  %3196 = vmatprep.subr.bf16.mxu0 %v1767
  %3197 = vmatpush1.bf16.msra.mxu0 %v1766
  %3198 = vmatprep.subr.bf16.mxu0 %v1769
  %3199 = vmatpush1.bf16.msra.mxu0 %v1768
  %3200 = vmatprep.subr.bf16.mxu0 0
  %3201 = vmatpush1.bf16.msra.mxu0 0
  %3202 = vmatprep.subr.bf16.mxu0 0
  %3203 = vmatpush1.bf16.msra.mxu0 0
  %3204 = vmatprep.subr.bf16.mxu0 0
  %3205 = vmatpush1.bf16.msra.mxu0 0
  %3206 = vmatprep.subr.bf16.mxu0 0
  %3207 = vmatpush1.bf16.msra.mxu0 0
  %3208 = vmatprep.subr.bf16.mxu0 0
  %3209 = vmatpush1.bf16.msra.mxu0 0
  %3210 = vmatprep.subr.bf16.mxu0 0
  %3211 = vmatpush1.bf16.msra.mxu0 0
  %3212 = vmatprep.subr.bf16.mxu0 0
  %3213 = vmatpush1.bf16.msra.mxu0 0
  %3214 = vmatprep.subr.bf16.mxu0 0
  %3215 = vmatpush1.bf16.msra.mxu0 0
  %3216 = vmatprep.subr.bf16.mxu0 0
  %3217 = vmatpush1.bf16.msra.mxu0 0
  %3218 = vmatprep.subr.bf16.mxu0 0
  %3219 = vmatpush1.bf16.msra.mxu0 0
  %3220 = vmatprep.subr.bf16.mxu0 0
  %3221 = vmatpush1.bf16.msra.mxu0 0
  %3222 = vmatprep.subr.bf16.mxu0 0
  %3223 = vmatpush1.bf16.msra.mxu0 0
  %3224 = vmatprep.mubr.bf16.mxu0 0
  %3225 = vmatmul.mubr.bf16.gmra.mrb[0].mxu0 %v3169
  %v3226 = vpop.f32.mrb[0].mxu0
  %v3227 = vadd.f32 0.0, %v3226
  %v3228 = vpop.f32.mrb[0].mxu0
  %v3229 = vadd.f32 0.0, %v3228
  %v3230 = vpop.f32.mrb[0].mxu0
  %v3231 = vadd.f32 0.0, %v3230
  %v3232 = vpop.f32.mrb[0].mxu0
  %v3233 = vadd.f32 0.0, %v3232
  %3234 = vmatprep.mubr.bf16.mxu0 0
  %3235 = vmatmul.mubr.bf16.gmra.mrb[0].mxu0 %v3172
  %v3236 = vpop.f32.mrb[0].mxu0
  %v3237 = vadd.f32 0.0, %v3236
  %v3238 = vpop.f32.mrb[0].mxu0
  %v3239 = vadd.f32 0.0, %v3238
  %v3240 = vpop.f32.mrb[0].mxu0
  %v3241 = vadd.f32 0.0, %v3240
  %v3242 = vpop.f32.mrb[0].mxu0
  %v3243 = vadd.f32 0.0, %v3242
  %3244 = vmatprep.mubr.bf16.mxu0 0
  %3245 = vmatmul.mubr.bf16.gmra.mrb[0].mxu0 %v3175
  %v3246 = vpop.f32.mrb[0].mxu0
  %v3247 = vadd.f32 0.0, %v3246
  %v3248 = vpop.f32.mrb[0].mxu0
  %v3249 = vadd.f32 0.0, %v3248
  %v3250 = vpop.f32.mrb[0].mxu0
  %v3251 = vadd.f32 0.0, %v3250
  %v3252 = vpop.f32.mrb[0].mxu0
  %v3253 = vadd.f32 0.0, %v3252
  %3254 = vmatprep.mubr.bf16.mxu0 0
  %3255 = vmatmul.mubr.bf16.gmra.mrb[0].mxu0 %v3178
  %v3256 = vpop.f32.mrb[0].mxu0
  %v3257 = vadd.f32 0.0, %v3256
  %v3258 = vpop.f32.mrb[0].mxu0
  %v3259 = vadd.f32 0.0, %v3258
  %v3260 = vpop.f32.mrb[0].mxu0
  %v3261 = vadd.f32 0.0, %v3260
  %v3262 = vpop.f32.mrb[0].mxu0
  %v3263 = vadd.f32 0.0, %v3262
  %3264 = vmatprep.mubr.bf16.mxu0 0
  %3265 = vmatmul.mubr.bf16.gmra.mrb[0].mxu0 %v3181
  %v3266 = vpop.f32.mrb[0].mxu0
  %v3267 = vadd.f32 0.0, %v3266
  %v3268 = vpop.f32.mrb[0].mxu0
  %v3269 = vadd.f32 0.0, %v3268
  %v3270 = vpop.f32.mrb[0].mxu0
  %v3271 = vadd.f32 0.0, %v3270
  %v3272 = vpop.f32.mrb[0].mxu0
  %v3273 = vadd.f32 0.0, %v3272
  %3274 = vmatprep.mubr.bf16.mxu0 0
  %3275 = vmatmul.mubr.bf16.gmra.mrb[0].mxu0 %v3184
  %v3276 = vpop.f32.mrb[0].mxu0
  %v3277 = vadd.f32 0.0, %v3276
  %v3278 = vpop.f32.mrb[0].mxu0
  %v3279 = vadd.f32 0.0, %v3278
  %v3280 = vpop.f32.mrb[0].mxu0
  %v3281 = vadd.f32 0.0, %v3280
  %v3282 = vpop.f32.mrb[0].mxu0
  %v3283 = vadd.f32 0.0, %v3282
  %3284 = vmatprep.mubr.bf16.mxu0 0
  %3285 = vmatmul.mubr.bf16.gmra.mrb[0].mxu0 %v3187
  %v3286 = vpop.f32.mrb[0].mxu0
  %v3287 = vadd.f32 0.0, %v3286
  %v3288 = vpop.f32.mrb[0].mxu0
  %v3289 = vadd.f32 0.0, %v3288
  %v3290 = vpop.f32.mrb[0].mxu0
  %v3291 = vadd.f32 0.0, %v3290
  %v3292 = vpop.f32.mrb[0].mxu0
  %v3293 = vadd.f32 0.0, %v3292
  %3294 = vmatprep.mubr.bf16.mxu0 0
  %3295 = vmatmul.mubr.bf16.gmra.mrb[0].mxu0 %v3190
  %v3296 = vpop.f32.mrb[0].mxu0
  %v3297 = vadd.f32 0.0, %v3296
  %v3298 = vpop.f32.mrb[0].mxu0
  %v3299 = vadd.f32 0.0, %v3298
  %v3300 = vpop.f32.mrb[0].mxu0
  %v3301 = vadd.f32 0.0, %v3300
  %v3302 = vpop.f32.mrb[0].mxu0
  %v3303 = vadd.f32 0.0, %v3302
  %3304 = vdwg.mxu0
  %v3305 = vadd.f32 %v2793, %v1918
  %v3306 = vadd.f32 %v2795, %v1918
  %v3307 = vadd.f32 %v2797, %v1923
  %v3308 = vadd.f32 %v2799, %v1923
  %v3309 = vadd.f32 %v2803, %v1928
  %v3310 = vadd.f32 %v2805, %v1928
  %v3311 = vadd.f32 %v2807, %v1933
  %v3312 = vadd.f32 %v2809, %v1933
  %v3313 = vadd.f32 %v2813, %v1938
  %v3314 = vadd.f32 %v2815, %v1938
  %v3315 = vadd.f32 %v2817, %v1943
  %v3316 = vadd.f32 %v2819, %v1943
  %v3317 = vadd.f32 %v2823, %v1948
  %v3318 = vadd.f32 %v2825, %v1948
  %v3319 = vadd.f32 %v2827, %v1953
  %v3320 = vadd.f32 %v2829, %v1953
  %v3321 = vadd.f32 %v2833, %v1958
  %v3322 = vadd.f32 %v2835, %v1958
  %v3323 = vadd.f32 %v2837, %v1963
  %v3324 = vadd.f32 %v2839, %v1963
  %v3325 = vadd.f32 %v2843, %v1968
  %v3326 = vadd.f32 %v2845, %v1968
  %v3327 = vadd.f32 %v2847, %v1973
  %v3328 = vadd.f32 %v2849, %v1973
  %v3329 = vadd.f32 %v2853, %v1978
  %v3330 = vadd.f32 %v2855, %v1978
  %v3331 = vadd.f32 %v2857, %v1983
  %v3332 = vadd.f32 %v2859, %v1983
  %v3333 = vadd.f32 %v2863, %v1988
  %v3334 = vadd.f32 %v2865, %v1988
  %v3335 = vadd.f32 %v2867, %v1993
  %v3336 = vadd.f32 %v2869, %v1993
  %v3337 = vmax.f32 %v3305, 0.0
  %v3338 = vmax.f32 %v3306, 0.0
  %v3339 = vmax.f32 %v3307, 0.0
  %v3340 = vmax.f32 %v3308, 0.0
  %v3341 = vmax.f32 %v3309, 0.0
  %v3342 = vmax.f32 %v3310, 0.0
  %v3343 = vmax.f32 %v3311, 0.0
  %v3344 = vmax.f32 %v3312, 0.0
  %v3345 = vmax.f32 %v3313, 0.0
  %v3346 = vmax.f32 %v3314, 0.0
  %v3347 = vmax.f32 %v3315, 0.0
  %v3348 = vmax.f32 %v3316, 0.0
  %v3349 = vmax.f32 %v3317, 0.0
  %v3350 = vmax.f32 %v3318, 0.0
  %v3351 = vmax.f32 %v3319, 0.0
  %v3352 = vmax.f32 %v3320, 0.0
  %v3353 = vmax.f32 %v3321, 0.0
  %v3354 = vmax.f32 %v3322, 0.0
  %v3355 = vmax.f32 %v3323, 0.0
  %v3356 = vmax.f32 %v3324, 0.0
  %v3357 = vmax.f32 %v3325, 0.0
  %v3358 = vmax.f32 %v3326, 0.0
  %v3359 = vmax.f32 %v3327, 0.0
  %v3360 = vmax.f32 %v3328, 0.0
  %v3361 = vmax.f32 %v3329, 0.0
  %v3362 = vmax.f32 %v3330, 0.0
  %v3363 = vmax.f32 %v3331, 0.0
  %v3364 = vmax.f32 %v3332, 0.0
  %v3365 = vmax.f32 %v3333, 0.0
  %v3366 = vmax.f32 %v3334, 0.0
  %v3367 = vmax.f32 %v3335, 0.0
  %v3368 = vmax.f32 %v3336, 0.0
  %v3369 = vmul.f32 %v3337, %v3227
  %v3370 = vmul.f32 %v3338, %v3229
  %v3371 = vmul.f32 %v3339, %v3231
  %v3372 = vmul.f32 %v3340, %v3233
  %v3373 = vmul.f32 %v3341, %v3237
  %v3374 = vmul.f32 %v3342, %v3239
  %v3375 = vmul.f32 %v3343, %v3241
  %v3376 = vmul.f32 %v3344, %v3243
  %v3377 = vmul.f32 %v3345, %v3247
  %v3378 = vmul.f32 %v3346, %v3249
  %v3379 = vmul.f32 %v3347, %v3251
  %v3380 = vmul.f32 %v3348, %v3253
  %v3381 = vmul.f32 %v3349, %v3257
  %v3382 = vmul.f32 %v3350, %v3259
  %v3383 = vmul.f32 %v3351, %v3261
  %v3384 = vmul.f32 %v3352, %v3263
  %v3385 = vmul.f32 %v3353, %v3267
  %v3386 = vmul.f32 %v3354, %v3269
  %v3387 = vmul.f32 %v3355, %v3271
  %v3388 = vmul.f32 %v3356, %v3273
  %v3389 = vmul.f32 %v3357, %v3277
  %v3390 = vmul.f32 %v3358, %v3279
  %v3391 = vmul.f32 %v3359, %v3281
  %v3392 = vmul.f32 %v3360, %v3283
  %v3393 = vmul.f32 %v3361, %v3287
  %v3394 = vmul.f32 %v3362, %v3289
  %v3395 = vmul.f32 %v3363, %v3291
  %v3396 = vmul.f32 %v3364, %v3293
  %v3397 = vmul.f32 %v3365, %v3297
  %v3398 = vmul.f32 %v3366, %v3299
  %v3399 = vmul.f32 %v3367, %v3301
  %v3400 = vmul.f32 %v3368, %v3303
  %v3401 = vpack.c.bf16 %v3371, %v3369
  %v3402 = vpack.c.bf16 %v3372, %v3370
  %v3403 = vpack.c.bf16 %v3375, %v3373
  %v3404 = vpack.c.bf16 %v3376, %v3374
  %v3405 = vpack.c.bf16 %v3379, %v3377
  %v3406 = vpack.c.bf16 %v3380, %v3378
  %v3407 = vpack.c.bf16 %v3383, %v3381
  %v3408 = vpack.c.bf16 %v3384, %v3382
  %v3409 = vpack.c.bf16 %v3387, %v3385
  %v3410 = vpack.c.bf16 %v3388, %v3386
  %v3411 = vpack.c.bf16 %v3391, %v3389
  %v3412 = vpack.c.bf16 %v3392, %v3390
  %v3413 = vpack.c.bf16 %v3395, %v3393
  %v3414 = vpack.c.bf16 %v3396, %v3394
  %v3415 = vpack.c.bf16 %v3399, %v3397
  %v3416 = vpack.c.bf16 %v3400, %v3398
  %3417 = vmatprep.subr.bf16.mxu0 %v3402
  %3418 = vmatpush1.bf16.msra.mxu0 %v3401
  %3419 = vmatprep.subr.bf16.mxu0 %v3404
  %3420 = vmatpush1.bf16.msra.mxu0 %v3403
  %3421 = vmatprep.subr.bf16.mxu0 %v3406
  %3422 = vmatpush1.bf16.msra.mxu0 %v3405
  %3423 = vmatprep.subr.bf16.mxu0 %v3408
  %3424 = vmatpush1.bf16.msra.mxu0 %v3407
  %3425 = vmatprep.subr.bf16.mxu0 %v3410
  %3426 = vmatpush1.bf16.msra.mxu0 %v3409
  %3427 = vmatprep.subr.bf16.mxu0 %v3412
  %3428 = vmatpush1.bf16.msra.mxu0 %v3411
  %3429 = vmatprep.subr.bf16.mxu0 %v3414
  %3430 = vmatpush1.bf16.msra.mxu0 %v3413
  %3431 = vmatprep.subr.bf16.mxu0 %v3416
  %3432 = vmatpush1.bf16.msra.mxu0 %v3415
  %3433 = vmatprep.subr.bf16.mxu0 0
  %3434 = vmatpush1.bf16.msra.mxu0 0
  %3435 = vmatprep.subr.bf16.mxu0 0
  %3436 = vmatpush1.bf16.msra.mxu0 0
  %3437 = vmatprep.subr.bf16.mxu0 0
  %3438 = vmatpush1.bf16.msra.mxu0 0
  %3439 = vmatprep.subr.bf16.mxu0 0
  %3440 = vmatpush1.bf16.msra.mxu0 0
  %3441 = vmatprep.subr.bf16.mxu0 0
  %3442 = vmatpush1.bf16.msra.mxu0 0
  %3443 = vmatprep.subr.bf16.mxu0 0
  %3444 = vmatpush1.bf16.msra.mxu0 0
  %3445 = vmatprep.subr.bf16.mxu0 0
  %3446 = vmatpush1.bf16.msra.mxu0 0
  %3447 = vmatprep.subr.bf16.mxu0 0
  %3448 = vmatpush1.bf16.msra.mxu0 0
  %3449 = vmatprep.mubr.bf16.mxu0 0
  %3450 = vmatmul.mubr.bf16.gmra.mrb[0].mxu0 %v163
  %v3451 = vpop.f32.mrb[0].mxu0
  %v3452 = vadd.f32 %v2110, %v3451
  %v3453 = vpop.f32.mrb[0].mxu0
  %v3454 = vadd.f32 %v2110, %v3453
  %v3455 = vpop.f32.mrb[0].mxu0
  %v3456 = vpop.f32.mrb[0].mxu0
  %3457 = vdwg.mxu0
  %s3458 = scalar_lea.vmem %s7, 16
  %3459 = vst [vmem:[%s3458] sm:$0xff] %v3452
  %3460 = vst [vmem:[%s3458 + $0x8] sm:$0xff] %v3454
  // Predicated region
  $region30: #{head_forward.1} parent=0 // pred_check
    _
  $region31: #{head_forward.1} parent=0 // pred_check_branch
    %3462 = sbr.rel (0) target = $region33
  $region32: #{head_forward.1} parent=0 // pred_region
    _
  $region33: #{head_forward.1} parent=0 // pred_fallthru
    _
  // Predicated region
  $region34: #{head_forward.1} parent=0 // pred_check
    _
  $region35: #{head_forward.1} parent=0 // pred_check_branch
    %3464 = sbr.rel (0) target = $region37
  $region36: #{head_forward.1} parent=0 // pred_region
    _
  $region37: #{head_forward.1} parent=0 // pred_fallthru
    _

</llo_original>
